<compile_context>
chip_gen: v6e
topology: v6e:2x2x1
jax: 0.10.0
libtpu: 0.0.40
codegen_flags: <defaults>
</compile_context>

<pallas_src>
import jax
import jax.numpy as jnp
from jax.experimental import pallas as pl
from jax.experimental.pallas import tpu as pltpu

# ---- scaled-down hyperparameters (original: 4096 / 6000 / 300) ----
RNN_HIDDEN_SIZE = 256
VOCABULARY_SIZE = 512
WORDVEC_SIZE = 128
NUM_STEPS = 10
LANE = 128                          # TPU lane width; words output padded to one vreg row

# image shape (small, NCHW); batch must be 1 (original code calls int(word_ix))
B, C, H, W = 1, 4, 16, 16
FEAT_DIM = C * H * W


def caption_kernel(img_ref,              # [B, FEAT_DIM]             bf16 flattened image
                   wf_ref, bf_ref,       # [FEAT_DIM, HID] bf16,  [1, HID] f32   "pretrained" head
                   wxh_ref, bxh_ref,     # [WV+HID, HID]  bf16,   [1, HID] f32   fused RNNCell weights
                   whv_ref, bhv_ref,     # [HID, VOCAB]   bf16,   [1, VOCAB] f32 hidden_to_vocab
                   emb_ref,              # [VOCAB, WV]    bf16                   embedding table
                   words_ref):           # out: [1, LANE] int32 (first NUM_STEPS lanes used)
    # "pretrained(img)" -> initial hidden state  [B, HID]  (f32 accumulation)
    hidden = jnp.maximum(
        jnp.dot(img_ref[...], wf_ref[...], preferred_element_type=jnp.float32)
        + bf_ref[...],
        0.0)

    # next_input = zeros(WORDVEC_SIZE)
    next_input = jnp.zeros((B, WORDVEC_SIZE), jnp.float32)

    vocab_iota = jax.lax.broadcasted_iota(jnp.int32, (B, VOCABULARY_SIZE), 1)
    lane_iota = jax.lax.broadcasted_iota(jnp.int32, (B, LANE), 1)
    words_vec = jnp.zeros((B, LANE), jnp.int32)

    for t in range(NUM_STEPS):  # static unroll; steps are serially dependent
        # fused RNNCell (relu): single MXU dot of [x ; h] against [W_ih^T ; W_hh^T]
        xh = jnp.concatenate([next_input, hidden], axis=1)          # [B, WV+HID] f32
        hidden = jnp.maximum(
            jnp.dot(xh.astype(jnp.bfloat16), wxh_ref[...],
                    preferred_element_type=jnp.float32) + bxh_ref[...],
            0.0)

        # hidden_to_vocab
        logits = (jnp.dot(hidden.astype(jnp.bfloat16), whv_ref[...],
                          preferred_element_type=jnp.float32) + bhv_ref[...])

        # torch.max(word_class, 1) -> first index of the row max
        row_max = jnp.max(logits, axis=1, keepdims=True)                         # [B, 1]
        idx = jnp.min(jnp.where(logits == row_max, vocab_iota, VOCABULARY_SIZE),
                      axis=1, keepdims=True)                                     # [B, 1] i32

        # record word index t into the lane-dense result vector (single store at end)
        words_vec = jnp.where(lane_iota == t, idx, words_vec)

        # next_input = embedding_table[word_ix]
        # TODO(synk): swap for emb_ref[pl.ds(scalar_idx, 1), :] once vector->SMEM scalar
        #             extraction is verified; bf16 one-hot MXU gather kept for guaranteed lowering.
        onehot = (vocab_iota == idx).astype(jnp.bfloat16)                        # [B, VOCAB]
        next_input = jnp.dot(onehot, emb_ref[...],
                             preferred_element_type=jnp.float32)                 # [B, WV] f32

    words_ref[...] = words_vec    # one unmasked, lane-dense store


def caption_forward(img, params):
    """img: [B, C, H, W] float32 (NCHW). Returns int32 word indices [NUM_STEPS, B]."""
    x = img.reshape(img.shape[0], -1).astype(jnp.bfloat16)    # [B, C*H*W] (torch flatten), bf16

    # glue: pre-transpose PyTorch [out, in] weights to [in, out], fuse RNNCell weights/biases,
    # cast weights to bf16 (biases stay f32; all accumulation in-kernel is f32).
    w_feat = params["w_feat"].T.astype(jnp.bfloat16)                       # [FEAT, HID]
    b_feat = params["b_feat"][None, :].astype(jnp.float32)                 # [1, HID]
    w_xh = jnp.concatenate([params["w_ih"].T, params["w_hh"].T],
                           axis=0).astype(jnp.bfloat16)                    # [WV+HID, HID]
    b_xh = (params["b_ih"] + params["b_hh"])[None, :].astype(jnp.float32)  # [1, HID]
    w_hv = params["w_hv"].T.astype(jnp.bfloat16)                           # [HID, VOCAB]
    b_hv = params["b_hv"][None, :].astype(jnp.float32)                     # [1, VOCAB]
    emb = params["emb"].astype(jnp.bfloat16)                               # [VOCAB, WV]

    args = (x, w_feat, b_feat, w_xh, b_xh, w_hv, b_hv, emb)

    out = pl.pallas_call(
        caption_kernel,
        out_shape=jax.ShapeDtypeStruct((1, LANE), jnp.int32),
        # no grid: single invocation, whole arrays resident in VMEM, no double buffering
        in_specs=[pl.BlockSpec(memory_space=pltpu.MemorySpace.VMEM) for _ in args],
        out_specs=pl.BlockSpec(memory_space=pltpu.MemorySpace.VMEM),
    )(*args)

    return out[0, :NUM_STEPS].reshape(NUM_STEPS, img.shape[0])


def init_params(key):
    """Deterministic init mimicking PyTorch defaults (uniform(-1/sqrt(fan_in), +))."""
    ks = jax.random.split(key, 10)

    def u(k, shape, fan_in):
        bound = 1.0 / jnp.sqrt(jnp.float32(fan_in))
        return jax.random.uniform(k, shape, jnp.float32, -bound, bound)

    return {
        # synthetic "pretrained" VGG head: Linear(FEAT_DIM -> HIDDEN), weight is [out, in]
        "w_feat": u(ks[0], (RNN_HIDDEN_SIZE, FEAT_DIM), FEAT_DIM),
        "b_feat": u(ks[1], (RNN_HIDDEN_SIZE,), FEAT_DIM),
        # nn.RNNCell(WORDVEC, HIDDEN, relu): weights are [hidden, in], init k = 1/sqrt(hidden)
        "w_ih": u(ks[2], (RNN_HIDDEN_SIZE, WORDVEC_SIZE), RNN_HIDDEN_SIZE),
        "b_ih": u(ks[3], (RNN_HIDDEN_SIZE,), RNN_HIDDEN_SIZE),
        "w_hh": u(ks[4], (RNN_HIDDEN_SIZE, RNN_HIDDEN_SIZE), RNN_HIDDEN_SIZE),
        "b_hh": u(ks[5], (RNN_HIDDEN_SIZE,), RNN_HIDDEN_SIZE),
        # nn.Linear(HIDDEN -> VOCAB): weight [out, in], k = 1/sqrt(in)
        "w_hv": u(ks[6], (VOCABULARY_SIZE, RNN_HIDDEN_SIZE), RNN_HIDDEN_SIZE),
        "b_hv": u(ks[7], (VOCABULARY_SIZE,), RNN_HIDDEN_SIZE),
        # word-embedding lookup table (synthetic word_embedding module)
        "emb": jax.random.normal(ks[8], (VOCABULARY_SIZE, WORDVEC_SIZE), jnp.float32),
    }


if __name__ == "__main__":
    key = jax.random.PRNGKey(0)
    k_img, k_param = jax.random.split(key)

    img = jax.random.normal(k_img, (B, C, H, W), jnp.float32)   # NCHW
    params = init_params(k_param)

    word_indices = caption_forward(img, params)
    jax.block_until_ready(word_indices)

    assert word_indices.shape == (NUM_STEPS, B)
    assert word_indices.dtype == jnp.int32
    assert bool(jnp.all((word_indices >= 0) & (word_indices < VOCABULARY_SIZE)))

    print("KERNEL_OK")
</pallas_src>

<mosaic_0001>
module attributes {stable_mosaic.version = 11 : i64} {
  func.func @caption_kernel(%arg0: memref<1x1024xbf16, #tpu.memory_space<vmem>>, %arg1: memref<1024x256xbf16, #tpu.memory_space<vmem>>, %arg2: memref<1x256xf32, #tpu.memory_space<vmem>>, %arg3: memref<384x256xbf16, #tpu.memory_space<vmem>>, %arg4: memref<1x256xf32, #tpu.memory_space<vmem>>, %arg5: memref<256x512xbf16, #tpu.memory_space<vmem>>, %arg6: memref<1x512xf32, #tpu.memory_space<vmem>>, %arg7: memref<512x128xbf16, #tpu.memory_space<vmem>>, %arg8: memref<1x128xi32, #tpu.memory_space<vmem>>) attributes {dimension_semantics = [], scalar_prefetch = 0 : i64, scratch_operands = 0 : i64, tpu.core_type = #tpu.core_type<tc>} {
    %c0 = arith.constant 0 : index
    %c0_0 = arith.constant 0 : index
    %0 = vector.load %arg0[%c0, %c0_0] : memref<1x1024xbf16, #tpu.memory_space<vmem>>, vector<1x1024xbf16>
    %c0_1 = arith.constant 0 : index
    %c0_2 = arith.constant 0 : index
    %1 = vector.load %arg1[%c0_1, %c0_2] : memref<1024x256xbf16, #tpu.memory_space<vmem>>, vector<1024x256xbf16>
    %cst = arith.constant dense<0.000000e+00> : vector<1x256xf32>
    %2 = tpu.matmul %0, %1, %cst {dimension_numbers = #tpu.dot_dimension_numbers<[1], [0], [0], [1], [0, 0, 1, 1], [], []>} : vector<1x1024xbf16>, vector<1024x256xbf16>, vector<1x256xf32> -> vector<1x256xf32>
    %c0_3 = arith.constant 0 : index
    %c0_4 = arith.constant 0 : index
    %3 = vector.load %arg2[%c0_3, %c0_4] : memref<1x256xf32, #tpu.memory_space<vmem>>, vector<1x256xf32>
    %4 = arith.addf %2, %3 : vector<1x256xf32>
    %cst_5 = arith.constant 0.000000e+00 : f32
    %5 = vector.broadcast %cst_5 : f32 to vector<1x256xf32>
    %6 = arith.maximumf %4, %5 : vector<1x256xf32>
    %cst_6 = arith.constant 0.000000e+00 : f32
    %7 = vector.broadcast %cst_6 : f32 to vector<1x128xf32>
    %8 = tpu.iota {dimensions = array<i32: 1>} : vector<1x512xi32>
    %9 = tpu.iota {dimensions = array<i32: 1>} : vector<1x128xi32>
    %c0_i32 = arith.constant 0 : i32
    %10 = vector.broadcast %c0_i32 : i32 to vector<1x128xi32>
    %11 = tpu.concatenate %7, %6 in 1 : vector<1x128xf32>, vector<1x256xf32> -> vector<1x384xf32>
    %12 = arith.truncf %11 : vector<1x384xf32> to vector<1x384xbf16>
    %c0_7 = arith.constant 0 : index
    %c0_8 = arith.constant 0 : index
    %13 = vector.load %arg3[%c0_7, %c0_8] : memref<384x256xbf16, #tpu.memory_space<vmem>>, vector<384x256xbf16>
    %cst_9 = arith.constant dense<0.000000e+00> : vector<1x256xf32>
    %14 = tpu.matmul %12, %13, %cst_9 {dimension_numbers = #tpu.dot_dimension_numbers<[1], [0], [0], [1], [0, 0, 1, 1], [], []>} : vector<1x384xbf16>, vector<384x256xbf16>, vector<1x256xf32> -> vector<1x256xf32>
    %c0_10 = arith.constant 0 : index
    %c0_11 = arith.constant 0 : index
    %15 = vector.load %arg4[%c0_10, %c0_11] : memref<1x256xf32, #tpu.memory_space<vmem>>, vector<1x256xf32>
    %16 = arith.addf %14, %15 : vector<1x256xf32>
    %cst_12 = arith.constant 0.000000e+00 : f32
    %17 = vector.broadcast %cst_12 : f32 to vector<1x256xf32>
    %18 = arith.maximumf %16, %17 : vector<1x256xf32>
    %19 = arith.truncf %18 : vector<1x256xf32> to vector<1x256xbf16>
    %c0_13 = arith.constant 0 : index
    %c0_14 = arith.constant 0 : index
    %20 = vector.load %arg5[%c0_13, %c0_14] : memref<256x512xbf16, #tpu.memory_space<vmem>>, vector<256x512xbf16>
    %cst_15 = arith.constant dense<0.000000e+00> : vector<1x512xf32>
    %21 = tpu.matmul %19, %20, %cst_15 {dimension_numbers = #tpu.dot_dimension_numbers<[1], [0], [0], [1], [0, 0, 1, 1], [], []>} : vector<1x256xbf16>, vector<256x512xbf16>, vector<1x512xf32> -> vector<1x512xf32>
    %c0_16 = arith.constant 0 : index
    %c0_17 = arith.constant 0 : index
    %22 = vector.load %arg6[%c0_16, %c0_17] : memref<1x512xf32, #tpu.memory_space<vmem>>, vector<1x512xf32>
    %23 = arith.addf %21, %22 : vector<1x512xf32>
    %cst_18 = arith.constant dense<0xFF800000> : vector<1xf32>
    %24 = vector.multi_reduction <maximumf>, %23, %cst_18 [1] : vector<1x512xf32> to vector<1xf32>
    %25 = vector.shape_cast %24 : vector<1xf32> to vector<1x1xf32>
    %26 = vector.broadcast %25 : vector<1x1xf32> to vector<1x512xf32>
    %27 = arith.cmpf oeq, %23, %26 : vector<1x512xf32>
    %c512_i32 = arith.constant 512 : i32
    %28 = vector.broadcast %c512_i32 : i32 to vector<1x512xi32>
    %29 = arith.select %27, %8, %28 : vector<1x512xi1>, vector<1x512xi32>
    %cst_19 = arith.constant dense<2147483647> : vector<1xi32>
    %30 = vector.multi_reduction <minsi>, %29, %cst_19 [1] : vector<1x512xi32> to vector<1xi32>
    %31 = vector.shape_cast %30 : vector<1xi32> to vector<1x1xi32>
    %c0_i32_20 = arith.constant 0 : i32
    %32 = vector.broadcast %c0_i32_20 : i32 to vector<1x128xi32>
    %33 = arith.cmpi eq, %9, %32 : vector<1x128xi32>
    %34 = vector.shape_cast %31 : vector<1x1xi32> to vector<1x1xi32>
    %35 = vector.broadcast %34 : vector<1x1xi32> to vector<1x128xi32>
    %36 = arith.select %33, %35, %10 : vector<1x128xi1>, vector<1x128xi32>
    %37 = vector.broadcast %31 : vector<1x1xi32> to vector<1x512xi32>
    %38 = arith.cmpi eq, %8, %37 : vector<1x512xi32>
    %39 = arith.extui %38 : vector<1x512xi1> to vector<1x512xi32>
    %40 = arith.sitofp %39 : vector<1x512xi32> to vector<1x512xf32>
    %41 = arith.truncf %40 : vector<1x512xf32> to vector<1x512xbf16>
    %c0_21 = arith.constant 0 : index
    %c0_22 = arith.constant 0 : index
    %42 = vector.load %arg7[%c0_21, %c0_22] : memref<512x128xbf16, #tpu.memory_space<vmem>>, vector<512x128xbf16>
    %cst_23 = arith.constant dense<0.000000e+00> : vector<1x128xf32>
    %43 = tpu.matmul %41, %42, %cst_23 {dimension_numbers = #tpu.dot_dimension_numbers<[1], [0], [0], [1], [0, 0, 1, 1], [], []>} : vector<1x512xbf16>, vector<512x128xbf16>, vector<1x128xf32> -> vector<1x128xf32>
    %44 = tpu.concatenate %43, %18 in 1 : vector<1x128xf32>, vector<1x256xf32> -> vector<1x384xf32>
    %45 = arith.truncf %44 : vector<1x384xf32> to vector<1x384xbf16>
    %c0_24 = arith.constant 0 : index
    %c0_25 = arith.constant 0 : index
    %46 = vector.load %arg3[%c0_24, %c0_25] : memref<384x256xbf16, #tpu.memory_space<vmem>>, vector<384x256xbf16>
    %cst_26 = arith.constant dense<0.000000e+00> : vector<1x256xf32>
    %47 = tpu.matmul %45, %46, %cst_26 {dimension_numbers = #tpu.dot_dimension_numbers<[1], [0], [0], [1], [0, 0, 1, 1], [], []>} : vector<1x384xbf16>, vector<384x256xbf16>, vector<1x256xf32> -> vector<1x256xf32>
    %c0_27 = arith.constant 0 : index
    %c0_28 = arith.constant 0 : index
    %48 = vector.load %arg4[%c0_27, %c0_28] : memref<1x256xf32, #tpu.memory_space<vmem>>, vector<1x256xf32>
    %49 = arith.addf %47, %48 : vector<1x256xf32>
    %cst_29 = arith.constant 0.000000e+00 : f32
    %50 = vector.broadcast %cst_29 : f32 to vector<1x256xf32>
    %51 = arith.maximumf %49, %50 : vector<1x256xf32>
    %52 = arith.truncf %51 : vector<1x256xf32> to vector<1x256xbf16>
    %c0_30 = arith.constant 0 : index
    %c0_31 = arith.constant 0 : index
    %53 = vector.load %arg5[%c0_30, %c0_31] : memref<256x512xbf16, #tpu.memory_space<vmem>>, vector<256x512xbf16>
    %cst_32 = arith.constant dense<0.000000e+00> : vector<1x512xf32>
    %54 = tpu.matmul %52, %53, %cst_32 {dimension_numbers = #tpu.dot_dimension_numbers<[1], [0], [0], [1], [0, 0, 1, 1], [], []>} : vector<1x256xbf16>, vector<256x512xbf16>, vector<1x512xf32> -> vector<1x512xf32>
    %c0_33 = arith.constant 0 : index
    %c0_34 = arith.constant 0 : index
    %55 = vector.load %arg6[%c0_33, %c0_34] : memref<1x512xf32, #tpu.memory_space<vmem>>, vector<1x512xf32>
    %56 = arith.addf %54, %55 : vector<1x512xf32>
    %cst_35 = arith.constant dense<0xFF800000> : vector<1xf32>
    %57 = vector.multi_reduction <maximumf>, %56, %cst_35 [1] : vector<1x512xf32> to vector<1xf32>
    %58 = vector.shape_cast %57 : vector<1xf32> to vector<1x1xf32>
    %59 = vector.broadcast %58 : vector<1x1xf32> to vector<1x512xf32>
    %60 = arith.cmpf oeq, %56, %59 : vector<1x512xf32>
    %c512_i32_36 = arith.constant 512 : i32
    %61 = vector.broadcast %c512_i32_36 : i32 to vector<1x512xi32>
    %62 = arith.select %60, %8, %61 : vector<1x512xi1>, vector<1x512xi32>
    %cst_37 = arith.constant dense<2147483647> : vector<1xi32>
    %63 = vector.multi_reduction <minsi>, %62, %cst_37 [1] : vector<1x512xi32> to vector<1xi32>
    %64 = vector.shape_cast %63 : vector<1xi32> to vector<1x1xi32>
    %c1_i32 = arith.constant 1 : i32
    %65 = vector.broadcast %c1_i32 : i32 to vector<1x128xi32>
    %66 = arith.cmpi eq, %9, %65 : vector<1x128xi32>
    %67 = vector.shape_cast %64 : vector<1x1xi32> to vector<1x1xi32>
    %68 = vector.broadcast %67 : vector<1x1xi32> to vector<1x128xi32>
    %69 = arith.select %66, %68, %36 : vector<1x128xi1>, vector<1x128xi32>
    %70 = vector.broadcast %64 : vector<1x1xi32> to vector<1x512xi32>
    %71 = arith.cmpi eq, %8, %70 : vector<1x512xi32>
    %72 = arith.extui %71 : vector<1x512xi1> to vector<1x512xi32>
    %73 = arith.sitofp %72 : vector<1x512xi32> to vector<1x512xf32>
    %74 = arith.truncf %73 : vector<1x512xf32> to vector<1x512xbf16>
    %c0_38 = arith.constant 0 : index
    %c0_39 = arith.constant 0 : index
    %75 = vector.load %arg7[%c0_38, %c0_39] : memref<512x128xbf16, #tpu.memory_space<vmem>>, vector<512x128xbf16>
    %cst_40 = arith.constant dense<0.000000e+00> : vector<1x128xf32>
    %76 = tpu.matmul %74, %75, %cst_40 {dimension_numbers = #tpu.dot_dimension_numbers<[1], [0], [0], [1], [0, 0, 1, 1], [], []>} : vector<1x512xbf16>, vector<512x128xbf16>, vector<1x128xf32> -> vector<1x128xf32>
    %77 = tpu.concatenate %76, %51 in 1 : vector<1x128xf32>, vector<1x256xf32> -> vector<1x384xf32>
    %78 = arith.truncf %77 : vector<1x384xf32> to vector<1x384xbf16>
    %c0_41 = arith.constant 0 : index
    %c0_42 = arith.constant 0 : index
    %79 = vector.load %arg3[%c0_41, %c0_42] : memref<384x256xbf16, #tpu.memory_space<vmem>>, vector<384x256xbf16>
    %cst_43 = arith.constant dense<0.000000e+00> : vector<1x256xf32>
    %80 = tpu.matmul %78, %79, %cst_43 {dimension_numbers = #tpu.dot_dimension_numbers<[1], [0], [0], [1], [0, 0, 1, 1], [], []>} : vector<1x384xbf16>, vector<384x256xbf16>, vector<1x256xf32> -> vector<1x256xf32>
    %c0_44 = arith.constant 0 : index
    %c0_45 = arith.constant 0 : index
    %81 = vector.load %arg4[%c0_44, %c0_45] : memref<1x256xf32, #tpu.memory_space<vmem>>, vector<1x256xf32>
    %82 = arith.addf %80, %81 : vector<1x256xf32>
    %cst_46 = arith.constant 0.000000e+00 : f32
    %83 = vector.broadcast %cst_46 : f32 to vector<1x256xf32>
    %84 = arith.maximumf %82, %83 : vector<1x256xf32>
    %85 = arith.truncf %84 : vector<1x256xf32> to vector<1x256xbf16>
    %c0_47 = arith.constant 0 : index
    %c0_48 = arith.constant 0 : index
    %86 = vector.load %arg5[%c0_47, %c0_48] : memref<256x512xbf16, #tpu.memory_space<vmem>>, vector<256x512xbf16>
    %cst_49 = arith.constant dense<0.000000e+00> : vector<1x512xf32>
    %87 = tpu.matmul %85, %86, %cst_49 {dimension_numbers = #tpu.dot_dimension_numbers<[1], [0], [0], [1], [0, 0, 1, 1], [], []>} : vector<1x256xbf16>, vector<256x512xbf16>, vector<1x512xf32> -> vector<1x512xf32>
    %c0_50 = arith.constant 0 : index
    %c0_51 = arith.constant 0 : index
    %88 = vector.load %arg6[%c0_50, %c0_51] : memref<1x512xf32, #tpu.memory_space<vmem>>, vector<1x512xf32>
    %89 = arith.addf %87, %88 : vector<1x512xf32>
    %cst_52 = arith.constant dense<0xFF800000> : vector<1xf32>
    %90 = vector.multi_reduction <maximumf>, %89, %cst_52 [1] : vector<1x512xf32> to vector<1xf32>
    %91 = vector.shape_cast %90 : vector<1xf32> to vector<1x1xf32>
    %92 = vector.broadcast %91 : vector<1x1xf32> to vector<1x512xf32>
    %93 = arith.cmpf oeq, %89, %92 : vector<1x512xf32>
    %c512_i32_53 = arith.constant 512 : i32
    %94 = vector.broadcast %c512_i32_53 : i32 to vector<1x512xi32>
    %95 = arith.select %93, %8, %94 : vector<1x512xi1>, vector<1x512xi32>
    %cst_54 = arith.constant dense<2147483647> : vector<1xi32>
    %96 = vector.multi_reduction <minsi>, %95, %cst_54 [1] : vector<1x512xi32> to vector<1xi32>
    %97 = vector.shape_cast %96 : vector<1xi32> to vector<1x1xi32>
    %c2_i32 = arith.constant 2 : i32
    %98 = vector.broadcast %c2_i32 : i32 to vector<1x128xi32>
    %99 = arith.cmpi eq, %9, %98 : vector<1x128xi32>
    %100 = vector.shape_cast %97 : vector<1x1xi32> to vector<1x1xi32>
    %101 = vector.broadcast %100 : vector<1x1xi32> to vector<1x128xi32>
    %102 = arith.select %99, %101, %69 : vector<1x128xi1>, vector<1x128xi32>
    %103 = vector.broadcast %97 : vector<1x1xi32> to vector<1x512xi32>
    %104 = arith.cmpi eq, %8, %103 : vector<1x512xi32>
    %105 = arith.extui %104 : vector<1x512xi1> to vector<1x512xi32>
    %106 = arith.sitofp %105 : vector<1x512xi32> to vector<1x512xf32>
    %107 = arith.truncf %106 : vector<1x512xf32> to vector<1x512xbf16>
    %c0_55 = arith.constant 0 : index
    %c0_56 = arith.constant 0 : index
    %108 = vector.load %arg7[%c0_55, %c0_56] : memref<512x128xbf16, #tpu.memory_space<vmem>>, vector<512x128xbf16>
    %cst_57 = arith.constant dense<0.000000e+00> : vector<1x128xf32>
    %109 = tpu.matmul %107, %108, %cst_57 {dimension_numbers = #tpu.dot_dimension_numbers<[1], [0], [0], [1], [0, 0, 1, 1], [], []>} : vector<1x512xbf16>, vector<512x128xbf16>, vector<1x128xf32> -> vector<1x128xf32>
    %110 = tpu.concatenate %109, %84 in 1 : vector<1x128xf32>, vector<1x256xf32> -> vector<1x384xf32>
    %111 = arith.truncf %110 : vector<1x384xf32> to vector<1x384xbf16>
    %c0_58 = arith.constant 0 : index
    %c0_59 = arith.constant 0 : index
    %112 = vector.load %arg3[%c0_58, %c0_59] : memref<384x256xbf16, #tpu.memory_space<vmem>>, vector<384x256xbf16>
    %cst_60 = arith.constant dense<0.000000e+00> : vector<1x256xf32>
    %113 = tpu.matmul %111, %112, %cst_60 {dimension_numbers = #tpu.dot_dimension_numbers<[1], [0], [0], [1], [0, 0, 1, 1], [], []>} : vector<1x384xbf16>, vector<384x256xbf16>, vector<1x256xf32> -> vector<1x256xf32>
    %c0_61 = arith.constant 0 : index
    %c0_62 = arith.constant 0 : index
    %114 = vector.load %arg4[%c0_61, %c0_62] : memref<1x256xf32, #tpu.memory_space<vmem>>, vector<1x256xf32>
    %115 = arith.addf %113, %114 : vector<1x256xf32>
    %cst_63 = arith.constant 0.000000e+00 : f32
    %116 = vector.broadcast %cst_63 : f32 to vector<1x256xf32>
    %117 = arith.maximumf %115, %116 : vector<1x256xf32>
    %118 = arith.truncf %117 : vector<1x256xf32> to vector<1x256xbf16>
    %c0_64 = arith.constant 0 : index
    %c0_65 = arith.constant 0 : index
    %119 = vector.load %arg5[%c0_64, %c0_65] : memref<256x512xbf16, #tpu.memory_space<vmem>>, vector<256x512xbf16>
    %cst_66 = arith.constant dense<0.000000e+00> : vector<1x512xf32>
    %120 = tpu.matmul %118, %119, %cst_66 {dimension_numbers = #tpu.dot_dimension_numbers<[1], [0], [0], [1], [0, 0, 1, 1], [], []>} : vector<1x256xbf16>, vector<256x512xbf16>, vector<1x512xf32> -> vector<1x512xf32>
    %c0_67 = arith.constant 0 : index
    %c0_68 = arith.constant 0 : index
    %121 = vector.load %arg6[%c0_67, %c0_68] : memref<1x512xf32, #tpu.memory_space<vmem>>, vector<1x512xf32>
    %122 = arith.addf %120, %121 : vector<1x512xf32>
    %cst_69 = arith.constant dense<0xFF800000> : vector<1xf32>
    %123 = vector.multi_reduction <maximumf>, %122, %cst_69 [1] : vector<1x512xf32> to vector<1xf32>
    %124 = vector.shape_cast %123 : vector<1xf32> to vector<1x1xf32>
    %125 = vector.broadcast %124 : vector<1x1xf32> to vector<1x512xf32>
    %126 = arith.cmpf oeq, %122, %125 : vector<1x512xf32>
    %c512_i32_70 = arith.constant 512 : i32
    %127 = vector.broadcast %c512_i32_70 : i32 to vector<1x512xi32>
    %128 = arith.select %126, %8, %127 : vector<1x512xi1>, vector<1x512xi32>
    %cst_71 = arith.constant dense<2147483647> : vector<1xi32>
    %129 = vector.multi_reduction <minsi>, %128, %cst_71 [1] : vector<1x512xi32> to vector<1xi32>
    %130 = vector.shape_cast %129 : vector<1xi32> to vector<1x1xi32>
    %c3_i32 = arith.constant 3 : i32
    %131 = vector.broadcast %c3_i32 : i32 to vector<1x128xi32>
    %132 = arith.cmpi eq, %9, %131 : vector<1x128xi32>
    %133 = vector.shape_cast %130 : vector<1x1xi32> to vector<1x1xi32>
    %134 = vector.broadcast %133 : vector<1x1xi32> to vector<1x128xi32>
    %135 = arith.select %132, %134, %102 : vector<1x128xi1>, vector<1x128xi32>
    %136 = vector.broadcast %130 : vector<1x1xi32> to vector<1x512xi32>
    %137 = arith.cmpi eq, %8, %136 : vector<1x512xi32>
    %138 = arith.extui %137 : vector<1x512xi1> to vector<1x512xi32>
    %139 = arith.sitofp %138 : vector<1x512xi32> to vector<1x512xf32>
    %140 = arith.truncf %139 : vector<1x512xf32> to vector<1x512xbf16>
    %c0_72 = arith.constant 0 : index
    %c0_73 = arith.constant 0 : index
    %141 = vector.load %arg7[%c0_72, %c0_73] : memref<512x128xbf16, #tpu.memory_space<vmem>>, vector<512x128xbf16>
    %cst_74 = arith.constant dense<0.000000e+00> : vector<1x128xf32>
    %142 = tpu.matmul %140, %141, %cst_74 {dimension_numbers = #tpu.dot_dimension_numbers<[1], [0], [0], [1], [0, 0, 1, 1], [], []>} : vector<1x512xbf16>, vector<512x128xbf16>, vector<1x128xf32> -> vector<1x128xf32>
    %143 = tpu.concatenate %142, %117 in 1 : vector<1x128xf32>, vector<1x256xf32> -> vector<1x384xf32>
    %144 = arith.truncf %143 : vector<1x384xf32> to vector<1x384xbf16>
    %c0_75 = arith.constant 0 : index
    %c0_76 = arith.constant 0 : index
    %145 = vector.load %arg3[%c0_75, %c0_76] : memref<384x256xbf16, #tpu.memory_space<vmem>>, vector<384x256xbf16>
    %cst_77 = arith.constant dense<0.000000e+00> : vector<1x256xf32>
    %146 = tpu.matmul %144, %145, %cst_77 {dimension_numbers = #tpu.dot_dimension_numbers<[1], [0], [0], [1], [0, 0, 1, 1], [], []>} : vector<1x384xbf16>, vector<384x256xbf16>, vector<1x256xf32> -> vector<1x256xf32>
    %c0_78 = arith.constant 0 : index
    %c0_79 = arith.constant 0 : index
    %147 = vector.load %arg4[%c0_78, %c0_79] : memref<1x256xf32, #tpu.memory_space<vmem>>, vector<1x256xf32>
    %148 = arith.addf %146, %147 : vector<1x256xf32>
    %cst_80 = arith.constant 0.000000e+00 : f32
    %149 = vector.broadcast %cst_80 : f32 to vector<1x256xf32>
    %150 = arith.maximumf %148, %149 : vector<1x256xf32>
    %151 = arith.truncf %150 : vector<1x256xf32> to vector<1x256xbf16>
    %c0_81 = arith.constant 0 : index
    %c0_82 = arith.constant 0 : index
    %152 = vector.load %arg5[%c0_81, %c0_82] : memref<256x512xbf16, #tpu.memory_space<vmem>>, vector<256x512xbf16>
    %cst_83 = arith.constant dense<0.000000e+00> : vector<1x512xf32>
    %153 = tpu.matmul %151, %152, %cst_83 {dimension_numbers = #tpu.dot_dimension_numbers<[1], [0], [0], [1], [0, 0, 1, 1], [], []>} : vector<1x256xbf16>, vector<256x512xbf16>, vector<1x512xf32> -> vector<1x512xf32>
    %c0_84 = arith.constant 0 : index
    %c0_85 = arith.constant 0 : index
    %154 = vector.load %arg6[%c0_84, %c0_85] : memref<1x512xf32, #tpu.memory_space<vmem>>, vector<1x512xf32>
    %155 = arith.addf %153, %154 : vector<1x512xf32>
    %cst_86 = arith.constant dense<0xFF800000> : vector<1xf32>
    %156 = vector.multi_reduction <maximumf>, %155, %cst_86 [1] : vector<1x512xf32> to vector<1xf32>
    %157 = vector.shape_cast %156 : vector<1xf32> to vector<1x1xf32>
    %158 = vector.broadcast %157 : vector<1x1xf32> to vector<1x512xf32>
    %159 = arith.cmpf oeq, %155, %158 : vector<1x512xf32>
    %c512_i32_87 = arith.constant 512 : i32
    %160 = vector.broadcast %c512_i32_87 : i32 to vector<1x512xi32>
    %161 = arith.select %159, %8, %160 : vector<1x512xi1>, vector<1x512xi32>
    %cst_88 = arith.constant dense<2147483647> : vector<1xi32>
    %162 = vector.multi_reduction <minsi>, %161, %cst_88 [1] : vector<1x512xi32> to vector<1xi32>
    %163 = vector.shape_cast %162 : vector<1xi32> to vector<1x1xi32>
    %c4_i32 = arith.constant 4 : i32
    %164 = vector.broadcast %c4_i32 : i32 to vector<1x128xi32>
    %165 = arith.cmpi eq, %9, %164 : vector<1x128xi32>
    %166 = vector.shape_cast %163 : vector<1x1xi32> to vector<1x1xi32>
    %167 = vector.broadcast %166 : vector<1x1xi32> to vector<1x128xi32>
    %168 = arith.select %165, %167, %135 : vector<1x128xi1>, vector<1x128xi32>
    %169 = vector.broadcast %163 : vector<1x1xi32> to vector<1x512xi32>
    %170 = arith.cmpi eq, %8, %169 : vector<1x512xi32>
    %171 = arith.extui %170 : vector<1x512xi1> to vector<1x512xi32>
    %172 = arith.sitofp %171 : vector<1x512xi32> to vector<1x512xf32>
    %173 = arith.truncf %172 : vector<1x512xf32> to vector<1x512xbf16>
    %c0_89 = arith.constant 0 : index
    %c0_90 = arith.constant 0 : index
    %174 = vector.load %arg7[%c0_89, %c0_90] : memref<512x128xbf16, #tpu.memory_space<vmem>>, vector<512x128xbf16>
    %cst_91 = arith.constant dense<0.000000e+00> : vector<1x128xf32>
    %175 = tpu.matmul %173, %174, %cst_91 {dimension_numbers = #tpu.dot_dimension_numbers<[1], [0], [0], [1], [0, 0, 1, 1], [], []>} : vector<1x512xbf16>, vector<512x128xbf16>, vector<1x128xf32> -> vector<1x128xf32>
    %176 = tpu.concatenate %175, %150 in 1 : vector<1x128xf32>, vector<1x256xf32> -> vector<1x384xf32>
    %177 = arith.truncf %176 : vector<1x384xf32> to vector<1x384xbf16>
    %c0_92 = arith.constant 0 : index
    %c0_93 = arith.constant 0 : index
    %178 = vector.load %arg3[%c0_92, %c0_93] : memref<384x256xbf16, #tpu.memory_space<vmem>>, vector<384x256xbf16>
    %cst_94 = arith.constant dense<0.000000e+00> : vector<1x256xf32>
    %179 = tpu.matmul %177, %178, %cst_94 {dimension_numbers = #tpu.dot_dimension_numbers<[1], [0], [0], [1], [0, 0, 1, 1], [], []>} : vector<1x384xbf16>, vector<384x256xbf16>, vector<1x256xf32> -> vector<1x256xf32>
    %c0_95 = arith.constant 0 : index
    %c0_96 = arith.constant 0 : index
    %180 = vector.load %arg4[%c0_95, %c0_96] : memref<1x256xf32, #tpu.memory_space<vmem>>, vector<1x256xf32>
    %181 = arith.addf %179, %180 : vector<1x256xf32>
    %cst_97 = arith.constant 0.000000e+00 : f32
    %182 = vector.broadcast %cst_97 : f32 to vector<1x256xf32>
    %183 = arith.maximumf %181, %182 : vector<1x256xf32>
    %184 = arith.truncf %183 : vector<1x256xf32> to vector<1x256xbf16>
    %c0_98 = arith.constant 0 : index
    %c0_99 = arith.constant 0 : index
    %185 = vector.load %arg5[%c0_98, %c0_99] : memref<256x512xbf16, #tpu.memory_space<vmem>>, vector<256x512xbf16>
    %cst_100 = arith.constant dense<0.000000e+00> : vector<1x512xf32>
    %186 = tpu.matmul %184, %185, %cst_100 {dimension_numbers = #tpu.dot_dimension_numbers<[1], [0], [0], [1], [0, 0, 1, 1], [], []>} : vector<1x256xbf16>, vector<256x512xbf16>, vector<1x512xf32> -> vector<1x512xf32>
    %c0_101 = arith.constant 0 : index
    %c0_102 = arith.constant 0 : index
    %187 = vector.load %arg6[%c0_101, %c0_102] : memref<1x512xf32, #tpu.memory_space<vmem>>, vector<1x512xf32>
    %188 = arith.addf %186, %187 : vector<1x512xf32>
    %cst_103 = arith.constant dense<0xFF800000> : vector<1xf32>
    %189 = vector.multi_reduction <maximumf>, %188, %cst_103 [1] : vector<1x512xf32> to vector<1xf32>
    %190 = vector.shape_cast %189 : vector<1xf32> to vector<1x1xf32>
    %191 = vector.broadcast %190 : vector<1x1xf32> to vector<1x512xf32>
    %192 = arith.cmpf oeq, %188, %191 : vector<1x512xf32>
    %c512_i32_104 = arith.constant 512 : i32
    %193 = vector.broadcast %c512_i32_104 : i32 to vector<1x512xi32>
    %194 = arith.select %192, %8, %193 : vector<1x512xi1>, vector<1x512xi32>
    %cst_105 = arith.constant dense<2147483647> : vector<1xi32>
    %195 = vector.multi_reduction <minsi>, %194, %cst_105 [1] : vector<1x512xi32> to vector<1xi32>
    %196 = vector.shape_cast %195 : vector<1xi32> to vector<1x1xi32>
    %c5_i32 = arith.constant 5 : i32
    %197 = vector.broadcast %c5_i32 : i32 to vector<1x128xi32>
    %198 = arith.cmpi eq, %9, %197 : vector<1x128xi32>
    %199 = vector.shape_cast %196 : vector<1x1xi32> to vector<1x1xi32>
    %200 = vector.broadcast %199 : vector<1x1xi32> to vector<1x128xi32>
    %201 = arith.select %198, %200, %168 : vector<1x128xi1>, vector<1x128xi32>
    %202 = vector.broadcast %196 : vector<1x1xi32> to vector<1x512xi32>
    %203 = arith.cmpi eq, %8, %202 : vector<1x512xi32>
    %204 = arith.extui %203 : vector<1x512xi1> to vector<1x512xi32>
    %205 = arith.sitofp %204 : vector<1x512xi32> to vector<1x512xf32>
    %206 = arith.truncf %205 : vector<1x512xf32> to vector<1x512xbf16>
    %c0_106 = arith.constant 0 : index
    %c0_107 = arith.constant 0 : index
    %207 = vector.load %arg7[%c0_106, %c0_107] : memref<512x128xbf16, #tpu.memory_space<vmem>>, vector<512x128xbf16>
    %cst_108 = arith.constant dense<0.000000e+00> : vector<1x128xf32>
    %208 = tpu.matmul %206, %207, %cst_108 {dimension_numbers = #tpu.dot_dimension_numbers<[1], [0], [0], [1], [0, 0, 1, 1], [], []>} : vector<1x512xbf16>, vector<512x128xbf16>, vector<1x128xf32> -> vector<1x128xf32>
    %209 = tpu.concatenate %208, %183 in 1 : vector<1x128xf32>, vector<1x256xf32> -> vector<1x384xf32>
    %210 = arith.truncf %209 : vector<1x384xf32> to vector<1x384xbf16>
    %c0_109 = arith.constant 0 : index
    %c0_110 = arith.constant 0 : index
    %211 = vector.load %arg3[%c0_109, %c0_110] : memref<384x256xbf16, #tpu.memory_space<vmem>>, vector<384x256xbf16>
    %cst_111 = arith.constant dense<0.000000e+00> : vector<1x256xf32>
    %212 = tpu.matmul %210, %211, %cst_111 {dimension_numbers = #tpu.dot_dimension_numbers<[1], [0], [0], [1], [0, 0, 1, 1], [], []>} : vector<1x384xbf16>, vector<384x256xbf16>, vector<1x256xf32> -> vector<1x256xf32>
    %c0_112 = arith.constant 0 : index
    %c0_113 = arith.constant 0 : index
    %213 = vector.load %arg4[%c0_112, %c0_113] : memref<1x256xf32, #tpu.memory_space<vmem>>, vector<1x256xf32>
    %214 = arith.addf %212, %213 : vector<1x256xf32>
    %cst_114 = arith.constant 0.000000e+00 : f32
    %215 = vector.broadcast %cst_114 : f32 to vector<1x256xf32>
    %216 = arith.maximumf %214, %215 : vector<1x256xf32>
    %217 = arith.truncf %216 : vector<1x256xf32> to vector<1x256xbf16>
    %c0_115 = arith.constant 0 : index
    %c0_116 = arith.constant 0 : index
    %218 = vector.load %arg5[%c0_115, %c0_116] : memref<256x512xbf16, #tpu.memory_space<vmem>>, vector<256x512xbf16>
    %cst_117 = arith.constant dense<0.000000e+00> : vector<1x512xf32>
    %219 = tpu.matmul %217, %218, %cst_117 {dimension_numbers = #tpu.dot_dimension_numbers<[1], [0], [0], [1], [0, 0, 1, 1], [], []>} : vector<1x256xbf16>, vector<256x512xbf16>, vector<1x512xf32> -> vector<1x512xf32>
    %c0_118 = arith.constant 0 : index
    %c0_119 = arith.constant 0 : index
    %220 = vector.load %arg6[%c0_118, %c0_119] : memref<1x512xf32, #tpu.memory_space<vmem>>, vector<1x512xf32>
    %221 = arith.addf %219, %220 : vector<1x512xf32>
    %cst_120 = arith.constant dense<0xFF800000> : vector<1xf32>
    %222 = vector.multi_reduction <maximumf>, %221, %cst_120 [1] : vector<1x512xf32> to vector<1xf32>
    %223 = vector.shape_cast %222 : vector<1xf32> to vector<1x1xf32>
    %224 = vector.broadcast %223 : vector<1x1xf32> to vector<1x512xf32>
    %225 = arith.cmpf oeq, %221, %224 : vector<1x512xf32>
    %c512_i32_121 = arith.constant 512 : i32
    %226 = vector.broadcast %c512_i32_121 : i32 to vector<1x512xi32>
    %227 = arith.select %225, %8, %226 : vector<1x512xi1>, vector<1x512xi32>
    %cst_122 = arith.constant dense<2147483647> : vector<1xi32>
    %228 = vector.multi_reduction <minsi>, %227, %cst_122 [1] : vector<1x512xi32> to vector<1xi32>
    %229 = vector.shape_cast %228 : vector<1xi32> to vector<1x1xi32>
    %c6_i32 = arith.constant 6 : i32
    %230 = vector.broadcast %c6_i32 : i32 to vector<1x128xi32>
    %231 = arith.cmpi eq, %9, %230 : vector<1x128xi32>
    %232 = vector.shape_cast %229 : vector<1x1xi32> to vector<1x1xi32>
    %233 = vector.broadcast %232 : vector<1x1xi32> to vector<1x128xi32>
    %234 = arith.select %231, %233, %201 : vector<1x128xi1>, vector<1x128xi32>
    %235 = vector.broadcast %229 : vector<1x1xi32> to vector<1x512xi32>
    %236 = arith.cmpi eq, %8, %235 : vector<1x512xi32>
    %237 = arith.extui %236 : vector<1x512xi1> to vector<1x512xi32>
    %238 = arith.sitofp %237 : vector<1x512xi32> to vector<1x512xf32>
    %239 = arith.truncf %238 : vector<1x512xf32> to vector<1x512xbf16>
    %c0_123 = arith.constant 0 : index
    %c0_124 = arith.constant 0 : index
    %240 = vector.load %arg7[%c0_123, %c0_124] : memref<512x128xbf16, #tpu.memory_space<vmem>>, vector<512x128xbf16>
    %cst_125 = arith.constant dense<0.000000e+00> : vector<1x128xf32>
    %241 = tpu.matmul %239, %240, %cst_125 {dimension_numbers = #tpu.dot_dimension_numbers<[1], [0], [0], [1], [0, 0, 1, 1], [], []>} : vector<1x512xbf16>, vector<512x128xbf16>, vector<1x128xf32> -> vector<1x128xf32>
    %242 = tpu.concatenate %241, %216 in 1 : vector<1x128xf32>, vector<1x256xf32> -> vector<1x384xf32>
    %243 = arith.truncf %242 : vector<1x384xf32> to vector<1x384xbf16>
    %c0_126 = arith.constant 0 : index
    %c0_127 = arith.constant 0 : index
    %244 = vector.load %arg3[%c0_126, %c0_127] : memref<384x256xbf16, #tpu.memory_space<vmem>>, vector<384x256xbf16>
    %cst_128 = arith.constant dense<0.000000e+00> : vector<1x256xf32>
    %245 = tpu.matmul %243, %244, %cst_128 {dimension_numbers = #tpu.dot_dimension_numbers<[1], [0], [0], [1], [0, 0, 1, 1], [], []>} : vector<1x384xbf16>, vector<384x256xbf16>, vector<1x256xf32> -> vector<1x256xf32>
    %c0_129 = arith.constant 0 : index
    %c0_130 = arith.constant 0 : index
    %246 = vector.load %arg4[%c0_129, %c0_130] : memref<1x256xf32, #tpu.memory_space<vmem>>, vector<1x256xf32>
    %247 = arith.addf %245, %246 : vector<1x256xf32>
    %cst_131 = arith.constant 0.000000e+00 : f32
    %248 = vector.broadcast %cst_131 : f32 to vector<1x256xf32>
    %249 = arith.maximumf %247, %248 : vector<1x256xf32>
    %250 = arith.truncf %249 : vector<1x256xf32> to vector<1x256xbf16>
    %c0_132 = arith.constant 0 : index
    %c0_133 = arith.constant 0 : index
    %251 = vector.load %arg5[%c0_132, %c0_133] : memref<256x512xbf16, #tpu.memory_space<vmem>>, vector<256x512xbf16>
    %cst_134 = arith.constant dense<0.000000e+00> : vector<1x512xf32>
    %252 = tpu.matmul %250, %251, %cst_134 {dimension_numbers = #tpu.dot_dimension_numbers<[1], [0], [0], [1], [0, 0, 1, 1], [], []>} : vector<1x256xbf16>, vector<256x512xbf16>, vector<1x512xf32> -> vector<1x512xf32>
    %c0_135 = arith.constant 0 : index
    %c0_136 = arith.constant 0 : index
    %253 = vector.load %arg6[%c0_135, %c0_136] : memref<1x512xf32, #tpu.memory_space<vmem>>, vector<1x512xf32>
    %254 = arith.addf %252, %253 : vector<1x512xf32>
    %cst_137 = arith.constant dense<0xFF800000> : vector<1xf32>
    %255 = vector.multi_reduction <maximumf>, %254, %cst_137 [1] : vector<1x512xf32> to vector<1xf32>
    %256 = vector.shape_cast %255 : vector<1xf32> to vector<1x1xf32>
    %257 = vector.broadcast %256 : vector<1x1xf32> to vector<1x512xf32>
    %258 = arith.cmpf oeq, %254, %257 : vector<1x512xf32>
    %c512_i32_138 = arith.constant 512 : i32
    %259 = vector.broadcast %c512_i32_138 : i32 to vector<1x512xi32>
    %260 = arith.select %258, %8, %259 : vector<1x512xi1>, vector<1x512xi32>
    %cst_139 = arith.constant dense<2147483647> : vector<1xi32>
    %261 = vector.multi_reduction <minsi>, %260, %cst_139 [1] : vector<1x512xi32> to vector<1xi32>
    %262 = vector.shape_cast %261 : vector<1xi32> to vector<1x1xi32>
    %c7_i32 = arith.constant 7 : i32
    %263 = vector.broadcast %c7_i32 : i32 to vector<1x128xi32>
    %264 = arith.cmpi eq, %9, %263 : vector<1x128xi32>
    %265 = vector.shape_cast %262 : vector<1x1xi32> to vector<1x1xi32>
    %266 = vector.broadcast %265 : vector<1x1xi32> to vector<1x128xi32>
    %267 = arith.select %264, %266, %234 : vector<1x128xi1>, vector<1x128xi32>
    %268 = vector.broadcast %262 : vector<1x1xi32> to vector<1x512xi32>
    %269 = arith.cmpi eq, %8, %268 : vector<1x512xi32>
    %270 = arith.extui %269 : vector<1x512xi1> to vector<1x512xi32>
    %271 = arith.sitofp %270 : vector<1x512xi32> to vector<1x512xf32>
    %272 = arith.truncf %271 : vector<1x512xf32> to vector<1x512xbf16>
    %c0_140 = arith.constant 0 : index
    %c0_141 = arith.constant 0 : index
    %273 = vector.load %arg7[%c0_140, %c0_141] : memref<512x128xbf16, #tpu.memory_space<vmem>>, vector<512x128xbf16>
    %cst_142 = arith.constant dense<0.000000e+00> : vector<1x128xf32>
    %274 = tpu.matmul %272, %273, %cst_142 {dimension_numbers = #tpu.dot_dimension_numbers<[1], [0], [0], [1], [0, 0, 1, 1], [], []>} : vector<1x512xbf16>, vector<512x128xbf16>, vector<1x128xf32> -> vector<1x128xf32>
    %275 = tpu.concatenate %274, %249 in 1 : vector<1x128xf32>, vector<1x256xf32> -> vector<1x384xf32>
    %276 = arith.truncf %275 : vector<1x384xf32> to vector<1x384xbf16>
    %c0_143 = arith.constant 0 : index
    %c0_144 = arith.constant 0 : index
    %277 = vector.load %arg3[%c0_143, %c0_144] : memref<384x256xbf16, #tpu.memory_space<vmem>>, vector<384x256xbf16>
    %cst_145 = arith.constant dense<0.000000e+00> : vector<1x256xf32>
    %278 = tpu.matmul %276, %277, %cst_145 {dimension_numbers = #tpu.dot_dimension_numbers<[1], [0], [0], [1], [0, 0, 1, 1], [], []>} : vector<1x384xbf16>, vector<384x256xbf16>, vector<1x256xf32> -> vector<1x256xf32>
    %c0_146 = arith.constant 0 : index
    %c0_147 = arith.constant 0 : index
    %279 = vector.load %arg4[%c0_146, %c0_147] : memref<1x256xf32, #tpu.memory_space<vmem>>, vector<1x256xf32>
    %280 = arith.addf %278, %279 : vector<1x256xf32>
    %cst_148 = arith.constant 0.000000e+00 : f32
    %281 = vector.broadcast %cst_148 : f32 to vector<1x256xf32>
    %282 = arith.maximumf %280, %281 : vector<1x256xf32>
    %283 = arith.truncf %282 : vector<1x256xf32> to vector<1x256xbf16>
    %c0_149 = arith.constant 0 : index
    %c0_150 = arith.constant 0 : index
    %284 = vector.load %arg5[%c0_149, %c0_150] : memref<256x512xbf16, #tpu.memory_space<vmem>>, vector<256x512xbf16>
    %cst_151 = arith.constant dense<0.000000e+00> : vector<1x512xf32>
    %285 = tpu.matmul %283, %284, %cst_151 {dimension_numbers = #tpu.dot_dimension_numbers<[1], [0], [0], [1], [0, 0, 1, 1], [], []>} : vector<1x256xbf16>, vector<256x512xbf16>, vector<1x512xf32> -> vector<1x512xf32>
    %c0_152 = arith.constant 0 : index
    %c0_153 = arith.constant 0 : index
    %286 = vector.load %arg6[%c0_152, %c0_153] : memref<1x512xf32, #tpu.memory_space<vmem>>, vector<1x512xf32>
    %287 = arith.addf %285, %286 : vector<1x512xf32>
    %cst_154 = arith.constant dense<0xFF800000> : vector<1xf32>
    %288 = vector.multi_reduction <maximumf>, %287, %cst_154 [1] : vector<1x512xf32> to vector<1xf32>
    %289 = vector.shape_cast %288 : vector<1xf32> to vector<1x1xf32>
    %290 = vector.broadcast %289 : vector<1x1xf32> to vector<1x512xf32>
    %291 = arith.cmpf oeq, %287, %290 : vector<1x512xf32>
    %c512_i32_155 = arith.constant 512 : i32
    %292 = vector.broadcast %c512_i32_155 : i32 to vector<1x512xi32>
    %293 = arith.select %291, %8, %292 : vector<1x512xi1>, vector<1x512xi32>
    %cst_156 = arith.constant dense<2147483647> : vector<1xi32>
    %294 = vector.multi_reduction <minsi>, %293, %cst_156 [1] : vector<1x512xi32> to vector<1xi32>
    %295 = vector.shape_cast %294 : vector<1xi32> to vector<1x1xi32>
    %c8_i32 = arith.constant 8 : i32
    %296 = vector.broadcast %c8_i32 : i32 to vector<1x128xi32>
    %297 = arith.cmpi eq, %9, %296 : vector<1x128xi32>
    %298 = vector.shape_cast %295 : vector<1x1xi32> to vector<1x1xi32>
    %299 = vector.broadcast %298 : vector<1x1xi32> to vector<1x128xi32>
    %300 = arith.select %297, %299, %267 : vector<1x128xi1>, vector<1x128xi32>
    %301 = vector.broadcast %295 : vector<1x1xi32> to vector<1x512xi32>
    %302 = arith.cmpi eq, %8, %301 : vector<1x512xi32>
    %303 = arith.extui %302 : vector<1x512xi1> to vector<1x512xi32>
    %304 = arith.sitofp %303 : vector<1x512xi32> to vector<1x512xf32>
    %305 = arith.truncf %304 : vector<1x512xf32> to vector<1x512xbf16>
    %c0_157 = arith.constant 0 : index
    %c0_158 = arith.constant 0 : index
    %306 = vector.load %arg7[%c0_157, %c0_158] : memref<512x128xbf16, #tpu.memory_space<vmem>>, vector<512x128xbf16>
    %cst_159 = arith.constant dense<0.000000e+00> : vector<1x128xf32>
    %307 = tpu.matmul %305, %306, %cst_159 {dimension_numbers = #tpu.dot_dimension_numbers<[1], [0], [0], [1], [0, 0, 1, 1], [], []>} : vector<1x512xbf16>, vector<512x128xbf16>, vector<1x128xf32> -> vector<1x128xf32>
    %308 = tpu.concatenate %307, %282 in 1 : vector<1x128xf32>, vector<1x256xf32> -> vector<1x384xf32>
    %309 = arith.truncf %308 : vector<1x384xf32> to vector<1x384xbf16>
    %c0_160 = arith.constant 0 : index
    %c0_161 = arith.constant 0 : index
    %310 = vector.load %arg3[%c0_160, %c0_161] : memref<384x256xbf16, #tpu.memory_space<vmem>>, vector<384x256xbf16>
    %cst_162 = arith.constant dense<0.000000e+00> : vector<1x256xf32>
    %311 = tpu.matmul %309, %310, %cst_162 {dimension_numbers = #tpu.dot_dimension_numbers<[1], [0], [0], [1], [0, 0, 1, 1], [], []>} : vector<1x384xbf16>, vector<384x256xbf16>, vector<1x256xf32> -> vector<1x256xf32>
    %c0_163 = arith.constant 0 : index
    %c0_164 = arith.constant 0 : index
    %312 = vector.load %arg4[%c0_163, %c0_164] : memref<1x256xf32, #tpu.memory_space<vmem>>, vector<1x256xf32>
    %313 = arith.addf %311, %312 : vector<1x256xf32>
    %cst_165 = arith.constant 0.000000e+00 : f32
    %314 = vector.broadcast %cst_165 : f32 to vector<1x256xf32>
    %315 = arith.maximumf %313, %314 : vector<1x256xf32>
    %316 = arith.truncf %315 : vector<1x256xf32> to vector<1x256xbf16>
    %c0_166 = arith.constant 0 : index
    %c0_167 = arith.constant 0 : index
    %317 = vector.load %arg5[%c0_166, %c0_167] : memref<256x512xbf16, #tpu.memory_space<vmem>>, vector<256x512xbf16>
    %cst_168 = arith.constant dense<0.000000e+00> : vector<1x512xf32>
    %318 = tpu.matmul %316, %317, %cst_168 {dimension_numbers = #tpu.dot_dimension_numbers<[1], [0], [0], [1], [0, 0, 1, 1], [], []>} : vector<1x256xbf16>, vector<256x512xbf16>, vector<1x512xf32> -> vector<1x512xf32>
    %c0_169 = arith.constant 0 : index
    %c0_170 = arith.constant 0 : index
    %319 = vector.load %arg6[%c0_169, %c0_170] : memref<1x512xf32, #tpu.memory_space<vmem>>, vector<1x512xf32>
    %320 = arith.addf %318, %319 : vector<1x512xf32>
    %cst_171 = arith.constant dense<0xFF800000> : vector<1xf32>
    %321 = vector.multi_reduction <maximumf>, %320, %cst_171 [1] : vector<1x512xf32> to vector<1xf32>
    %322 = vector.shape_cast %321 : vector<1xf32> to vector<1x1xf32>
    %323 = vector.broadcast %322 : vector<1x1xf32> to vector<1x512xf32>
    %324 = arith.cmpf oeq, %320, %323 : vector<1x512xf32>
    %c512_i32_172 = arith.constant 512 : i32
    %325 = vector.broadcast %c512_i32_172 : i32 to vector<1x512xi32>
    %326 = arith.select %324, %8, %325 : vector<1x512xi1>, vector<1x512xi32>
    %cst_173 = arith.constant dense<2147483647> : vector<1xi32>
    %327 = vector.multi_reduction <minsi>, %326, %cst_173 [1] : vector<1x512xi32> to vector<1xi32>
    %328 = vector.shape_cast %327 : vector<1xi32> to vector<1x1xi32>
    %c9_i32 = arith.constant 9 : i32
    %329 = vector.broadcast %c9_i32 : i32 to vector<1x128xi32>
    %330 = arith.cmpi eq, %9, %329 : vector<1x128xi32>
    %331 = vector.shape_cast %328 : vector<1x1xi32> to vector<1x1xi32>
    %332 = vector.broadcast %331 : vector<1x1xi32> to vector<1x128xi32>
    %333 = arith.select %330, %332, %300 : vector<1x128xi1>, vector<1x128xi32>
    %c0_174 = arith.constant 0 : index
    %c0_175 = arith.constant 0 : index
    %334 = vector.load %arg8[%c0_174, %c0_175] : memref<1x128xi32, #tpu.memory_space<vmem>>, vector<1x128xi32>
    tpu.vector_store %arg8[%c0_174, %c0_175], %333 {strides = array<i32>} : memref<1x128xi32, #tpu.memory_space<vmem>>, vector<1x128xi32>,
    return
  }
}

</mosaic_0001>

<llo_original>
// kernel: tpu_custom_call.1
$region0: #{tpu_custom_call.1}
  #allocation0 [shape = 'u32[]', space=smem, size = 0x4, offset = 0x4, fixed_abs, tag = 'smem constant byte address 0x4 - core index']
  #allocation1 [shape = 'u32[144,128]{1,0:T(1,128)}', space=vmem, size = 0x12000, scoped, tag = 'internal scratch']
  %s0 = inlined_call_operand.hbm [shape: bf16[1,1024], index: 0, kind: input, shape index: {}]
  %s1 = inlined_call_operand.hbm [shape: bf16[1024,256], index: 1, kind: input, shape index: {}]
  %s2 = inlined_call_operand.vmem [shape: f32[1,256], index: 2, kind: input, shape index: {}]
  %s3 = inlined_call_operand.hbm [shape: bf16[384,256], index: 3, kind: input, shape index: {}]
  %s4 = inlined_call_operand.hbm [shape: f32[1,256], index: 4, kind: input, shape index: {}]
  %s5 = inlined_call_operand.hbm [shape: bf16[256,512], index: 5, kind: input, shape index: {}]
  %s6 = inlined_call_operand.vmem [shape: f32[1,512], index: 6, kind: input, shape index: {}]
  %s7 = inlined_call_operand.hbm [shape: bf16[512,128], index: 7, kind: input, shape index: {}]
  %s8 = inlined_call_operand.hbm [shape: s32[1,128], index: 8, kind: output, shape index: {}]
  %s9 = sld [smem:[#allocation0]]
  $region66: #{tpu_custom_call.1} parent=0
    _
  %s11 = ssub.s32 1, %s9
  %s12 = scalar_select 0, %s11, %s9
  $region1: #{tpu_custom_call.1} parent=0
    #allocation2 [shape = 'u8[4096]{0}', space=vmem, size = 0x1000, scoped, tag = 'input window, operand 0, single buffered']
    #allocation3 [shape = 's32[1]{0}', space=sflag, size = 0x4, scoped, tag = 'scoped memory for tpu_custom_call.1']
    #allocation4 [shape = 's32[1]{0}', space=sflag, size = 0x4, scoped, tag = 'scoped memory for tpu_custom_call.1']
    #allocation5 [shape = 'u8[524288]{0}', space=vmem, size = 0x80000, scoped, tag = 'input window, operand 1, single buffered']
    #allocation6 [shape = 's32[1]{0}', space=sflag, size = 0x4, scoped, tag = 'scoped memory for tpu_custom_call.1']
    #allocation7 [shape = 'u8[196608]{0}', space=vmem, size = 0x30000, scoped, tag = 'input window, operand 3, single buffered']
    #allocation8 [shape = 'u8[1024]{0}', space=vmem, size = 0x400, scoped, tag = 'input window, operand 4, single buffered']
    #allocation9 [shape = 's32[1]{0}', space=sflag, size = 0x4, scoped, tag = 'scoped memory for tpu_custom_call.1']
    #allocation10 [shape = 'u8[262144]{0}', space=vmem, size = 0x40000, scoped, tag = 'input window, operand 5, single buffered']
    #allocation11 [shape = 'u8[131072]{0}', space=vmem, size = 0x20000, scoped, tag = 'input window, operand 7, single buffered']
    #allocation12 [shape = 's32[1]{0}', space=sflag, size = 0x4, scoped, tag = 'scoped memory for tpu_custom_call.1']
    #allocation13 [shape = 'u8[512]{0}', space=vmem, size = 0x400, scoped, tag = 'output window, operand 0, single buffered']
    %13 = vsyncpa [#allocation3], 0
    %14 = vsyncpa [#allocation6], 0
    %15 = vsyncpa [#allocation9], 0
    %16 = vsyncpa [#allocation12], 0
    %17 = vsyncpa [#allocation4], 0
    // Predicated region
    $region2: #{tpu_custom_call.1} parent=1 // pred_check
      _
    $region3: #{tpu_custom_call.1} parent=1 // pred_check_branch
      %19 = sbr.rel (0) target = $region5
    $region4: #{tpu_custom_call.1} parent=1 // pred_region
      %s21 = ssub.s32 128, 128
      %22 = vsyncadd [#allocation3], %s21
      %s24 = sshll.u32 [#allocation2], 4
      %s25 = int_to_ptr.vmem [resolvable:$true] %s24
      %27 = dma.hbm_to_vmem [thread:$0]  %s0, 128, %s25, [#allocation3]
    $region5: #{tpu_custom_call.1} parent=1 // pred_fallthru
      _
    // Predicated region
    $region6: #{tpu_custom_call.1} parent=1 // pred_check
      _
    $region7: #{tpu_custom_call.1} parent=1 // pred_check_branch
      %29 = sbr.rel (0) target = $region9
    $region8: #{tpu_custom_call.1} parent=1 // pred_region
      %s31 = ssub.s32 16384, 16384
      %32 = vsyncadd [#allocation6], %s31
      %s33 = sshll.u32 [#allocation5], 4
      %s34 = int_to_ptr.vmem [resolvable:$true] %s33
      %39 = dma.hbm_to_vmem [thread:$0]  %s1, 16384, %s34, [#allocation6], 128, 128, 8
    $region9: #{tpu_custom_call.1} parent=1 // pred_fallthru
      _
    // Predicated region
    $region10: #{tpu_custom_call.1} parent=1 // pred_check
      _
    $region11: #{tpu_custom_call.1} parent=1 // pred_check_branch
      %41 = sbr.rel (0) target = $region13
    $region12: #{tpu_custom_call.1} parent=1 // pred_region
      _
    $region13: #{tpu_custom_call.1} parent=1 // pred_fallthru
      _
    // Predicated region
    $region14: #{tpu_custom_call.1} parent=1 // pred_check
      _
    $region15: #{tpu_custom_call.1} parent=1 // pred_check_branch
      %43 = sbr.rel (0) target = $region17
    $region16: #{tpu_custom_call.1} parent=1 // pred_region
      %s45 = ssub.s32 6144, 6144
      %46 = vsyncadd [#allocation6], %s45
      %s47 = sshll.u32 [#allocation7], 4
      %s48 = int_to_ptr.vmem [resolvable:$true] %s47
      %53 = dma.hbm_to_vmem [thread:$0]  %s3, 6144, %s48, [#allocation6], 128, 128, 8
    $region17: #{tpu_custom_call.1} parent=1 // pred_fallthru
      _
    // Predicated region
    $region18: #{tpu_custom_call.1} parent=1 // pred_check
      _
    $region19: #{tpu_custom_call.1} parent=1 // pred_check_branch
      %55 = sbr.rel (0) target = $region21
    $region20: #{tpu_custom_call.1} parent=1 // pred_region
      %s57 = ssub.s32 32, 32
      %58 = vsyncadd [#allocation9], %s57
      %s60 = sshll.u32 [#allocation8], 4
      %s61 = int_to_ptr.vmem [resolvable:$true] %s60
      %63 = dma.hbm_to_vmem [thread:$0]  %s4, 32, %s61, [#allocation9]
    $region21: #{tpu_custom_call.1} parent=1 // pred_fallthru
      _
    // Predicated region
    $region22: #{tpu_custom_call.1} parent=1 // pred_check
      _
    $region23: #{tpu_custom_call.1} parent=1 // pred_check_branch
      %65 = sbr.rel (0) target = $region25
    $region24: #{tpu_custom_call.1} parent=1 // pred_region
      %s67 = ssub.s32 8192, 8192
      %68 = vsyncadd [#allocation9], %s67
      %s69 = sshll.u32 [#allocation10], 4
      %s70 = int_to_ptr.vmem [resolvable:$true] %s69
      %75 = dma.hbm_to_vmem [thread:$0]  %s5, 8192, %s70, [#allocation9], 256, 256, 16
    $region25: #{tpu_custom_call.1} parent=1 // pred_fallthru
      _
    // Predicated region
    $region26: #{tpu_custom_call.1} parent=1 // pred_check
      _
    $region27: #{tpu_custom_call.1} parent=1 // pred_check_branch
      %77 = sbr.rel (0) target = $region29
    $region28: #{tpu_custom_call.1} parent=1 // pred_region
      _
    $region29: #{tpu_custom_call.1} parent=1 // pred_fallthru
      _
    // Predicated region
    $region30: #{tpu_custom_call.1} parent=1 // pred_check
      _
    $region31: #{tpu_custom_call.1} parent=1 // pred_check_branch
      %79 = sbr.rel (0) target = $region33
    $region32: #{tpu_custom_call.1} parent=1 // pred_region
      %s81 = ssub.s32 4096, 4096
      %82 = vsyncadd [#allocation12], %s81
      %s83 = sshll.u32 [#allocation11], 4
      %s84 = int_to_ptr.vmem [resolvable:$true] %s83
      %89 = dma.hbm_to_vmem [thread:$0]  %s7, 4096, %s84, [#allocation12], 64, 64, 4
    $region33: #{tpu_custom_call.1} parent=1 // pred_fallthru
      _
    // Predicated region
    $region34: #{tpu_custom_call.1} parent=1 // pred_check
      _
    $region35: #{tpu_custom_call.1} parent=1 // pred_check_branch
      %91 = sbr.rel (0) target = $region37
    $region36: #{tpu_custom_call.1} parent=1 // pred_region
      %92 = dma.done [#allocation3], 128
    $region37: #{tpu_custom_call.1} parent=1 // pred_fallthru
      _
    // Predicated region
    $region38: #{tpu_custom_call.1} parent=1 // pred_check
      _
    $region39: #{tpu_custom_call.1} parent=1 // pred_check_branch
      %94 = sbr.rel (0) target = $region41
    $region40: #{tpu_custom_call.1} parent=1 // pred_region
      %95 = dma.done [#allocation6], 16384
    $region41: #{tpu_custom_call.1} parent=1 // pred_fallthru
      _
    // Predicated region
    $region42: #{tpu_custom_call.1} parent=1 // pred_check
      _
    $region43: #{tpu_custom_call.1} parent=1 // pred_check_branch
      %97 = sbr.rel (0) target = $region45
    $region44: #{tpu_custom_call.1} parent=1 // pred_region
      %98 = dma.done [#allocation6], 6144
    $region45: #{tpu_custom_call.1} parent=1 // pred_fallthru
      _
    // Predicated region
    $region46: #{tpu_custom_call.1} parent=1 // pred_check
      _
    $region47: #{tpu_custom_call.1} parent=1 // pred_check_branch
      %100 = sbr.rel (0) target = $region49
    $region48: #{tpu_custom_call.1} parent=1 // pred_region
      %101 = dma.done [#allocation9], 32
    $region49: #{tpu_custom_call.1} parent=1 // pred_fallthru
      _
    // Predicated region
    $region50: #{tpu_custom_call.1} parent=1 // pred_check
      _
    $region51: #{tpu_custom_call.1} parent=1 // pred_check_branch
      %103 = sbr.rel (0) target = $region53
    $region52: #{tpu_custom_call.1} parent=1 // pred_region
      %104 = dma.done [#allocation9], 8192
    $region53: #{tpu_custom_call.1} parent=1 // pred_fallthru
      _
    // Predicated region
    $region54: #{tpu_custom_call.1} parent=1 // pred_check
      _
    $region55: #{tpu_custom_call.1} parent=1 // pred_check_branch
      %106 = sbr.rel (0) target = $region57
    $region56: #{tpu_custom_call.1} parent=1 // pred_region
      %107 = dma.done [#allocation12], 4096
    $region57: #{tpu_custom_call.1} parent=1 // pred_fallthru
      _
    %v109 = vld [vmem:[#allocation2] sm:$0xff]
    %v110 = vld [vmem:[#allocation5] sm:$0xff]
    %v111 = vld [vmem:[#allocation5 + $0x8] sm:$0xff]
    %v112 = vld [vmem:[#allocation5 + $0x10] sm:$0xff]
    %v113 = vld [vmem:[#allocation5 + $0x18] sm:$0xff]
    %v114 = vld [vmem:[#allocation5 + $0x20] sm:$0xff]
    %v115 = vld [vmem:[#allocation5 + $0x28] sm:$0xff]
    %v116 = vld [vmem:[#allocation5 + $0x30] sm:$0xff]
    %v117 = vld [vmem:[#allocation5 + $0x38] sm:$0xff]
    %v118 = vld [vmem:[#allocation5 + $0x40] sm:$0xff]
    %v119 = vld [vmem:[#allocation5 + $0x48] sm:$0xff]
    %v120 = vld [vmem:[#allocation5 + $0x50] sm:$0xff]
    %v121 = vld [vmem:[#allocation5 + $0x58] sm:$0xff]
    %v122 = vld [vmem:[#allocation5 + $0x60] sm:$0xff]
    %v123 = vld [vmem:[#allocation5 + $0x68] sm:$0xff]
    %v124 = vld [vmem:[#allocation5 + $0x70] sm:$0xff]
    %v125 = vld [vmem:[#allocation5 + $0x78] sm:$0xff]
    %v126 = vld [vmem:[#allocation5 + $0x80] sm:$0xff]
    %v127 = vld [vmem:[#allocation5 + $0x88] sm:$0xff]
    %v128 = vld [vmem:[#allocation5 + $0x90] sm:$0xff]
    %v129 = vld [vmem:[#allocation5 + $0x98] sm:$0xff]
    %v130 = vld [vmem:[#allocation5 + $0xa0] sm:$0xff]
    %v131 = vld [vmem:[#allocation5 + $0xa8] sm:$0xff]
    %v132 = vld [vmem:[#allocation5 + $0xb0] sm:$0xff]
    %v133 = vld [vmem:[#allocation5 + $0xb8] sm:$0xff]
    %v134 = vld [vmem:[#allocation5 + $0xc0] sm:$0xff]
    %v135 = vld [vmem:[#allocation5 + $0xc8] sm:$0xff]
    %v136 = vld [vmem:[#allocation5 + $0xd0] sm:$0xff]
    %v137 = vld [vmem:[#allocation5 + $0xd8] sm:$0xff]
    %v138 = vld [vmem:[#allocation5 + $0xe0] sm:$0xff]
    %v139 = vld [vmem:[#allocation5 + $0xe8] sm:$0xff]
    %v140 = vld [vmem:[#allocation5 + $0xf0] sm:$0xff]
    %v141 = vld [vmem:[#allocation5 + $0xf8] sm:$0xff]
    %v142 = vld [vmem:[#allocation5 + $0x100] sm:$0xff]
    %v143 = vld [vmem:[#allocation5 + $0x108] sm:$0xff]
    %v144 = vld [vmem:[#allocation5 + $0x110] sm:$0xff]
    %v145 = vld [vmem:[#allocation5 + $0x118] sm:$0xff]
    %v146 = vld [vmem:[#allocation5 + $0x120] sm:$0xff]
    %v147 = vld [vmem:[#allocation5 + $0x128] sm:$0xff]
    %v148 = vld [vmem:[#allocation5 + $0x130] sm:$0xff]
    %v149 = vld [vmem:[#allocation5 + $0x138] sm:$0xff]
    %v150 = vld [vmem:[#allocation5 + $0x140] sm:$0xff]
    %v151 = vld [vmem:[#allocation5 + $0x148] sm:$0xff]
    %v152 = vld [vmem:[#allocation5 + $0x150] sm:$0xff]
    %v153 = vld [vmem:[#allocation5 + $0x158] sm:$0xff]
    %v154 = vld [vmem:[#allocation5 + $0x160] sm:$0xff]
    %v155 = vld [vmem:[#allocation5 + $0x168] sm:$0xff]
    %v156 = vld [vmem:[#allocation5 + $0x170] sm:$0xff]
    %v157 = vld [vmem:[#allocation5 + $0x178] sm:$0xff]
    %v158 = vld [vmem:[#allocation5 + $0x180] sm:$0xff]
    %v159 = vld [vmem:[#allocation5 + $0x188] sm:$0xff]
    %v160 = vld [vmem:[#allocation5 + $0x190] sm:$0xff]
    %v161 = vld [vmem:[#allocation5 + $0x198] sm:$0xff]
    %v162 = vld [vmem:[#allocation5 + $0x1a0] sm:$0xff]
    %v163 = vld [vmem:[#allocation5 + $0x1a8] sm:$0xff]
    %v164 = vld [vmem:[#allocation5 + $0x1b0] sm:$0xff]
    %v165 = vld [vmem:[#allocation5 + $0x1b8] sm:$0xff]
    %v166 = vld [vmem:[#allocation5 + $0x1c0] sm:$0xff]
    %v167 = vld [vmem:[#allocation5 + $0x1c8] sm:$0xff]
    %v168 = vld [vmem:[#allocation5 + $0x1d0] sm:$0xff]
    %v169 = vld [vmem:[#allocation5 + $0x1d8] sm:$0xff]
    %v170 = vld [vmem:[#allocation5 + $0x1e0] sm:$0xff]
    %v171 = vld [vmem:[#allocation5 + $0x1e8] sm:$0xff]
    %v172 = vld [vmem:[#allocation5 + $0x1f0] sm:$0xff]
    %v173 = vld [vmem:[#allocation5 + $0x1f8] sm:$0xff]
    %v174 = vld [vmem:[#allocation5 + $0x200] sm:$0xff]
    %v175 = vld [vmem:[#allocation5 + $0x208] sm:$0xff]
    %v176 = vld [vmem:[#allocation5 + $0x210] sm:$0xff]
    %v177 = vld [vmem:[#allocation5 + $0x218] sm:$0xff]
    %v178 = vld [vmem:[#allocation5 + $0x220] sm:$0xff]
    %v179 = vld [vmem:[#allocation5 + $0x228] sm:$0xff]
    %v180 = vld [vmem:[#allocation5 + $0x230] sm:$0xff]
    %v181 = vld [vmem:[#allocation5 + $0x238] sm:$0xff]
    %v182 = vld [vmem:[#allocation5 + $0x240] sm:$0xff]
    %v183 = vld [vmem:[#allocation5 + $0x248] sm:$0xff]
    %v184 = vld [vmem:[#allocation5 + $0x250] sm:$0xff]
    %v185 = vld [vmem:[#allocation5 + $0x258] sm:$0xff]
    %v186 = vld [vmem:[#allocation5 + $0x260] sm:$0xff]
    %v187 = vld [vmem:[#allocation5 + $0x268] sm:$0xff]
    %v188 = vld [vmem:[#allocation5 + $0x270] sm:$0xff]
    %v189 = vld [vmem:[#allocation5 + $0x278] sm:$0xff]
    %v190 = vld [vmem:[#allocation5 + $0x280] sm:$0xff]
    %v191 = vld [vmem:[#allocation5 + $0x288] sm:$0xff]
    %v192 = vld [vmem:[#allocation5 + $0x290] sm:$0xff]
    %v193 = vld [vmem:[#allocation5 + $0x298] sm:$0xff]
    %v194 = vld [vmem:[#allocation5 + $0x2a0] sm:$0xff]
    %v195 = vld [vmem:[#allocation5 + $0x2a8] sm:$0xff]
    %v196 = vld [vmem:[#allocation5 + $0x2b0] sm:$0xff]
    %v197 = vld [vmem:[#allocation5 + $0x2b8] sm:$0xff]
    %v198 = vld [vmem:[#allocation5 + $0x2c0] sm:$0xff]
    %v199 = vld [vmem:[#allocation5 + $0x2c8] sm:$0xff]
    %v200 = vld [vmem:[#allocation5 + $0x2d0] sm:$0xff]
    %v201 = vld [vmem:[#allocation5 + $0x2d8] sm:$0xff]
    %v202 = vld [vmem:[#allocation5 + $0x2e0] sm:$0xff]
    %v203 = vld [vmem:[#allocation5 + $0x2e8] sm:$0xff]
    %v204 = vld [vmem:[#allocation5 + $0x2f0] sm:$0xff]
    %v205 = vld [vmem:[#allocation5 + $0x2f8] sm:$0xff]
    %v206 = vld [vmem:[#allocation5 + $0x300] sm:$0xff]
    %v207 = vld [vmem:[#allocation5 + $0x308] sm:$0xff]
    %v208 = vld [vmem:[#allocation5 + $0x310] sm:$0xff]
    %v209 = vld [vmem:[#allocation5 + $0x318] sm:$0xff]
    %v210 = vld [vmem:[#allocation5 + $0x320] sm:$0xff]
    %v211 = vld [vmem:[#allocation5 + $0x328] sm:$0xff]
    %v212 = vld [vmem:[#allocation5 + $0x330] sm:$0xff]
    %v213 = vld [vmem:[#allocation5 + $0x338] sm:$0xff]
    %v214 = vld [vmem:[#allocation5 + $0x340] sm:$0xff]
    %v215 = vld [vmem:[#allocation5 + $0x348] sm:$0xff]
    %v216 = vld [vmem:[#allocation5 + $0x350] sm:$0xff]
    %v217 = vld [vmem:[#allocation5 + $0x358] sm:$0xff]
    %v218 = vld [vmem:[#allocation5 + $0x360] sm:$0xff]
    %v219 = vld [vmem:[#allocation5 + $0x368] sm:$0xff]
    %v220 = vld [vmem:[#allocation5 + $0x370] sm:$0xff]
    %v221 = vld [vmem:[#allocation5 + $0x378] sm:$0xff]
    %v222 = vld [vmem:[#allocation5 + $0x380] sm:$0xff]
    %v223 = vld [vmem:[#allocation5 + $0x388] sm:$0xff]
    %v224 = vld [vmem:[#allocation5 + $0x390] sm:$0xff]
    %v225 = vld [vmem:[#allocation5 + $0x398] sm:$0xff]
    %v226 = vld [vmem:[#allocation5 + $0x3a0] sm:$0xff]
    %v227 = vld [vmem:[#allocation5 + $0x3a8] sm:$0xff]
    %v228 = vld [vmem:[#allocation5 + $0x3b0] sm:$0xff]
    %v229 = vld [vmem:[#allocation5 + $0x3b8] sm:$0xff]
    %v230 = vld [vmem:[#allocation5 + $0x3c0] sm:$0xff]
    %v231 = vld [vmem:[#allocation5 + $0x3c8] sm:$0xff]
    %v232 = vld [vmem:[#allocation5 + $0x3d0] sm:$0xff]
    %v233 = vld [vmem:[#allocation5 + $0x3d8] sm:$0xff]
    %v234 = vld [vmem:[#allocation5 + $0x3e0] sm:$0xff]
    %v235 = vld [vmem:[#allocation5 + $0x3e8] sm:$0xff]
    %v236 = vld [vmem:[#allocation5 + $0x3f0] sm:$0xff]
    %v237 = vld [vmem:[#allocation5 + $0x3f8] sm:$0xff]
    %v238 = vld [vmem:[%s2] sm:$0x3]
    %v240 = vcombine.high %v109, %v109
    %v242 = vunpack.c.l.s4 1966171168
    %v243 = vunpack.c.0.s8 %v242
    %v244 = vlaneseq
    %v245 = vshrl.u32 %v244, 7
    %v246 = vsub.s32 %v243, %v245
    %v247 = vrot.slane %v109, %v246
    %v249 = vunpack.c.l.s4 1966171168
    %v250 = vunpack.c.0.s8 %v249
    %v251 = vlaneseq
    %v252 = vshrl.u32 %v251, 7
    %v253 = vsub.s32 %v250, %v252
    %v254 = vrot.slane %v240, %v253
    %v255 = vcombine.high %v247, %v247
    %v256 = vcombine.high %v254, %v254
    %v258 = vunpack.c.l.s4 1966171168
    %v259 = vunpack.c.0.s8 %v258
    %v260 = vlaneseq
    %v261 = vshrl.u32 %v260, 7
    %v262 = vsub.s32 %v259, %v261
    %v263 = vrot.slane %v247, %v262
    %v265 = vunpack.c.l.s4 1966171168
    %v266 = vunpack.c.0.s8 %v265
    %v267 = vlaneseq
    %v268 = vshrl.u32 %v267, 7
    %v269 = vsub.s32 %v266, %v268
    %v270 = vrot.slane %v254, %v269
    %v272 = vunpack.c.l.s4 1966171168
    %v273 = vunpack.c.0.s8 %v272
    %v274 = vlaneseq
    %v275 = vshrl.u32 %v274, 7
    %v276 = vsub.s32 %v273, %v275
    %v277 = vrot.slane %v255, %v276
    %v279 = vunpack.c.l.s4 1966171168
    %v280 = vunpack.c.0.s8 %v279
    %v281 = vlaneseq
    %v282 = vshrl.u32 %v281, 7
    %v283 = vsub.s32 %v280, %v282
    %v284 = vrot.slane %v256, %v283
    %v285 = vcombine.high %v263, %v263
    %v286 = vcombine.high %v270, %v270
    %v287 = vcombine.high %v277, %v277
    %v288 = vcombine.high %v284, %v284
    %v425 = vunpack.c.l.b16 %v110
    %v426 = vunpack.c.h.b16 %v110
    %v427 = vunpack.c.l.b16 %v111
    %v428 = vunpack.c.h.b16 %v111
    %v429 = vunpack.c.l.b16 %v112
    %v430 = vunpack.c.h.b16 %v112
    %v431 = vunpack.c.l.b16 %v113
    %v432 = vunpack.c.h.b16 %v113
    %v433 = vunpack.c.l.b16 %v114
    %v434 = vunpack.c.h.b16 %v114
    %v435 = vunpack.c.l.b16 %v115
    %v436 = vunpack.c.h.b16 %v115
    %v437 = vunpack.c.l.b16 %v116
    %v438 = vunpack.c.h.b16 %v116
    %v439 = vunpack.c.l.b16 %v117
    %v440 = vunpack.c.h.b16 %v117
    %v441 = vunpack.c.l.b16 %v118
    %v442 = vunpack.c.h.b16 %v118
    %v443 = vunpack.c.l.b16 %v119
    %v444 = vunpack.c.h.b16 %v119
    %v445 = vunpack.c.l.b16 %v120
    %v446 = vunpack.c.h.b16 %v120
    %v447 = vunpack.c.l.b16 %v121
    %v448 = vunpack.c.h.b16 %v121
    %v449 = vunpack.c.l.b16 %v122
    %v450 = vunpack.c.h.b16 %v122
    %v451 = vunpack.c.l.b16 %v123
    %v452 = vunpack.c.h.b16 %v123
    %v453 = vunpack.c.l.b16 %v124
    %v454 = vunpack.c.h.b16 %v124
    %v455 = vunpack.c.l.b16 %v125
    %v456 = vunpack.c.h.b16 %v125
    %v457 = vunpack.c.l.b16 %v126
    %v458 = vunpack.c.h.b16 %v126
    %v459 = vunpack.c.l.b16 %v127
    %v460 = vunpack.c.h.b16 %v127
    %v461 = vunpack.c.l.b16 %v128
    %v462 = vunpack.c.h.b16 %v128
    %v463 = vunpack.c.l.b16 %v129
    %v464 = vunpack.c.h.b16 %v129
    %v465 = vunpack.c.l.b16 %v130
    %v466 = vunpack.c.h.b16 %v130
    %v467 = vunpack.c.l.b16 %v131
    %v468 = vunpack.c.h.b16 %v131
    %v469 = vunpack.c.l.b16 %v132
    %v470 = vunpack.c.h.b16 %v132
    %v471 = vunpack.c.l.b16 %v133
    %v472 = vunpack.c.h.b16 %v133
    %v473 = vunpack.c.l.b16 %v134
    %v474 = vunpack.c.h.b16 %v134
    %v475 = vunpack.c.l.b16 %v135
    %v476 = vunpack.c.h.b16 %v135
    %v477 = vunpack.c.l.b16 %v136
    %v478 = vunpack.c.h.b16 %v136
    %v479 = vunpack.c.l.b16 %v137
    %v480 = vunpack.c.h.b16 %v137
    %v481 = vunpack.c.l.b16 %v138
    %v482 = vunpack.c.h.b16 %v138
    %v483 = vunpack.c.l.b16 %v139
    %v484 = vunpack.c.h.b16 %v139
    %v485 = vunpack.c.l.b16 %v140
    %v486 = vunpack.c.h.b16 %v140
    %v487 = vunpack.c.l.b16 %v141
    %v488 = vunpack.c.h.b16 %v141
    %v489 = vunpack.c.l.b16 %v142
    %v490 = vunpack.c.h.b16 %v142
    %v491 = vunpack.c.l.b16 %v143
    %v492 = vunpack.c.h.b16 %v143
    %v493 = vunpack.c.l.b16 %v144
    %v494 = vunpack.c.h.b16 %v144
    %v495 = vunpack.c.l.b16 %v145
    %v496 = vunpack.c.h.b16 %v145
    %v497 = vunpack.c.l.b16 %v146
    %v498 = vunpack.c.h.b16 %v146
    %v499 = vunpack.c.l.b16 %v147
    %v500 = vunpack.c.h.b16 %v147
    %v501 = vunpack.c.l.b16 %v148
    %v502 = vunpack.c.h.b16 %v148
    %v503 = vunpack.c.l.b16 %v149
    %v504 = vunpack.c.h.b16 %v149
    %v505 = vunpack.c.l.b16 %v150
    %v506 = vunpack.c.h.b16 %v150
    %v507 = vunpack.c.l.b16 %v151
    %v508 = vunpack.c.h.b16 %v151
    %v509 = vunpack.c.l.b16 %v152
    %v510 = vunpack.c.h.b16 %v152
    %v511 = vunpack.c.l.b16 %v153
    %v512 = vunpack.c.h.b16 %v153
    %v513 = vunpack.c.l.b16 %v154
    %v514 = vunpack.c.h.b16 %v154
    %v515 = vunpack.c.l.b16 %v155
    %v516 = vunpack.c.h.b16 %v155
    %v517 = vunpack.c.l.b16 %v156
    %v518 = vunpack.c.h.b16 %v156
    %v519 = vunpack.c.l.b16 %v157
    %v520 = vunpack.c.h.b16 %v157
    %v521 = vunpack.c.l.b16 %v158
    %v522 = vunpack.c.h.b16 %v158
    %v523 = vunpack.c.l.b16 %v159
    %v524 = vunpack.c.h.b16 %v159
    %v525 = vunpack.c.l.b16 %v160
    %v526 = vunpack.c.h.b16 %v160
    %v527 = vunpack.c.l.b16 %v161
    %v528 = vunpack.c.h.b16 %v161
    %v529 = vunpack.c.l.b16 %v162
    %v530 = vunpack.c.h.b16 %v162
    %v531 = vunpack.c.l.b16 %v163
    %v532 = vunpack.c.h.b16 %v163
    %v533 = vunpack.c.l.b16 %v164
    %v534 = vunpack.c.h.b16 %v164
    %v535 = vunpack.c.l.b16 %v165
    %v536 = vunpack.c.h.b16 %v165
    %v537 = vunpack.c.l.b16 %v166
    %v538 = vunpack.c.h.b16 %v166
    %v539 = vunpack.c.l.b16 %v167
    %v540 = vunpack.c.h.b16 %v167
    %v541 = vunpack.c.l.b16 %v168
    %v542 = vunpack.c.h.b16 %v168
    %v543 = vunpack.c.l.b16 %v169
    %v544 = vunpack.c.h.b16 %v169
    %v545 = vunpack.c.l.b16 %v170
    %v546 = vunpack.c.h.b16 %v170
    %v547 = vunpack.c.l.b16 %v171
    %v548 = vunpack.c.h.b16 %v171
    %v549 = vunpack.c.l.b16 %v172
    %v550 = vunpack.c.h.b16 %v172
    %v551 = vunpack.c.l.b16 %v173
    %v552 = vunpack.c.h.b16 %v173
    %v553 = vunpack.c.l.b16 %v174
    %v554 = vunpack.c.h.b16 %v174
    %v555 = vunpack.c.l.b16 %v175
    %v556 = vunpack.c.h.b16 %v175
    %v557 = vunpack.c.l.b16 %v176
    %v558 = vunpack.c.h.b16 %v176
    %v559 = vunpack.c.l.b16 %v177
    %v560 = vunpack.c.h.b16 %v177
    %v561 = vunpack.c.l.b16 %v178
    %v562 = vunpack.c.h.b16 %v178
    %v563 = vunpack.c.l.b16 %v179
    %v564 = vunpack.c.h.b16 %v179
    %v565 = vunpack.c.l.b16 %v180
    %v566 = vunpack.c.h.b16 %v180
    %v567 = vunpack.c.l.b16 %v181
    %v568 = vunpack.c.h.b16 %v181
    %v569 = vunpack.c.l.b16 %v182
    %v570 = vunpack.c.h.b16 %v182
    %v571 = vunpack.c.l.b16 %v183
    %v572 = vunpack.c.h.b16 %v183
    %v573 = vunpack.c.l.b16 %v184
    %v574 = vunpack.c.h.b16 %v184
    %v575 = vunpack.c.l.b16 %v185
    %v576 = vunpack.c.h.b16 %v185
    %v577 = vunpack.c.l.b16 %v186
    %v578 = vunpack.c.h.b16 %v186
    %v579 = vunpack.c.l.b16 %v187
    %v580 = vunpack.c.h.b16 %v187
    %v581 = vunpack.c.l.b16 %v188
    %v582 = vunpack.c.h.b16 %v188
    %v583 = vunpack.c.l.b16 %v189
    %v584 = vunpack.c.h.b16 %v189
    %v585 = vunpack.c.l.b16 %v190
    %v586 = vunpack.c.h.b16 %v190
    %v587 = vunpack.c.l.b16 %v191
    %v588 = vunpack.c.h.b16 %v191
    %v589 = vunpack.c.l.b16 %v192
    %v590 = vunpack.c.h.b16 %v192
    %v591 = vunpack.c.l.b16 %v193
    %v592 = vunpack.c.h.b16 %v193
    %v593 = vunpack.c.l.b16 %v194
    %v594 = vunpack.c.h.b16 %v194
    %v595 = vunpack.c.l.b16 %v195
    %v596 = vunpack.c.h.b16 %v195
    %v597 = vunpack.c.l.b16 %v196
    %v598 = vunpack.c.h.b16 %v196
    %v599 = vunpack.c.l.b16 %v197
    %v600 = vunpack.c.h.b16 %v197
    %v601 = vunpack.c.l.b16 %v198
    %v602 = vunpack.c.h.b16 %v198
    %v603 = vunpack.c.l.b16 %v199
    %v604 = vunpack.c.h.b16 %v199
    %v605 = vunpack.c.l.b16 %v200
    %v606 = vunpack.c.h.b16 %v200
    %v607 = vunpack.c.l.b16 %v201
    %v608 = vunpack.c.h.b16 %v201
    %v609 = vunpack.c.l.b16 %v202
    %v610 = vunpack.c.h.b16 %v202
    %v611 = vunpack.c.l.b16 %v203
    %v612 = vunpack.c.h.b16 %v203
    %v613 = vunpack.c.l.b16 %v204
    %v614 = vunpack.c.h.b16 %v204
    %v615 = vunpack.c.l.b16 %v205
    %v616 = vunpack.c.h.b16 %v205
    %v617 = vunpack.c.l.b16 %v206
    %v618 = vunpack.c.h.b16 %v206
    %v619 = vunpack.c.l.b16 %v207
    %v620 = vunpack.c.h.b16 %v207
    %v621 = vunpack.c.l.b16 %v208
    %v622 = vunpack.c.h.b16 %v208
    %v623 = vunpack.c.l.b16 %v209
    %v624 = vunpack.c.h.b16 %v209
    %v625 = vunpack.c.l.b16 %v210
    %v626 = vunpack.c.h.b16 %v210
    %v627 = vunpack.c.l.b16 %v211
    %v628 = vunpack.c.h.b16 %v211
    %v629 = vunpack.c.l.b16 %v212
    %v630 = vunpack.c.h.b16 %v212
    %v631 = vunpack.c.l.b16 %v213
    %v632 = vunpack.c.h.b16 %v213
    %v633 = vunpack.c.l.b16 %v214
    %v634 = vunpack.c.h.b16 %v214
    %v635 = vunpack.c.l.b16 %v215
    %v636 = vunpack.c.h.b16 %v215
    %v637 = vunpack.c.l.b16 %v216
    %v638 = vunpack.c.h.b16 %v216
    %v639 = vunpack.c.l.b16 %v217
    %v640 = vunpack.c.h.b16 %v217
    %v641 = vunpack.c.l.b16 %v218
    %v642 = vunpack.c.h.b16 %v218
    %v643 = vunpack.c.l.b16 %v219
    %v644 = vunpack.c.h.b16 %v219
    %v645 = vunpack.c.l.b16 %v220
    %v646 = vunpack.c.h.b16 %v220
    %v647 = vunpack.c.l.b16 %v221
    %v648 = vunpack.c.h.b16 %v221
    %v649 = vunpack.c.l.b16 %v222
    %v650 = vunpack.c.h.b16 %v222
    %v651 = vunpack.c.l.b16 %v223
    %v652 = vunpack.c.h.b16 %v223
    %v653 = vunpack.c.l.b16 %v224
    %v654 = vunpack.c.h.b16 %v224
    %v655 = vunpack.c.l.b16 %v225
    %v656 = vunpack.c.h.b16 %v225
    %v657 = vunpack.c.l.b16 %v226
    %v658 = vunpack.c.h.b16 %v226
    %v659 = vunpack.c.l.b16 %v227
    %v660 = vunpack.c.h.b16 %v227
    %v661 = vunpack.c.l.b16 %v228
    %v662 = vunpack.c.h.b16 %v228
    %v663 = vunpack.c.l.b16 %v229
    %v664 = vunpack.c.h.b16 %v229
    %v665 = vunpack.c.l.b16 %v230
    %v666 = vunpack.c.h.b16 %v230
    %v667 = vunpack.c.l.b16 %v231
    %v668 = vunpack.c.h.b16 %v231
    %v669 = vunpack.c.l.b16 %v232
    %v670 = vunpack.c.h.b16 %v232
    %v671 = vunpack.c.l.b16 %v233
    %v672 = vunpack.c.h.b16 %v233
    %v673 = vunpack.c.l.b16 %v234
    %v674 = vunpack.c.h.b16 %v234
    %v675 = vunpack.c.l.b16 %v235
    %v676 = vunpack.c.h.b16 %v235
    %v677 = vunpack.c.l.b16 %v236
    %v678 = vunpack.c.h.b16 %v236
    %v679 = vunpack.c.l.b16 %v237
    %v680 = vunpack.c.h.b16 %v237
    %v681 = vpack.c.b16 %v427, %v425
    %v682 = vpack.c.b16 %v428, %v426
    %v683 = vpack.c.b16 %v431, %v429
    %v684 = vpack.c.b16 %v432, %v430
    %v685 = vpack.c.b16 %v435, %v433
    %v686 = vpack.c.b16 %v436, %v434
    %v687 = vpack.c.b16 %v439, %v437
    %v688 = vpack.c.b16 %v440, %v438
    %v689 = vpack.c.b16 %v443, %v441
    %v690 = vpack.c.b16 %v444, %v442
    %v691 = vpack.c.b16 %v447, %v445
    %v692 = vpack.c.b16 %v448, %v446
    %v693 = vpack.c.b16 %v451, %v449
    %v694 = vpack.c.b16 %v452, %v450
    %v695 = vpack.c.b16 %v455, %v453
    %v696 = vpack.c.b16 %v456, %v454
    %v697 = vpack.c.b16 %v459, %v457
    %v698 = vpack.c.b16 %v460, %v458
    %v699 = vpack.c.b16 %v463, %v461
    %v700 = vpack.c.b16 %v464, %v462
    %v701 = vpack.c.b16 %v467, %v465
    %v702 = vpack.c.b16 %v468, %v466
    %v703 = vpack.c.b16 %v471, %v469
    %v704 = vpack.c.b16 %v472, %v470
    %v705 = vpack.c.b16 %v475, %v473
    %v706 = vpack.c.b16 %v476, %v474
    %v707 = vpack.c.b16 %v479, %v477
    %v708 = vpack.c.b16 %v480, %v478
    %v709 = vpack.c.b16 %v483, %v481
    %v710 = vpack.c.b16 %v484, %v482
    %v711 = vpack.c.b16 %v487, %v485
    %v712 = vpack.c.b16 %v488, %v486
    %v713 = vpack.c.b16 %v491, %v489
    %v714 = vpack.c.b16 %v492, %v490
    %v715 = vpack.c.b16 %v495, %v493
    %v716 = vpack.c.b16 %v496, %v494
    %v717 = vpack.c.b16 %v499, %v497
    %v718 = vpack.c.b16 %v500, %v498
    %v719 = vpack.c.b16 %v503, %v501
    %v720 = vpack.c.b16 %v504, %v502
    %v721 = vpack.c.b16 %v507, %v505
    %v722 = vpack.c.b16 %v508, %v506
    %v723 = vpack.c.b16 %v511, %v509
    %v724 = vpack.c.b16 %v512, %v510
    %v725 = vpack.c.b16 %v515, %v513
    %v726 = vpack.c.b16 %v516, %v514
    %v727 = vpack.c.b16 %v519, %v517
    %v728 = vpack.c.b16 %v520, %v518
    %v729 = vpack.c.b16 %v523, %v521
    %v730 = vpack.c.b16 %v524, %v522
    %v731 = vpack.c.b16 %v527, %v525
    %v732 = vpack.c.b16 %v528, %v526
    %v733 = vpack.c.b16 %v531, %v529
    %v734 = vpack.c.b16 %v532, %v530
    %v735 = vpack.c.b16 %v535, %v533
    %v736 = vpack.c.b16 %v536, %v534
    %v737 = vpack.c.b16 %v539, %v537
    %v738 = vpack.c.b16 %v540, %v538
    %v739 = vpack.c.b16 %v543, %v541
    %v740 = vpack.c.b16 %v544, %v542
    %v741 = vpack.c.b16 %v547, %v545
    %v742 = vpack.c.b16 %v548, %v546
    %v743 = vpack.c.b16 %v551, %v549
    %v744 = vpack.c.b16 %v552, %v550
    %v745 = vpack.c.b16 %v555, %v553
    %v746 = vpack.c.b16 %v556, %v554
    %v747 = vpack.c.b16 %v559, %v557
    %v748 = vpack.c.b16 %v560, %v558
    %v749 = vpack.c.b16 %v563, %v561
    %v750 = vpack.c.b16 %v564, %v562
    %v751 = vpack.c.b16 %v567, %v565
    %v752 = vpack.c.b16 %v568, %v566
    %v753 = vpack.c.b16 %v571, %v569
    %v754 = vpack.c.b16 %v572, %v570
    %v755 = vpack.c.b16 %v575, %v573
    %v756 = vpack.c.b16 %v576, %v574
    %v757 = vpack.c.b16 %v579, %v577
    %v758 = vpack.c.b16 %v580, %v578
    %v759 = vpack.c.b16 %v583, %v581
    %v760 = vpack.c.b16 %v584, %v582
    %v761 = vpack.c.b16 %v587, %v585
    %v762 = vpack.c.b16 %v588, %v586
    %v763 = vpack.c.b16 %v591, %v589
    %v764 = vpack.c.b16 %v592, %v590
    %v765 = vpack.c.b16 %v595, %v593
    %v766 = vpack.c.b16 %v596, %v594
    %v767 = vpack.c.b16 %v599, %v597
    %v768 = vpack.c.b16 %v600, %v598
    %v769 = vpack.c.b16 %v603, %v601
    %v770 = vpack.c.b16 %v604, %v602
    %v771 = vpack.c.b16 %v607, %v605
    %v772 = vpack.c.b16 %v608, %v606
    %v773 = vpack.c.b16 %v611, %v609
    %v774 = vpack.c.b16 %v612, %v610
    %v775 = vpack.c.b16 %v615, %v613
    %v776 = vpack.c.b16 %v616, %v614
    %v777 = vpack.c.b16 %v619, %v617
    %v778 = vpack.c.b16 %v620, %v618
    %v779 = vpack.c.b16 %v623, %v621
    %v780 = vpack.c.b16 %v624, %v622
    %v781 = vpack.c.b16 %v627, %v625
    %v782 = vpack.c.b16 %v628, %v626
    %v783 = vpack.c.b16 %v631, %v629
    %v784 = vpack.c.b16 %v632, %v630
    %v785 = vpack.c.b16 %v635, %v633
    %v786 = vpack.c.b16 %v636, %v634
    %v787 = vpack.c.b16 %v639, %v637
    %v788 = vpack.c.b16 %v640, %v638
    %v789 = vpack.c.b16 %v643, %v641
    %v790 = vpack.c.b16 %v644, %v642
    %v791 = vpack.c.b16 %v647, %v645
    %v792 = vpack.c.b16 %v648, %v646
    %v793 = vpack.c.b16 %v651, %v649
    %v794 = vpack.c.b16 %v652, %v650
    %v795 = vpack.c.b16 %v655, %v653
    %v796 = vpack.c.b16 %v656, %v654
    %v797 = vpack.c.b16 %v659, %v657
    %v798 = vpack.c.b16 %v660, %v658
    %v799 = vpack.c.b16 %v663, %v661
    %v800 = vpack.c.b16 %v664, %v662
    %v801 = vpack.c.b16 %v667, %v665
    %v802 = vpack.c.b16 %v668, %v666
    %v803 = vpack.c.b16 %v671, %v669
    %v804 = vpack.c.b16 %v672, %v670
    %v805 = vpack.c.b16 %v675, %v673
    %v806 = vpack.c.b16 %v676, %v674
    %v807 = vpack.c.b16 %v679, %v677
    %v808 = vpack.c.b16 %v680, %v678
    %v938 = vlaneseq
    %v939 = vshrl.u32 %v938, 7
    %v940 = vsub.s32 0, %v939
    %v941 = vrot.slane %v238, %v940
    %v942 = vlaneseq
    %v943 = vshrl.u32 %v942, 7
    %v944 = vsub.s32 1, %v943
    %v945 = vrot.slane %v238, %v944
    %948 = vmatprep.subr.bf16.mxu0 %v696
    %949 = vmatpush1.bf16.msra.mxu0 %v695
    %950 = vmatprep.subr.bf16.mxu0 %v694
    %951 = vmatpush1.bf16.msra.mxu0 %v693
    %952 = vmatprep.subr.bf16.mxu0 %v692
    %953 = vmatpush1.bf16.msra.mxu0 %v691
    %954 = vmatprep.subr.bf16.mxu0 %v690
    %955 = vmatpush1.bf16.msra.mxu0 %v689
    %956 = vmatprep.subr.bf16.mxu0 %v688
    %957 = vmatpush1.bf16.msra.mxu0 %v687
    %958 = vmatprep.subr.bf16.mxu0 %v686
    %959 = vmatpush1.bf16.msra.mxu0 %v685
    %960 = vmatprep.subr.bf16.mxu0 %v684
    %961 = vmatpush1.bf16.msra.mxu0 %v683
    %962 = vmatprep.subr.bf16.mxu0 %v682
    %963 = vmatpush1.bf16.msra.mxu0 %v681
    %964 = vmatprep.subr.bf16.mxu0 %v712
    %965 = vmatpush2.bf16.msra.mxu0 %v711
    %966 = vmatprep.subr.bf16.mxu0 %v710
    %967 = vmatpush2.bf16.msra.mxu0 %v709
    %968 = vmatprep.subr.bf16.mxu0 %v708
    %969 = vmatpush2.bf16.msra.mxu0 %v707
    %970 = vmatprep.subr.bf16.mxu0 %v706
    %971 = vmatpush2.bf16.msra.mxu0 %v705
    %972 = vmatprep.subr.bf16.mxu0 %v704
    %973 = vmatpush2.bf16.msra.mxu0 %v703
    %974 = vmatprep.subr.bf16.mxu0 %v702
    %975 = vmatpush2.bf16.msra.mxu0 %v701
    %976 = vmatprep.subr.bf16.mxu0 %v700
    %977 = vmatpush2.bf16.msra.mxu0 %v699
    %978 = vmatprep.subr.bf16.mxu0 %v698
    %979 = vmatpush2.bf16.msra.mxu0 %v697
    %980 = vmatprep.mubr.bf16.mxu0 %v277
    %981 = vmatmul.mubr.bf16.gmra.mxu0 %v263
    %v982 = vpop.f32.mrf.mxu0
    %v983 = vadd.f32 %v941, %v982
    %v984 = vpop.f32.mrf.mxu0
    %v985 = vadd.f32 %v945, %v984
    %v986 = vpop.f32.mrf.mxu0
    %v987 = vpop.f32.mrf.mxu0
    %988 = vdwg.mxu0
    %989 = vmatprep.subr.bf16.mxu0 %v728
    %990 = vmatpush1.bf16.msra.mxu0 %v727
    %991 = vmatprep.subr.bf16.mxu0 %v726
    %992 = vmatpush1.bf16.msra.mxu0 %v725
    %993 = vmatprep.subr.bf16.mxu0 %v724
    %994 = vmatpush1.bf16.msra.mxu0 %v723
    %995 = vmatprep.subr.bf16.mxu0 %v722
    %996 = vmatpush1.bf16.msra.mxu0 %v721
    %997 = vmatprep.subr.bf16.mxu0 %v720
    %998 = vmatpush1.bf16.msra.mxu0 %v719
    %999 = vmatprep.subr.bf16.mxu0 %v718
    %1000 = vmatpush1.bf16.msra.mxu0 %v717
    %1001 = vmatprep.subr.bf16.mxu0 %v716
    %1002 = vmatpush1.bf16.msra.mxu0 %v715
    %1003 = vmatprep.subr.bf16.mxu0 %v714
    %1004 = vmatpush1.bf16.msra.mxu0 %v713
    %1005 = vmatprep.subr.bf16.mxu0 %v744
    %1006 = vmatpush2.bf16.msra.mxu0 %v743
    %1007 = vmatprep.subr.bf16.mxu0 %v742
    %1008 = vmatpush2.bf16.msra.mxu0 %v741
    %1009 = vmatprep.subr.bf16.mxu0 %v740
    %1010 = vmatpush2.bf16.msra.mxu0 %v739
    %1011 = vmatprep.subr.bf16.mxu0 %v738
    %1012 = vmatpush2.bf16.msra.mxu0 %v737
    %1013 = vmatprep.subr.bf16.mxu0 %v736
    %1014 = vmatpush2.bf16.msra.mxu0 %v735
    %1015 = vmatprep.subr.bf16.mxu0 %v734
    %1016 = vmatpush2.bf16.msra.mxu0 %v733
    %1017 = vmatprep.subr.bf16.mxu0 %v732
    %1018 = vmatpush2.bf16.msra.mxu0 %v731
    %1019 = vmatprep.subr.bf16.mxu0 %v730
    %1020 = vmatpush2.bf16.msra.mxu0 %v729
    %1021 = vmatprep.mubr.bf16.mxu0 %v287
    %1022 = vmatmul.mubr.bf16.gmra.mxu0 %v285
    %v1023 = vpop.f32.mrf.mxu0
    %v1024 = vadd.f32 %v983, %v1023
    %v1025 = vpop.f32.mrf.mxu0
    %v1026 = vadd.f32 %v985, %v1025
    %v1027 = vpop.f32.mrf.mxu0
    %v1028 = vpop.f32.mrf.mxu0
    %1029 = vdwg.mxu0
    %1030 = vmatprep.subr.bf16.mxu0 %v760
    %1031 = vmatpush1.bf16.msra.mxu0 %v759
    %1032 = vmatprep.subr.bf16.mxu0 %v758
    %1033 = vmatpush1.bf16.msra.mxu0 %v757
    %1034 = vmatprep.subr.bf16.mxu0 %v756
    %1035 = vmatpush1.bf16.msra.mxu0 %v755
    %1036 = vmatprep.subr.bf16.mxu0 %v754
    %1037 = vmatpush1.bf16.msra.mxu0 %v753
    %1038 = vmatprep.subr.bf16.mxu0 %v752
    %1039 = vmatpush1.bf16.msra.mxu0 %v751
    %1040 = vmatprep.subr.bf16.mxu0 %v750
    %1041 = vmatpush1.bf16.msra.mxu0 %v749
    %1042 = vmatprep.subr.bf16.mxu0 %v748
    %1043 = vmatpush1.bf16.msra.mxu0 %v747
    %1044 = vmatprep.subr.bf16.mxu0 %v746
    %1045 = vmatpush1.bf16.msra.mxu0 %v745
    %1046 = vmatprep.subr.bf16.mxu0 %v776
    %1047 = vmatpush2.bf16.msra.mxu0 %v775
    %1048 = vmatprep.subr.bf16.mxu0 %v774
    %1049 = vmatpush2.bf16.msra.mxu0 %v773
    %1050 = vmatprep.subr.bf16.mxu0 %v772
    %1051 = vmatpush2.bf16.msra.mxu0 %v771
    %1052 = vmatprep.subr.bf16.mxu0 %v770
    %1053 = vmatpush2.bf16.msra.mxu0 %v769
    %1054 = vmatprep.subr.bf16.mxu0 %v768
    %1055 = vmatpush2.bf16.msra.mxu0 %v767
    %1056 = vmatprep.subr.bf16.mxu0 %v766
    %1057 = vmatpush2.bf16.msra.mxu0 %v765
    %1058 = vmatprep.subr.bf16.mxu0 %v764
    %1059 = vmatpush2.bf16.msra.mxu0 %v763
    %1060 = vmatprep.subr.bf16.mxu0 %v762
    %1061 = vmatpush2.bf16.msra.mxu0 %v761
    %1062 = vmatprep.mubr.bf16.mxu0 %v284
    %1063 = vmatmul.mubr.bf16.gmra.mxu0 %v270
    %v1064 = vpop.f32.mrf.mxu0
    %v1065 = vadd.f32 %v1024, %v1064
    %v1066 = vpop.f32.mrf.mxu0
    %v1067 = vadd.f32 %v1026, %v1066
    %v1068 = vpop.f32.mrf.mxu0
    %v1069 = vpop.f32.mrf.mxu0
    %1070 = vdwg.mxu0
    %1071 = vmatprep.subr.bf16.mxu0 %v792
    %1072 = vmatpush1.bf16.msra.mxu0 %v791
    %1073 = vmatprep.subr.bf16.mxu0 %v790
    %1074 = vmatpush1.bf16.msra.mxu0 %v789
    %1075 = vmatprep.subr.bf16.mxu0 %v788
    %1076 = vmatpush1.bf16.msra.mxu0 %v787
    %1077 = vmatprep.subr.bf16.mxu0 %v786
    %1078 = vmatpush1.bf16.msra.mxu0 %v785
    %1079 = vmatprep.subr.bf16.mxu0 %v784
    %1080 = vmatpush1.bf16.msra.mxu0 %v783
    %1081 = vmatprep.subr.bf16.mxu0 %v782
    %1082 = vmatpush1.bf16.msra.mxu0 %v781
    %1083 = vmatprep.subr.bf16.mxu0 %v780
    %1084 = vmatpush1.bf16.msra.mxu0 %v779
    %1085 = vmatprep.subr.bf16.mxu0 %v778
    %1086 = vmatpush1.bf16.msra.mxu0 %v777
    %1087 = vmatprep.subr.bf16.mxu0 %v808
    %1088 = vmatpush2.bf16.msra.mxu0 %v807
    %1089 = vmatprep.subr.bf16.mxu0 %v806
    %1090 = vmatpush2.bf16.msra.mxu0 %v805
    %1091 = vmatprep.subr.bf16.mxu0 %v804
    %1092 = vmatpush2.bf16.msra.mxu0 %v803
    %1093 = vmatprep.subr.bf16.mxu0 %v802
    %1094 = vmatpush2.bf16.msra.mxu0 %v801
    %1095 = vmatprep.subr.bf16.mxu0 %v800
    %1096 = vmatpush2.bf16.msra.mxu0 %v799
    %1097 = vmatprep.subr.bf16.mxu0 %v798
    %1098 = vmatpush2.bf16.msra.mxu0 %v797
    %1099 = vmatprep.subr.bf16.mxu0 %v796
    %1100 = vmatpush2.bf16.msra.mxu0 %v795
    %1101 = vmatprep.subr.bf16.mxu0 %v794
    %1102 = vmatpush2.bf16.msra.mxu0 %v793
    %1103 = vmatprep.mubr.bf16.mxu0 %v288
    %1104 = vmatmul.mubr.bf16.gmra.mxu0 %v286
    %v1105 = vpop.f32.mrf.mxu0
    %v1106 = vadd.f32 %v1065, %v1105
    %v1107 = vpop.f32.mrf.mxu0
    %v1108 = vadd.f32 %v1067, %v1107
    %v1109 = vpop.f32.mrf.mxu0
    %v1110 = vpop.f32.mrf.mxu0
    %1111 = vdwg.mxu0
    %v1112 = vmax.f32 %v1106, 0.0
    %v1113 = vmax.f32 %v1108, 0.0
    %v1114 = vlaneseq
    %v1115 = vand.u32 %v1114, 127
    %v1116 = vadd.s32 %v1115, 128
    %v1117 = vadd.s32 %v1115, 256
    %v1118 = vadd.s32 %v1115, 384
    %v1119 = vpack.c.bf16 0.0, 0.0
    %v1120 = vpack.c.bf16 %v1112, %v1112
    %v1121 = vpack.c.bf16 %v1113, %v1113
    %v1122 = vld [vmem:[#allocation7] sm:$0xff]
    %v1123 = vld [vmem:[#allocation7 + $0x8] sm:$0xff]
    %v1124 = vld [vmem:[#allocation7 + $0x10] sm:$0xff]
    %v1125 = vld [vmem:[#allocation7 + $0x18] sm:$0xff]
    %v1126 = vld [vmem:[#allocation7 + $0x20] sm:$0xff]
    %v1127 = vld [vmem:[#allocation7 + $0x28] sm:$0xff]
    %v1128 = vld [vmem:[#allocation7 + $0x30] sm:$0xff]
    %v1129 = vld [vmem:[#allocation7 + $0x38] sm:$0xff]
    %v1130 = vld [vmem:[#allocation7 + $0x40] sm:$0xff]
    %v1131 = vld [vmem:[#allocation7 + $0x48] sm:$0xff]
    %v1132 = vld [vmem:[#allocation7 + $0x50] sm:$0xff]
    %v1133 = vld [vmem:[#allocation7 + $0x58] sm:$0xff]
    %v1134 = vld [vmem:[#allocation7 + $0x60] sm:$0xff]
    %v1135 = vld [vmem:[#allocation7 + $0x68] sm:$0xff]
    %v1136 = vld [vmem:[#allocation7 + $0x70] sm:$0xff]
    %v1137 = vld [vmem:[#allocation7 + $0x78] sm:$0xff]
    %v1138 = vld [vmem:[#allocation7 + $0x80] sm:$0xff]
    %v1139 = vld [vmem:[#allocation7 + $0x88] sm:$0xff]
    %v1140 = vld [vmem:[#allocation7 + $0x90] sm:$0xff]
    %v1141 = vld [vmem:[#allocation7 + $0x98] sm:$0xff]
    %v1142 = vld [vmem:[#allocation7 + $0xa0] sm:$0xff]
    %v1143 = vld [vmem:[#allocation7 + $0xa8] sm:$0xff]
    %v1144 = vld [vmem:[#allocation7 + $0xb0] sm:$0xff]
    %v1145 = vld [vmem:[#allocation7 + $0xb8] sm:$0xff]
    %v1146 = vld [vmem:[#allocation7 + $0xc0] sm:$0xff]
    %v1147 = vld [vmem:[#allocation7 + $0xc8] sm:$0xff]
    %v1148 = vld [vmem:[#allocation7 + $0xd0] sm:$0xff]
    %v1149 = vld [vmem:[#allocation7 + $0xd8] sm:$0xff]
    %v1150 = vld [vmem:[#allocation7 + $0xe0] sm:$0xff]
    %v1151 = vld [vmem:[#allocation7 + $0xe8] sm:$0xff]
    %v1152 = vld [vmem:[#allocation7 + $0xf0] sm:$0xff]
    %v1153 = vld [vmem:[#allocation7 + $0xf8] sm:$0xff]
    %v1154 = vld [vmem:[#allocation7 + $0x100] sm:$0xff]
    %v1155 = vld [vmem:[#allocation7 + $0x108] sm:$0xff]
    %v1156 = vld [vmem:[#allocation7 + $0x110] sm:$0xff]
    %v1157 = vld [vmem:[#allocation7 + $0x118] sm:$0xff]
    %v1158 = vld [vmem:[#allocation7 + $0x120] sm:$0xff]
    %v1159 = vld [vmem:[#allocation7 + $0x128] sm:$0xff]
    %v1160 = vld [vmem:[#allocation7 + $0x130] sm:$0xff]
    %v1161 = vld [vmem:[#allocation7 + $0x138] sm:$0xff]
    %v1162 = vld [vmem:[#allocation7 + $0x140] sm:$0xff]
    %v1163 = vld [vmem:[#allocation7 + $0x148] sm:$0xff]
    %v1164 = vld [vmem:[#allocation7 + $0x150] sm:$0xff]
    %v1165 = vld [vmem:[#allocation7 + $0x158] sm:$0xff]
    %v1166 = vld [vmem:[#allocation7 + $0x160] sm:$0xff]
    %v1167 = vld [vmem:[#allocation7 + $0x168] sm:$0xff]
    %v1168 = vld [vmem:[#allocation7 + $0x170] sm:$0xff]
    %v1169 = vld [vmem:[#allocation7 + $0x178] sm:$0xff]
    %v1170 = vld [vmem:[#allocation8] sm:$0x3]
    %v1219 = vunpack.c.l.b16 %v1122
    %v1220 = vunpack.c.h.b16 %v1122
    %v1221 = vunpack.c.l.b16 %v1123
    %v1222 = vunpack.c.h.b16 %v1123
    %v1223 = vunpack.c.l.b16 %v1124
    %v1224 = vunpack.c.h.b16 %v1124
    %v1225 = vunpack.c.l.b16 %v1125
    %v1226 = vunpack.c.h.b16 %v1125
    %v1227 = vunpack.c.l.b16 %v1126
    %v1228 = vunpack.c.h.b16 %v1126
    %v1229 = vunpack.c.l.b16 %v1127
    %v1230 = vunpack.c.h.b16 %v1127
    %v1231 = vunpack.c.l.b16 %v1128
    %v1232 = vunpack.c.h.b16 %v1128
    %v1233 = vunpack.c.l.b16 %v1129
    %v1234 = vunpack.c.h.b16 %v1129
    %v1235 = vunpack.c.l.b16 %v1130
    %v1236 = vunpack.c.h.b16 %v1130
    %v1237 = vunpack.c.l.b16 %v1131
    %v1238 = vunpack.c.h.b16 %v1131
    %v1239 = vunpack.c.l.b16 %v1132
    %v1240 = vunpack.c.h.b16 %v1132
    %v1241 = vunpack.c.l.b16 %v1133
    %v1242 = vunpack.c.h.b16 %v1133
    %v1243 = vunpack.c.l.b16 %v1134
    %v1244 = vunpack.c.h.b16 %v1134
    %v1245 = vunpack.c.l.b16 %v1135
    %v1246 = vunpack.c.h.b16 %v1135
    %v1247 = vunpack.c.l.b16 %v1136
    %v1248 = vunpack.c.h.b16 %v1136
    %v1249 = vunpack.c.l.b16 %v1137
    %v1250 = vunpack.c.h.b16 %v1137
    %v1251 = vunpack.c.l.b16 %v1138
    %v1252 = vunpack.c.h.b16 %v1138
    %v1253 = vunpack.c.l.b16 %v1139
    %v1254 = vunpack.c.h.b16 %v1139
    %v1255 = vunpack.c.l.b16 %v1140
    %v1256 = vunpack.c.h.b16 %v1140
    %v1257 = vunpack.c.l.b16 %v1141
    %v1258 = vunpack.c.h.b16 %v1141
    %v1259 = vunpack.c.l.b16 %v1142
    %v1260 = vunpack.c.h.b16 %v1142
    %v1261 = vunpack.c.l.b16 %v1143
    %v1262 = vunpack.c.h.b16 %v1143
    %v1263 = vunpack.c.l.b16 %v1144
    %v1264 = vunpack.c.h.b16 %v1144
    %v1265 = vunpack.c.l.b16 %v1145
    %v1266 = vunpack.c.h.b16 %v1145
    %v1267 = vunpack.c.l.b16 %v1146
    %v1268 = vunpack.c.h.b16 %v1146
    %v1269 = vunpack.c.l.b16 %v1147
    %v1270 = vunpack.c.h.b16 %v1147
    %v1271 = vunpack.c.l.b16 %v1148
    %v1272 = vunpack.c.h.b16 %v1148
    %v1273 = vunpack.c.l.b16 %v1149
    %v1274 = vunpack.c.h.b16 %v1149
    %v1275 = vunpack.c.l.b16 %v1150
    %v1276 = vunpack.c.h.b16 %v1150
    %v1277 = vunpack.c.l.b16 %v1151
    %v1278 = vunpack.c.h.b16 %v1151
    %v1279 = vunpack.c.l.b16 %v1152
    %v1280 = vunpack.c.h.b16 %v1152
    %v1281 = vunpack.c.l.b16 %v1153
    %v1282 = vunpack.c.h.b16 %v1153
    %v1283 = vunpack.c.l.b16 %v1154
    %v1284 = vunpack.c.h.b16 %v1154
    %v1285 = vunpack.c.l.b16 %v1155
    %v1286 = vunpack.c.h.b16 %v1155
    %v1287 = vunpack.c.l.b16 %v1156
    %v1288 = vunpack.c.h.b16 %v1156
    %v1289 = vunpack.c.l.b16 %v1157
    %v1290 = vunpack.c.h.b16 %v1157
    %v1291 = vunpack.c.l.b16 %v1158
    %v1292 = vunpack.c.h.b16 %v1158
    %v1293 = vunpack.c.l.b16 %v1159
    %v1294 = vunpack.c.h.b16 %v1159
    %v1295 = vunpack.c.l.b16 %v1160
    %v1296 = vunpack.c.h.b16 %v1160
    %v1297 = vunpack.c.l.b16 %v1161
    %v1298 = vunpack.c.h.b16 %v1161
    %v1299 = vunpack.c.l.b16 %v1162
    %v1300 = vunpack.c.h.b16 %v1162
    %v1301 = vunpack.c.l.b16 %v1163
    %v1302 = vunpack.c.h.b16 %v1163
    %v1303 = vunpack.c.l.b16 %v1164
    %v1304 = vunpack.c.h.b16 %v1164
    %v1305 = vunpack.c.l.b16 %v1165
    %v1306 = vunpack.c.h.b16 %v1165
    %v1307 = vunpack.c.l.b16 %v1166
    %v1308 = vunpack.c.h.b16 %v1166
    %v1309 = vunpack.c.l.b16 %v1167
    %v1310 = vunpack.c.h.b16 %v1167
    %v1311 = vunpack.c.l.b16 %v1168
    %v1312 = vunpack.c.h.b16 %v1168
    %v1313 = vunpack.c.l.b16 %v1169
    %v1314 = vunpack.c.h.b16 %v1169
    %v1315 = vpack.c.b16 %v1221, %v1219
    %v1316 = vpack.c.b16 %v1222, %v1220
    %v1317 = vpack.c.b16 %v1225, %v1223
    %v1318 = vpack.c.b16 %v1226, %v1224
    %v1319 = vpack.c.b16 %v1229, %v1227
    %v1320 = vpack.c.b16 %v1230, %v1228
    %v1321 = vpack.c.b16 %v1233, %v1231
    %v1322 = vpack.c.b16 %v1234, %v1232
    %v1323 = vpack.c.b16 %v1237, %v1235
    %v1324 = vpack.c.b16 %v1238, %v1236
    %v1325 = vpack.c.b16 %v1241, %v1239
    %v1326 = vpack.c.b16 %v1242, %v1240
    %v1327 = vpack.c.b16 %v1245, %v1243
    %v1328 = vpack.c.b16 %v1246, %v1244
    %v1329 = vpack.c.b16 %v1249, %v1247
    %v1330 = vpack.c.b16 %v1250, %v1248
    %v1331 = vpack.c.b16 %v1253, %v1251
    %v1332 = vpack.c.b16 %v1254, %v1252
    %v1333 = vpack.c.b16 %v1257, %v1255
    %v1334 = vpack.c.b16 %v1258, %v1256
    %v1335 = vpack.c.b16 %v1261, %v1259
    %v1336 = vpack.c.b16 %v1262, %v1260
    %v1337 = vpack.c.b16 %v1265, %v1263
    %v1338 = vpack.c.b16 %v1266, %v1264
    %v1339 = vpack.c.b16 %v1269, %v1267
    %v1340 = vpack.c.b16 %v1270, %v1268
    %v1341 = vpack.c.b16 %v1273, %v1271
    %v1342 = vpack.c.b16 %v1274, %v1272
    %v1343 = vpack.c.b16 %v1277, %v1275
    %v1344 = vpack.c.b16 %v1278, %v1276
    %v1345 = vpack.c.b16 %v1281, %v1279
    %v1346 = vpack.c.b16 %v1282, %v1280
    %v1347 = vpack.c.b16 %v1285, %v1283
    %v1348 = vpack.c.b16 %v1286, %v1284
    %v1349 = vpack.c.b16 %v1289, %v1287
    %v1350 = vpack.c.b16 %v1290, %v1288
    %v1351 = vpack.c.b16 %v1293, %v1291
    %v1352 = vpack.c.b16 %v1294, %v1292
    %v1353 = vpack.c.b16 %v1297, %v1295
    %v1354 = vpack.c.b16 %v1298, %v1296
    %v1355 = vpack.c.b16 %v1301, %v1299
    %v1356 = vpack.c.b16 %v1302, %v1300
    %v1357 = vpack.c.b16 %v1305, %v1303
    %v1358 = vpack.c.b16 %v1306, %v1304
    %v1359 = vpack.c.b16 %v1309, %v1307
    %v1360 = vpack.c.b16 %v1310, %v1308
    %v1361 = vpack.c.b16 %v1313, %v1311
    %v1362 = vpack.c.b16 %v1314, %v1312
    %v1412 = vlaneseq
    %v1413 = vshrl.u32 %v1412, 7
    %v1414 = vsub.s32 0, %v1413
    %v1415 = vrot.slane %v1170, %v1414
    %v1416 = vlaneseq
    %v1417 = vshrl.u32 %v1416, 7
    %v1418 = vsub.s32 1, %v1417
    %v1419 = vrot.slane %v1170, %v1418
    %1422 = vmatprep.subr.bf16.mxu0 %v1330
    %1423 = vmatpush1.bf16.msra.mxu0 %v1329
    %1424 = vmatprep.subr.bf16.mxu0 %v1328
    %1425 = vmatpush1.bf16.msra.mxu0 %v1327
    %1426 = vmatprep.subr.bf16.mxu0 %v1326
    %1427 = vmatpush1.bf16.msra.mxu0 %v1325
    %1428 = vmatprep.subr.bf16.mxu0 %v1324
    %1429 = vmatpush1.bf16.msra.mxu0 %v1323
    %1430 = vmatprep.subr.bf16.mxu0 %v1322
    %1431 = vmatpush1.bf16.msra.mxu0 %v1321
    %1432 = vmatprep.subr.bf16.mxu0 %v1320
    %1433 = vmatpush1.bf16.msra.mxu0 %v1319
    %1434 = vmatprep.subr.bf16.mxu0 %v1318
    %1435 = vmatpush1.bf16.msra.mxu0 %v1317
    %1436 = vmatprep.subr.bf16.mxu0 %v1316
    %1437 = vmatpush1.bf16.msra.mxu0 %v1315
    %1438 = vmatprep.subr.bf16.mxu0 %v1346
    %1439 = vmatpush2.bf16.msra.mxu0 %v1345
    %1440 = vmatprep.subr.bf16.mxu0 %v1344
    %1441 = vmatpush2.bf16.msra.mxu0 %v1343
    %1442 = vmatprep.subr.bf16.mxu0 %v1342
    %1443 = vmatpush2.bf16.msra.mxu0 %v1341
    %1444 = vmatprep.subr.bf16.mxu0 %v1340
    %1445 = vmatpush2.bf16.msra.mxu0 %v1339
    %1446 = vmatprep.subr.bf16.mxu0 %v1338
    %1447 = vmatpush2.bf16.msra.mxu0 %v1337
    %1448 = vmatprep.subr.bf16.mxu0 %v1336
    %1449 = vmatpush2.bf16.msra.mxu0 %v1335
    %1450 = vmatprep.subr.bf16.mxu0 %v1334
    %1451 = vmatpush2.bf16.msra.mxu0 %v1333
    %1452 = vmatprep.subr.bf16.mxu0 %v1332
    %1453 = vmatpush2.bf16.msra.mxu0 %v1331
    %1454 = vmatprep.mubr.bf16.mxu0 %v1120
    %1455 = vmatmul.mubr.bf16.gmra.mxu0 %v1119
    %v1456 = vpop.f32.mrf.mxu0
    %v1457 = vadd.f32 %v1415, %v1456
    %v1458 = vpop.f32.mrf.mxu0
    %v1459 = vadd.f32 %v1419, %v1458
    %v1460 = vpop.f32.mrf.mxu0
    %v1461 = vpop.f32.mrf.mxu0
    %1462 = vdwg.mxu0
    %1463 = vmatprep.subr.bf16.mxu0 %v1362
    %1464 = vmatpush1.bf16.msra.mxu0 %v1361
    %1465 = vmatprep.subr.bf16.mxu0 %v1360
    %1466 = vmatpush1.bf16.msra.mxu0 %v1359
    %1467 = vmatprep.subr.bf16.mxu0 %v1358
    %1468 = vmatpush1.bf16.msra.mxu0 %v1357
    %1469 = vmatprep.subr.bf16.mxu0 %v1356
    %1470 = vmatpush1.bf16.msra.mxu0 %v1355
    %1471 = vmatprep.subr.bf16.mxu0 %v1354
    %1472 = vmatpush1.bf16.msra.mxu0 %v1353
    %1473 = vmatprep.subr.bf16.mxu0 %v1352
    %1474 = vmatpush1.bf16.msra.mxu0 %v1351
    %1475 = vmatprep.subr.bf16.mxu0 %v1350
    %1476 = vmatpush1.bf16.msra.mxu0 %v1349
    %1477 = vmatprep.subr.bf16.mxu0 %v1348
    %1478 = vmatpush1.bf16.msra.mxu0 %v1347
    %1479 = vmatprep.subr.bf16.mxu0 0
    %1480 = vmatpush2.bf16.msra.mxu0 0
    %1481 = vmatprep.subr.bf16.mxu0 0
    %1482 = vmatpush2.bf16.msra.mxu0 0
    %1483 = vmatprep.subr.bf16.mxu0 0
    %1484 = vmatpush2.bf16.msra.mxu0 0
    %1485 = vmatprep.subr.bf16.mxu0 0
    %1486 = vmatpush2.bf16.msra.mxu0 0
    %1487 = vmatprep.subr.bf16.mxu0 0
    %1488 = vmatpush2.bf16.msra.mxu0 0
    %1489 = vmatprep.subr.bf16.mxu0 0
    %1490 = vmatpush2.bf16.msra.mxu0 0
    %1491 = vmatprep.subr.bf16.mxu0 0
    %1492 = vmatpush2.bf16.msra.mxu0 0
    %1493 = vmatprep.subr.bf16.mxu0 0
    %1494 = vmatpush2.bf16.msra.mxu0 0
    %1495 = vmatprep.mubr.bf16.mxu0 0
    %1496 = vmatmul.mubr.bf16.gmra.mxu0 %v1121
    %v1497 = vpop.f32.mrf.mxu0
    %v1498 = vadd.f32 %v1457, %v1497
    %v1499 = vpop.f32.mrf.mxu0
    %v1500 = vadd.f32 %v1459, %v1499
    %v1501 = vpop.f32.mrf.mxu0
    %v1502 = vpop.f32.mrf.mxu0
    %1503 = vdwg.mxu0
    %v1504 = vmax.f32 %v1498, 0.0
    %v1505 = vmax.f32 %v1500, 0.0
    %v1506 = vpack.c.bf16 %v1504, %v1504
    %v1507 = vpack.c.bf16 %v1505, %v1505
    %v1508 = vld [vmem:[#allocation10] sm:$0xff]
    %v1509 = vld [vmem:[#allocation10 + $0x8] sm:$0xff]
    %v1510 = vld [vmem:[#allocation10 + $0x10] sm:$0xff]
    %v1511 = vld [vmem:[#allocation10 + $0x18] sm:$0xff]
    %v1512 = vld [vmem:[#allocation10 + $0x20] sm:$0xff]
    %v1513 = vld [vmem:[#allocation10 + $0x28] sm:$0xff]
    %v1514 = vld [vmem:[#allocation10 + $0x30] sm:$0xff]
    %v1515 = vld [vmem:[#allocation10 + $0x38] sm:$0xff]
    %v1516 = vld [vmem:[#allocation10 + $0x40] sm:$0xff]
    %v1517 = vld [vmem:[#allocation10 + $0x48] sm:$0xff]
    %v1518 = vld [vmem:[#allocation10 + $0x50] sm:$0xff]
    %v1519 = vld [vmem:[#allocation10 + $0x58] sm:$0xff]
    %v1520 = vld [vmem:[#allocation10 + $0x60] sm:$0xff]
    %v1521 = vld [vmem:[#allocation10 + $0x68] sm:$0xff]
    %v1522 = vld [vmem:[#allocation10 + $0x70] sm:$0xff]
    %v1523 = vld [vmem:[#allocation10 + $0x78] sm:$0xff]
    %v1524 = vld [vmem:[#allocation10 + $0x80] sm:$0xff]
    %v1525 = vld [vmem:[#allocation10 + $0x88] sm:$0xff]
    %v1526 = vld [vmem:[#allocation10 + $0x90] sm:$0xff]
    %v1527 = vld [vmem:[#allocation10 + $0x98] sm:$0xff]
    %v1528 = vld [vmem:[#allocation10 + $0xa0] sm:$0xff]
    %v1529 = vld [vmem:[#allocation10 + $0xa8] sm:$0xff]
    %v1530 = vld [vmem:[#allocation10 + $0xb0] sm:$0xff]
    %v1531 = vld [vmem:[#allocation10 + $0xb8] sm:$0xff]
    %v1532 = vld [vmem:[#allocation10 + $0xc0] sm:$0xff]
    %v1533 = vld [vmem:[#allocation10 + $0xc8] sm:$0xff]
    %v1534 = vld [vmem:[#allocation10 + $0xd0] sm:$0xff]
    %v1535 = vld [vmem:[#allocation10 + $0xd8] sm:$0xff]
    %v1536 = vld [vmem:[#allocation10 + $0xe0] sm:$0xff]
    %v1537 = vld [vmem:[#allocation10 + $0xe8] sm:$0xff]
    %v1538 = vld [vmem:[#allocation10 + $0xf0] sm:$0xff]
    %v1539 = vld [vmem:[#allocation10 + $0xf8] sm:$0xff]
    %v1540 = vld [vmem:[#allocation10 + $0x100] sm:$0xff]
    %v1541 = vld [vmem:[#allocation10 + $0x108] sm:$0xff]
    %v1542 = vld [vmem:[#allocation10 + $0x110] sm:$0xff]
    %v1543 = vld [vmem:[#allocation10 + $0x118] sm:$0xff]
    %v1544 = vld [vmem:[#allocation10 + $0x120] sm:$0xff]
    %v1545 = vld [vmem:[#allocation10 + $0x128] sm:$0xff]
    %v1546 = vld [vmem:[#allocation10 + $0x130] sm:$0xff]
    %v1547 = vld [vmem:[#allocation10 + $0x138] sm:$0xff]
    %v1548 = vld [vmem:[#allocation10 + $0x140] sm:$0xff]
    %v1549 = vld [vmem:[#allocation10 + $0x148] sm:$0xff]
    %v1550 = vld [vmem:[#allocation10 + $0x150] sm:$0xff]
    %v1551 = vld [vmem:[#allocation10 + $0x158] sm:$0xff]
    %v1552 = vld [vmem:[#allocation10 + $0x160] sm:$0xff]
    %v1553 = vld [vmem:[#allocation10 + $0x168] sm:$0xff]
    %v1554 = vld [vmem:[#allocation10 + $0x170] sm:$0xff]
    %v1555 = vld [vmem:[#allocation10 + $0x178] sm:$0xff]
    %v1556 = vld [vmem:[#allocation10 + $0x180] sm:$0xff]
    %v1557 = vld [vmem:[#allocation10 + $0x188] sm:$0xff]
    %v1558 = vld [vmem:[#allocation10 + $0x190] sm:$0xff]
    %v1559 = vld [vmem:[#allocation10 + $0x198] sm:$0xff]
    %v1560 = vld [vmem:[#allocation10 + $0x1a0] sm:$0xff]
    %v1561 = vld [vmem:[#allocation10 + $0x1a8] sm:$0xff]
    %v1562 = vld [vmem:[#allocation10 + $0x1b0] sm:$0xff]
    %v1563 = vld [vmem:[#allocation10 + $0x1b8] sm:$0xff]
    %v1564 = vld [vmem:[#allocation10 + $0x1c0] sm:$0xff]
    %v1565 = vld [vmem:[#allocation10 + $0x1c8] sm:$0xff]
    %v1566 = vld [vmem:[#allocation10 + $0x1d0] sm:$0xff]
    %v1567 = vld [vmem:[#allocation10 + $0x1d8] sm:$0xff]
    %v1568 = vld [vmem:[#allocation10 + $0x1e0] sm:$0xff]
    %v1569 = vld [vmem:[#allocation10 + $0x1e8] sm:$0xff]
    %v1570 = vld [vmem:[#allocation10 + $0x1f0] sm:$0xff]
    %v1571 = vld [vmem:[#allocation10 + $0x1f8] sm:$0xff]
    %v1572 = vld [vmem:[%s6] sm:$0xf]
    %v1637 = vunpack.c.l.b16 %v1508
    %v1638 = vunpack.c.h.b16 %v1508
    %v1639 = vunpack.c.l.b16 %v1509
    %v1640 = vunpack.c.h.b16 %v1509
    %v1641 = vunpack.c.l.b16 %v1510
    %v1642 = vunpack.c.h.b16 %v1510
    %v1643 = vunpack.c.l.b16 %v1511
    %v1644 = vunpack.c.h.b16 %v1511
    %v1645 = vunpack.c.l.b16 %v1512
    %v1646 = vunpack.c.h.b16 %v1512
    %v1647 = vunpack.c.l.b16 %v1513
    %v1648 = vunpack.c.h.b16 %v1513
    %v1649 = vunpack.c.l.b16 %v1514
    %v1650 = vunpack.c.h.b16 %v1514
    %v1651 = vunpack.c.l.b16 %v1515
    %v1652 = vunpack.c.h.b16 %v1515
    %v1653 = vunpack.c.l.b16 %v1516
    %v1654 = vunpack.c.h.b16 %v1516
    %v1655 = vunpack.c.l.b16 %v1517
    %v1656 = vunpack.c.h.b16 %v1517
    %v1657 = vunpack.c.l.b16 %v1518
    %v1658 = vunpack.c.h.b16 %v1518
    %v1659 = vunpack.c.l.b16 %v1519
    %v1660 = vunpack.c.h.b16 %v1519
    %v1661 = vunpack.c.l.b16 %v1520
    %v1662 = vunpack.c.h.b16 %v1520
    %v1663 = vunpack.c.l.b16 %v1521
    %v1664 = vunpack.c.h.b16 %v1521
    %v1665 = vunpack.c.l.b16 %v1522
    %v1666 = vunpack.c.h.b16 %v1522
    %v1667 = vunpack.c.l.b16 %v1523
    %v1668 = vunpack.c.h.b16 %v1523
    %v1669 = vunpack.c.l.b16 %v1524
    %v1670 = vunpack.c.h.b16 %v1524
    %v1671 = vunpack.c.l.b16 %v1525
    %v1672 = vunpack.c.h.b16 %v1525
    %v1673 = vunpack.c.l.b16 %v1526
    %v1674 = vunpack.c.h.b16 %v1526
    %v1675 = vunpack.c.l.b16 %v1527
    %v1676 = vunpack.c.h.b16 %v1527
    %v1677 = vunpack.c.l.b16 %v1528
    %v1678 = vunpack.c.h.b16 %v1528
    %v1679 = vunpack.c.l.b16 %v1529
    %v1680 = vunpack.c.h.b16 %v1529
    %v1681 = vunpack.c.l.b16 %v1530
    %v1682 = vunpack.c.h.b16 %v1530
    %v1683 = vunpack.c.l.b16 %v1531
    %v1684 = vunpack.c.h.b16 %v1531
    %v1685 = vunpack.c.l.b16 %v1532
    %v1686 = vunpack.c.h.b16 %v1532
    %v1687 = vunpack.c.l.b16 %v1533
    %v1688 = vunpack.c.h.b16 %v1533
    %v1689 = vunpack.c.l.b16 %v1534
    %v1690 = vunpack.c.h.b16 %v1534
    %v1691 = vunpack.c.l.b16 %v1535
    %v1692 = vunpack.c.h.b16 %v1535
    %v1693 = vunpack.c.l.b16 %v1536
    %v1694 = vunpack.c.h.b16 %v1536
    %v1695 = vunpack.c.l.b16 %v1537
    %v1696 = vunpack.c.h.b16 %v1537
    %v1697 = vunpack.c.l.b16 %v1538
    %v1698 = vunpack.c.h.b16 %v1538
    %v1699 = vunpack.c.l.b16 %v1539
    %v1700 = vunpack.c.h.b16 %v1539
    %v1701 = vunpack.c.l.b16 %v1540
    %v1702 = vunpack.c.h.b16 %v1540
    %v1703 = vunpack.c.l.b16 %v1541
    %v1704 = vunpack.c.h.b16 %v1541
    %v1705 = vunpack.c.l.b16 %v1542
    %v1706 = vunpack.c.h.b16 %v1542
    %v1707 = vunpack.c.l.b16 %v1543
    %v1708 = vunpack.c.h.b16 %v1543
    %v1709 = vunpack.c.l.b16 %v1544
    %v1710 = vunpack.c.h.b16 %v1544
    %v1711 = vunpack.c.l.b16 %v1545
    %v1712 = vunpack.c.h.b16 %v1545
    %v1713 = vunpack.c.l.b16 %v1546
    %v1714 = vunpack.c.h.b16 %v1546
    %v1715 = vunpack.c.l.b16 %v1547
    %v1716 = vunpack.c.h.b16 %v1547
    %v1717 = vunpack.c.l.b16 %v1548
    %v1718 = vunpack.c.h.b16 %v1548
    %v1719 = vunpack.c.l.b16 %v1549
    %v1720 = vunpack.c.h.b16 %v1549
    %v1721 = vunpack.c.l.b16 %v1550
    %v1722 = vunpack.c.h.b16 %v1550
    %v1723 = vunpack.c.l.b16 %v1551
    %v1724 = vunpack.c.h.b16 %v1551
    %v1725 = vunpack.c.l.b16 %v1552
    %v1726 = vunpack.c.h.b16 %v1552
    %v1727 = vunpack.c.l.b16 %v1553
    %v1728 = vunpack.c.h.b16 %v1553
    %v1729 = vunpack.c.l.b16 %v1554
    %v1730 = vunpack.c.h.b16 %v1554
    %v1731 = vunpack.c.l.b16 %v1555
    %v1732 = vunpack.c.h.b16 %v1555
    %v1733 = vunpack.c.l.b16 %v1556
    %v1734 = vunpack.c.h.b16 %v1556
    %v1735 = vunpack.c.l.b16 %v1557
    %v1736 = vunpack.c.h.b16 %v1557
    %v1737 = vunpack.c.l.b16 %v1558
    %v1738 = vunpack.c.h.b16 %v1558
    %v1739 = vunpack.c.l.b16 %v1559
    %v1740 = vunpack.c.h.b16 %v1559
    %v1741 = vunpack.c.l.b16 %v1560
    %v1742 = vunpack.c.h.b16 %v1560
    %v1743 = vunpack.c.l.b16 %v1561
    %v1744 = vunpack.c.h.b16 %v1561
    %v1745 = vunpack.c.l.b16 %v1562
    %v1746 = vunpack.c.h.b16 %v1562
    %v1747 = vunpack.c.l.b16 %v1563
    %v1748 = vunpack.c.h.b16 %v1563
    %v1749 = vunpack.c.l.b16 %v1564
    %v1750 = vunpack.c.h.b16 %v1564
    %v1751 = vunpack.c.l.b16 %v1565
    %v1752 = vunpack.c.h.b16 %v1565
    %v1753 = vunpack.c.l.b16 %v1566
    %v1754 = vunpack.c.h.b16 %v1566
    %v1755 = vunpack.c.l.b16 %v1567
    %v1756 = vunpack.c.h.b16 %v1567
    %v1757 = vunpack.c.l.b16 %v1568
    %v1758 = vunpack.c.h.b16 %v1568
    %v1759 = vunpack.c.l.b16 %v1569
    %v1760 = vunpack.c.h.b16 %v1569
    %v1761 = vunpack.c.l.b16 %v1570
    %v1762 = vunpack.c.h.b16 %v1570
    %v1763 = vunpack.c.l.b16 %v1571
    %v1764 = vunpack.c.h.b16 %v1571
    %v1765 = vpack.c.b16 %v1641, %v1637
    %v1766 = vpack.c.b16 %v1642, %v1638
    %v1767 = vpack.c.b16 %v1643, %v1639
    %v1768 = vpack.c.b16 %v1644, %v1640
    %v1769 = vpack.c.b16 %v1649, %v1645
    %v1770 = vpack.c.b16 %v1650, %v1646
    %v1771 = vpack.c.b16 %v1651, %v1647
    %v1772 = vpack.c.b16 %v1652, %v1648
    %v1773 = vpack.c.b16 %v1657, %v1653
    %v1774 = vpack.c.b16 %v1658, %v1654
    %v1775 = vpack.c.b16 %v1659, %v1655
    %v1776 = vpack.c.b16 %v1660, %v1656
    %v1777 = vpack.c.b16 %v1665, %v1661
    %v1778 = vpack.c.b16 %v1666, %v1662
    %v1779 = vpack.c.b16 %v1667, %v1663
    %v1780 = vpack.c.b16 %v1668, %v1664
    %v1781 = vpack.c.b16 %v1673, %v1669
    %v1782 = vpack.c.b16 %v1674, %v1670
    %v1783 = vpack.c.b16 %v1675, %v1671
    %v1784 = vpack.c.b16 %v1676, %v1672
    %v1785 = vpack.c.b16 %v1681, %v1677
    %v1786 = vpack.c.b16 %v1682, %v1678
    %v1787 = vpack.c.b16 %v1683, %v1679
    %v1788 = vpack.c.b16 %v1684, %v1680
    %v1789 = vpack.c.b16 %v1689, %v1685
    %v1790 = vpack.c.b16 %v1690, %v1686
    %v1791 = vpack.c.b16 %v1691, %v1687
    %v1792 = vpack.c.b16 %v1692, %v1688
    %v1793 = vpack.c.b16 %v1697, %v1693
    %v1794 = vpack.c.b16 %v1698, %v1694
    %v1795 = vpack.c.b16 %v1699, %v1695
    %v1796 = vpack.c.b16 %v1700, %v1696
    %v1797 = vpack.c.b16 %v1705, %v1701
    %v1798 = vpack.c.b16 %v1706, %v1702
    %v1799 = vpack.c.b16 %v1707, %v1703
    %v1800 = vpack.c.b16 %v1708, %v1704
    %v1801 = vpack.c.b16 %v1713, %v1709
    %v1802 = vpack.c.b16 %v1714, %v1710
    %v1803 = vpack.c.b16 %v1715, %v1711
    %v1804 = vpack.c.b16 %v1716, %v1712
    %v1805 = vpack.c.b16 %v1721, %v1717
    %v1806 = vpack.c.b16 %v1722, %v1718
    %v1807 = vpack.c.b16 %v1723, %v1719
    %v1808 = vpack.c.b16 %v1724, %v1720
    %v1809 = vpack.c.b16 %v1729, %v1725
    %v1810 = vpack.c.b16 %v1730, %v1726
    %v1811 = vpack.c.b16 %v1731, %v1727
    %v1812 = vpack.c.b16 %v1732, %v1728
    %v1813 = vpack.c.b16 %v1737, %v1733
    %v1814 = vpack.c.b16 %v1738, %v1734
    %v1815 = vpack.c.b16 %v1739, %v1735
    %v1816 = vpack.c.b16 %v1740, %v1736
    %v1817 = vpack.c.b16 %v1745, %v1741
    %v1818 = vpack.c.b16 %v1746, %v1742
    %v1819 = vpack.c.b16 %v1747, %v1743
    %v1820 = vpack.c.b16 %v1748, %v1744
    %v1821 = vpack.c.b16 %v1753, %v1749
    %v1822 = vpack.c.b16 %v1754, %v1750
    %v1823 = vpack.c.b16 %v1755, %v1751
    %v1824 = vpack.c.b16 %v1756, %v1752
    %v1825 = vpack.c.b16 %v1761, %v1757
    %v1826 = vpack.c.b16 %v1762, %v1758
    %v1827 = vpack.c.b16 %v1763, %v1759
    %v1828 = vpack.c.b16 %v1764, %v1760
    %v1894 = vlaneseq
    %v1895 = vshrl.u32 %v1894, 7
    %v1896 = vsub.s32 0, %v1895
    %v1897 = vrot.slane %v1572, %v1896
    %v1898 = vlaneseq
    %v1899 = vshrl.u32 %v1898, 7
    %v1900 = vsub.s32 1, %v1899
    %v1901 = vrot.slane %v1572, %v1900
    %v1902 = vlaneseq
    %v1903 = vshrl.u32 %v1902, 7
    %v1904 = vsub.s32 2, %v1903
    %v1905 = vrot.slane %v1572, %v1904
    %v1906 = vlaneseq
    %v1907 = vshrl.u32 %v1906, 7
    %v1908 = vsub.s32 3, %v1907
    %v1909 = vrot.slane %v1572, %v1908
    %1914 = vmatprep.subr.bf16.mxu0 %v1794
    %1915 = vmatpush1.bf16.msra.mxu0 %v1793
    %1916 = vmatprep.subr.bf16.mxu0 %v1790
    %1917 = vmatpush1.bf16.msra.mxu0 %v1789
    %1918 = vmatprep.subr.bf16.mxu0 %v1786
    %1919 = vmatpush1.bf16.msra.mxu0 %v1785
    %1920 = vmatprep.subr.bf16.mxu0 %v1782
    %1921 = vmatpush1.bf16.msra.mxu0 %v1781
    %1922 = vmatprep.subr.bf16.mxu0 %v1778
    %1923 = vmatpush1.bf16.msra.mxu0 %v1777
    %1924 = vmatprep.subr.bf16.mxu0 %v1774
    %1925 = vmatpush1.bf16.msra.mxu0 %v1773
    %1926 = vmatprep.subr.bf16.mxu0 %v1770
    %1927 = vmatpush1.bf16.msra.mxu0 %v1769
    %1928 = vmatprep.subr.bf16.mxu0 %v1766
    %1929 = vmatpush1.bf16.msra.mxu0 %v1765
    %1930 = vmatprep.subr.bf16.mxu0 %v1826
    %1931 = vmatpush2.bf16.msra.mxu0 %v1825
    %1932 = vmatprep.subr.bf16.mxu0 %v1822
    %1933 = vmatpush2.bf16.msra.mxu0 %v1821
    %1934 = vmatprep.subr.bf16.mxu0 %v1818
    %1935 = vmatpush2.bf16.msra.mxu0 %v1817
    %1936 = vmatprep.subr.bf16.mxu0 %v1814
    %1937 = vmatpush2.bf16.msra.mxu0 %v1813
    %1938 = vmatprep.subr.bf16.mxu0 %v1810
    %1939 = vmatpush2.bf16.msra.mxu0 %v1809
    %1940 = vmatprep.subr.bf16.mxu0 %v1806
    %1941 = vmatpush2.bf16.msra.mxu0 %v1805
    %1942 = vmatprep.subr.bf16.mxu0 %v1802
    %1943 = vmatpush2.bf16.msra.mxu0 %v1801
    %1944 = vmatprep.subr.bf16.mxu0 %v1798
    %1945 = vmatpush2.bf16.msra.mxu0 %v1797
    %1946 = vmatprep.mubr.bf16.mxu0 %v1507
    %1947 = vmatmul.mubr.bf16.gmra.mxu0 %v1506
    %v1948 = vpop.f32.mrf.mxu0
    %v1949 = vadd.f32 %v1897, %v1948
    %v1950 = vpop.f32.mrf.mxu0
    %v1951 = vadd.f32 %v1901, %v1950
    %v1952 = vpop.f32.mrf.mxu0
    %v1953 = vpop.f32.mrf.mxu0
    %1954 = vdwg.mxu0
    %1955 = vmatprep.subr.bf16.mxu0 %v1796
    %1956 = vmatpush1.bf16.msra.mxu0 %v1795
    %1957 = vmatprep.subr.bf16.mxu0 %v1792
    %1958 = vmatpush1.bf16.msra.mxu0 %v1791
    %1959 = vmatprep.subr.bf16.mxu0 %v1788
    %1960 = vmatpush1.bf16.msra.mxu0 %v1787
    %1961 = vmatprep.subr.bf16.mxu0 %v1784
    %1962 = vmatpush1.bf16.msra.mxu0 %v1783
    %1963 = vmatprep.subr.bf16.mxu0 %v1780
    %1964 = vmatpush1.bf16.msra.mxu0 %v1779
    %1965 = vmatprep.subr.bf16.mxu0 %v1776
    %1966 = vmatpush1.bf16.msra.mxu0 %v1775
    %1967 = vmatprep.subr.bf16.mxu0 %v1772
    %1968 = vmatpush1.bf16.msra.mxu0 %v1771
    %1969 = vmatprep.subr.bf16.mxu0 %v1768
    %1970 = vmatpush1.bf16.msra.mxu0 %v1767
    %1971 = vmatprep.subr.bf16.mxu0 %v1828
    %1972 = vmatpush2.bf16.msra.mxu0 %v1827
    %1973 = vmatprep.subr.bf16.mxu0 %v1824
    %1974 = vmatpush2.bf16.msra.mxu0 %v1823
    %1975 = vmatprep.subr.bf16.mxu0 %v1820
    %1976 = vmatpush2.bf16.msra.mxu0 %v1819
    %1977 = vmatprep.subr.bf16.mxu0 %v1816
    %1978 = vmatpush2.bf16.msra.mxu0 %v1815
    %1979 = vmatprep.subr.bf16.mxu0 %v1812
    %1980 = vmatpush2.bf16.msra.mxu0 %v1811
    %1981 = vmatprep.subr.bf16.mxu0 %v1808
    %1982 = vmatpush2.bf16.msra.mxu0 %v1807
    %1983 = vmatprep.subr.bf16.mxu0 %v1804
    %1984 = vmatpush2.bf16.msra.mxu0 %v1803
    %1985 = vmatprep.subr.bf16.mxu0 %v1800
    %1986 = vmatpush2.bf16.msra.mxu0 %v1799
    %1987 = vmatprep.mubr.bf16.mxu0 %v1507
    %1988 = vmatmul.mubr.bf16.gmra.mxu0 %v1506
    %v1989 = vpop.f32.mrf.mxu0
    %v1990 = vadd.f32 %v1905, %v1989
    %v1991 = vpop.f32.mrf.mxu0
    %v1992 = vadd.f32 %v1909, %v1991
    %v1993 = vpop.f32.mrf.mxu0
    %v1994 = vpop.f32.mrf.mxu0
    %1995 = vdwg.mxu0
    %vm1996 = vcmask 1040384
    %v1997 = vsel %vm1996, %v1949, -inf
    %v1998 = vsel %vm1996, %v1951, -inf
    %v1999 = vsel %vm1996, %v1990, -inf
    %v2000 = vsel %vm1996, %v1992, -inf
    %v2001 = vmax.f32 %v1997, %v1998
    %v2002 = vmax.f32 %v1999, %v2000
    %v2003 = vmax.f32 %v2001, %v2002
    %2004 = vmax.xlane.f32.xlu0 %v2003
    %v2005 = vpop.xlane.xlu0 %2004
    %vm2006 = vcmp.eq.f32.partialorder %v1949, %v2005
    %vm2007 = vcmp.eq.f32.partialorder %v1951, %v2005
    %vm2008 = vcmp.eq.f32.partialorder %v1990, %v2005
    %vm2009 = vcmp.eq.f32.partialorder %v1992, %v2005
    %v2010 = vsel %vm2006, %v1115, 512
    %v2011 = vsel %vm2007, %v1116, 512
    %v2012 = vsel %vm2008, %v1117, 512
    %v2013 = vsel %vm2009, %v1118, 512
    %v2014 = vsel %vm1996, %v2010, 2147483647
    %v2015 = vsel %vm1996, %v2011, 2147483647
    %v2016 = vsel %vm1996, %v2012, 2147483647
    %v2017 = vsel %vm1996, %v2013, 2147483647
    %vm2018 = vcmp.lt.s32.totalorder %v2014, %v2015
    %v2019 = vsel %vm2018, %v2014, %v2015
    %vm2020 = vcmp.lt.s32.totalorder %v2016, %v2017
    %v2021 = vsel %vm2020, %v2016, %v2017
    %vm2022 = vcmp.lt.s32.totalorder %v2019, %v2021
    %v2023 = vsel %vm2022, %v2019, %v2021
    %v2024 = vand.u32 %v2023, 65535
    %v2025 = vshra.s32 %v2023, 16
    %v2026 = vcvt.s32.f32 %v2024
    %v2027 = vcvt.s32.f32 %v2025
    %2028 = vmin.xlane.f32.xlu0 %v2027
    %v2029 = vpop.xlane.xlu0 %2028
    %vm2030 = vcmp.eq.f32.partialorder %v2027, %v2029
    %v2031 = vsel %vm2030, %v2026, inf
    %2032 = vmin.xlane.f32.xlu0 %v2031
    %v2033 = vpop.xlane.xlu0 %2032
    %v2034 = vcvt.f32.s32 %v2033
    %v2035 = vcvt.f32.s32 %v2029
    %v2036 = vshll.u32 %v2035, 16
    %v2037 = vadd.s32 %v2036, %v2034
    %vm2038 = vcmp.eq.s32.totalorder %v1115, 0
    %v2039 = vsel %vm2038, %v2037, 0
    %vm2040 = vcmp.eq.s32.totalorder %v1115, %v2037
    %vm2041 = vcmp.eq.s32.totalorder %v1116, %v2037
    %vm2042 = vcmp.eq.s32.totalorder %v1117, %v2037
    %vm2043 = vcmp.eq.s32.totalorder %v1118, %v2037
    %v2044 = vsel %vm2040, 1, 0
    %v2045 = vsel %vm2041, 1, 0
    %v2046 = vsel %vm2042, 1, 0
    %v2047 = vsel %vm2043, 1, 0
    %v2048 = vcvt.s32.f32 %v2044
    %v2049 = vcvt.s32.f32 %v2045
    %v2050 = vcvt.s32.f32 %v2046
    %v2051 = vcvt.s32.f32 %v2047
    %v2052 = vpack.c.bf16 %v2048, %v2048
    %v2053 = vpack.c.bf16 %v2049, %v2049
    %v2054 = vpack.c.bf16 %v2050, %v2050
    %v2055 = vpack.c.bf16 %v2051, %v2051
    %v2056 = vld [vmem:[#allocation11] sm:$0xf]
    %v2057 = vld [vmem:[#allocation11 + $0x4] sm:$0xf]
    %v2058 = vld [vmem:[#allocation11 + $0x8] sm:$0xf]
    %v2059 = vld [vmem:[#allocation11 + $0xc] sm:$0xf]
    %v2060 = vld [vmem:[#allocation11 + $0x10] sm:$0xf]
    %v2061 = vld [vmem:[#allocation11 + $0x14] sm:$0xf]
    %v2062 = vld [vmem:[#allocation11 + $0x18] sm:$0xf]
    %v2063 = vld [vmem:[#allocation11 + $0x1c] sm:$0xf]
    %v2064 = vld [vmem:[#allocation11 + $0x20] sm:$0xf]
    %v2065 = vld [vmem:[#allocation11 + $0x24] sm:$0xf]
    %v2066 = vld [vmem:[#allocation11 + $0x28] sm:$0xf]
    %v2067 = vld [vmem:[#allocation11 + $0x2c] sm:$0xf]
    %v2068 = vld [vmem:[#allocation11 + $0x30] sm:$0xf]
    %v2069 = vld [vmem:[#allocation11 + $0x34] sm:$0xf]
    %v2070 = vld [vmem:[#allocation11 + $0x38] sm:$0xf]
    %v2071 = vld [vmem:[#allocation11 + $0x3c] sm:$0xf]
    %v2072 = vld [vmem:[#allocation11 + $0x40] sm:$0xf]
    %v2073 = vld [vmem:[#allocation11 + $0x44] sm:$0xf]
    %v2074 = vld [vmem:[#allocation11 + $0x48] sm:$0xf]
    %v2075 = vld [vmem:[#allocation11 + $0x4c] sm:$0xf]
    %v2076 = vld [vmem:[#allocation11 + $0x50] sm:$0xf]
    %v2077 = vld [vmem:[#allocation11 + $0x54] sm:$0xf]
    %v2078 = vld [vmem:[#allocation11 + $0x58] sm:$0xf]
    %v2079 = vld [vmem:[#allocation11 + $0x5c] sm:$0xf]
    %v2080 = vld [vmem:[#allocation11 + $0x60] sm:$0xf]
    %v2081 = vld [vmem:[#allocation11 + $0x64] sm:$0xf]
    %v2082 = vld [vmem:[#allocation11 + $0x68] sm:$0xf]
    %v2083 = vld [vmem:[#allocation11 + $0x6c] sm:$0xf]
    %v2084 = vld [vmem:[#allocation11 + $0x70] sm:$0xf]
    %v2085 = vld [vmem:[#allocation11 + $0x74] sm:$0xf]
    %v2086 = vld [vmem:[#allocation11 + $0x78] sm:$0xf]
    %v2087 = vld [vmem:[#allocation11 + $0x7c] sm:$0xf]
    %v2088 = vld [vmem:[#allocation11 + $0x80] sm:$0xf]
    %v2089 = vld [vmem:[#allocation11 + $0x84] sm:$0xf]
    %v2090 = vld [vmem:[#allocation11 + $0x88] sm:$0xf]
    %v2091 = vld [vmem:[#allocation11 + $0x8c] sm:$0xf]
    %v2092 = vld [vmem:[#allocation11 + $0x90] sm:$0xf]
    %v2093 = vld [vmem:[#allocation11 + $0x94] sm:$0xf]
    %v2094 = vld [vmem:[#allocation11 + $0x98] sm:$0xf]
    %v2095 = vld [vmem:[#allocation11 + $0x9c] sm:$0xf]
    %v2096 = vld [vmem:[#allocation11 + $0xa0] sm:$0xf]
    %v2097 = vld [vmem:[#allocation11 + $0xa4] sm:$0xf]
    %v2098 = vld [vmem:[#allocation11 + $0xa8] sm:$0xf]
    %v2099 = vld [vmem:[#allocation11 + $0xac] sm:$0xf]
    %v2100 = vld [vmem:[#allocation11 + $0xb0] sm:$0xf]
    %v2101 = vld [vmem:[#allocation11 + $0xb4] sm:$0xf]
    %v2102 = vld [vmem:[#allocation11 + $0xb8] sm:$0xf]
    %v2103 = vld [vmem:[#allocation11 + $0xbc] sm:$0xf]
    %v2104 = vld [vmem:[#allocation11 + $0xc0] sm:$0xf]
    %v2105 = vld [vmem:[#allocation11 + $0xc4] sm:$0xf]
    %v2106 = vld [vmem:[#allocation11 + $0xc8] sm:$0xf]
    %v2107 = vld [vmem:[#allocation11 + $0xcc] sm:$0xf]
    %v2108 = vld [vmem:[#allocation11 + $0xd0] sm:$0xf]
    %v2109 = vld [vmem:[#allocation11 + $0xd4] sm:$0xf]
    %v2110 = vld [vmem:[#allocation11 + $0xd8] sm:$0xf]
    %v2111 = vld [vmem:[#allocation11 + $0xdc] sm:$0xf]
    %v2112 = vld [vmem:[#allocation11 + $0xe0] sm:$0xf]
    %v2113 = vld [vmem:[#allocation11 + $0xe4] sm:$0xf]
    %v2114 = vld [vmem:[#allocation11 + $0xe8] sm:$0xf]
    %v2115 = vld [vmem:[#allocation11 + $0xec] sm:$0xf]
    %v2116 = vld [vmem:[#allocation11 + $0xf0] sm:$0xf]
    %v2117 = vld [vmem:[#allocation11 + $0xf4] sm:$0xf]
    %v2118 = vld [vmem:[#allocation11 + $0xf8] sm:$0xf]
    %v2119 = vld [vmem:[#allocation11 + $0xfc] sm:$0xf]
    %v2184 = vunpack.c.l.b16 %v2056
    %v2185 = vunpack.c.l.b16 %v2057
    %v2186 = vunpack.c.l.b16 %v2058
    %v2187 = vunpack.c.l.b16 %v2059
    %v2188 = vunpack.c.l.b16 %v2060
    %v2189 = vunpack.c.l.b16 %v2061
    %v2190 = vunpack.c.l.b16 %v2062
    %v2191 = vunpack.c.l.b16 %v2063
    %v2192 = vunpack.c.l.b16 %v2064
    %v2193 = vunpack.c.l.b16 %v2065
    %v2194 = vunpack.c.l.b16 %v2066
    %v2195 = vunpack.c.l.b16 %v2067
    %v2196 = vunpack.c.l.b16 %v2068
    %v2197 = vunpack.c.l.b16 %v2069
    %v2198 = vunpack.c.l.b16 %v2070
    %v2199 = vunpack.c.l.b16 %v2071
    %v2200 = vunpack.c.l.b16 %v2072
    %v2201 = vunpack.c.l.b16 %v2073
    %v2202 = vunpack.c.l.b16 %v2074
    %v2203 = vunpack.c.l.b16 %v2075
    %v2204 = vunpack.c.l.b16 %v2076
    %v2205 = vunpack.c.l.b16 %v2077
    %v2206 = vunpack.c.l.b16 %v2078
    %v2207 = vunpack.c.l.b16 %v2079
    %v2208 = vunpack.c.l.b16 %v2080
    %v2209 = vunpack.c.l.b16 %v2081
    %v2210 = vunpack.c.l.b16 %v2082
    %v2211 = vunpack.c.l.b16 %v2083
    %v2212 = vunpack.c.l.b16 %v2084
    %v2213 = vunpack.c.l.b16 %v2085
    %v2214 = vunpack.c.l.b16 %v2086
    %v2215 = vunpack.c.l.b16 %v2087
    %v2216 = vunpack.c.l.b16 %v2088
    %v2217 = vunpack.c.l.b16 %v2089
    %v2218 = vunpack.c.l.b16 %v2090
    %v2219 = vunpack.c.l.b16 %v2091
    %v2220 = vunpack.c.l.b16 %v2092
    %v2221 = vunpack.c.l.b16 %v2093
    %v2222 = vunpack.c.l.b16 %v2094
    %v2223 = vunpack.c.l.b16 %v2095
    %v2224 = vunpack.c.l.b16 %v2096
    %v2225 = vunpack.c.l.b16 %v2097
    %v2226 = vunpack.c.l.b16 %v2098
    %v2227 = vunpack.c.l.b16 %v2099
    %v2228 = vunpack.c.l.b16 %v2100
    %v2229 = vunpack.c.l.b16 %v2101
    %v2230 = vunpack.c.l.b16 %v2102
    %v2231 = vunpack.c.l.b16 %v2103
    %v2232 = vunpack.c.l.b16 %v2104
    %v2233 = vunpack.c.l.b16 %v2105
    %v2234 = vunpack.c.l.b16 %v2106
    %v2235 = vunpack.c.l.b16 %v2107
    %v2236 = vunpack.c.l.b16 %v2108
    %v2237 = vunpack.c.l.b16 %v2109
    %v2238 = vunpack.c.l.b16 %v2110
    %v2239 = vunpack.c.l.b16 %v2111
    %v2240 = vunpack.c.l.b16 %v2112
    %v2241 = vunpack.c.l.b16 %v2113
    %v2242 = vunpack.c.l.b16 %v2114
    %v2243 = vunpack.c.l.b16 %v2115
    %v2244 = vunpack.c.l.b16 %v2116
    %v2245 = vunpack.c.l.b16 %v2117
    %v2246 = vunpack.c.l.b16 %v2118
    %v2247 = vunpack.c.l.b16 %v2119
    %v2248 = vpack.c.b16 %v2185, %v2184
    %v2249 = vpack.c.b16 %v2187, %v2186
    %v2250 = vpack.c.b16 %v2189, %v2188
    %v2251 = vpack.c.b16 %v2191, %v2190
    %v2252 = vpack.c.b16 %v2193, %v2192
    %v2253 = vpack.c.b16 %v2195, %v2194
    %v2254 = vpack.c.b16 %v2197, %v2196
    %v2255 = vpack.c.b16 %v2199, %v2198
    %v2256 = vpack.c.b16 %v2201, %v2200
    %v2257 = vpack.c.b16 %v2203, %v2202
    %v2258 = vpack.c.b16 %v2205, %v2204
    %v2259 = vpack.c.b16 %v2207, %v2206
    %v2260 = vpack.c.b16 %v2209, %v2208
    %v2261 = vpack.c.b16 %v2211, %v2210
    %v2262 = vpack.c.b16 %v2213, %v2212
    %v2263 = vpack.c.b16 %v2215, %v2214
    %v2264 = vpack.c.b16 %v2217, %v2216
    %v2265 = vpack.c.b16 %v2219, %v2218
    %v2266 = vpack.c.b16 %v2221, %v2220
    %v2267 = vpack.c.b16 %v2223, %v2222
    %v2268 = vpack.c.b16 %v2225, %v2224
    %v2269 = vpack.c.b16 %v2227, %v2226
    %v2270 = vpack.c.b16 %v2229, %v2228
    %v2271 = vpack.c.b16 %v2231, %v2230
    %v2272 = vpack.c.b16 %v2233, %v2232
    %v2273 = vpack.c.b16 %v2235, %v2234
    %v2274 = vpack.c.b16 %v2237, %v2236
    %v2275 = vpack.c.b16 %v2239, %v2238
    %v2276 = vpack.c.b16 %v2241, %v2240
    %v2277 = vpack.c.b16 %v2243, %v2242
    %v2278 = vpack.c.b16 %v2245, %v2244
    %v2279 = vpack.c.b16 %v2247, %v2246
    %2312 = vmatprep.subr.bf16.mxu0 0
    %2313 = vmatpush1.bf16.msra.mxu0 %v2255
    %2314 = vmatprep.subr.bf16.mxu0 0
    %2315 = vmatpush1.bf16.msra.mxu0 %v2254
    %2316 = vmatprep.subr.bf16.mxu0 0
    %2317 = vmatpush1.bf16.msra.mxu0 %v2253
    %2318 = vmatprep.subr.bf16.mxu0 0
    %2319 = vmatpush1.bf16.msra.mxu0 %v2252
    %2320 = vmatprep.subr.bf16.mxu0 0
    %2321 = vmatpush1.bf16.msra.mxu0 %v2251
    %2322 = vmatprep.subr.bf16.mxu0 0
    %2323 = vmatpush1.bf16.msra.mxu0 %v2250
    %2324 = vmatprep.subr.bf16.mxu0 0
    %2325 = vmatpush1.bf16.msra.mxu0 %v2249
    %2326 = vmatprep.subr.bf16.mxu0 0
    %2327 = vmatpush1.bf16.msra.mxu0 %v2248
    %2328 = vmatprep.subr.bf16.mxu0 0
    %2329 = vmatpush2.bf16.msra.mxu0 %v2263
    %2330 = vmatprep.subr.bf16.mxu0 0
    %2331 = vmatpush2.bf16.msra.mxu0 %v2262
    %2332 = vmatprep.subr.bf16.mxu0 0
    %2333 = vmatpush2.bf16.msra.mxu0 %v2261
    %2334 = vmatprep.subr.bf16.mxu0 0
    %2335 = vmatpush2.bf16.msra.mxu0 %v2260
    %2336 = vmatprep.subr.bf16.mxu0 0
    %2337 = vmatpush2.bf16.msra.mxu0 %v2259
    %2338 = vmatprep.subr.bf16.mxu0 0
    %2339 = vmatpush2.bf16.msra.mxu0 %v2258
    %2340 = vmatprep.subr.bf16.mxu0 0
    %2341 = vmatpush2.bf16.msra.mxu0 %v2257
    %2342 = vmatprep.subr.bf16.mxu0 0
    %2343 = vmatpush2.bf16.msra.mxu0 %v2256
    %2344 = vmatprep.mubr.bf16.mxu0 %v2053
    %2345 = vmatmul.mubr.bf16.gmra.mxu0 %v2052
    %v2346 = vpop.f32.mrf.mxu0
    %v2347 = vadd.f32 0.0, %v2346
    %v2348 = vpop.f32.mrf.mxu0
    %v2349 = vpop.f32.mrf.mxu0
    %v2350 = vpop.f32.mrf.mxu0
    %2351 = vdwg.mxu0
    %2352 = vmatprep.subr.bf16.mxu0 0
    %2353 = vmatpush1.bf16.msra.mxu0 %v2271
    %2354 = vmatprep.subr.bf16.mxu0 0
    %2355 = vmatpush1.bf16.msra.mxu0 %v2270
    %2356 = vmatprep.subr.bf16.mxu0 0
    %2357 = vmatpush1.bf16.msra.mxu0 %v2269
    %2358 = vmatprep.subr.bf16.mxu0 0
    %2359 = vmatpush1.bf16.msra.mxu0 %v2268
    %2360 = vmatprep.subr.bf16.mxu0 0
    %2361 = vmatpush1.bf16.msra.mxu0 %v2267
    %2362 = vmatprep.subr.bf16.mxu0 0
    %2363 = vmatpush1.bf16.msra.mxu0 %v2266
    %2364 = vmatprep.subr.bf16.mxu0 0
    %2365 = vmatpush1.bf16.msra.mxu0 %v2265
    %2366 = vmatprep.subr.bf16.mxu0 0
    %2367 = vmatpush1.bf16.msra.mxu0 %v2264
    %2368 = vmatprep.subr.bf16.mxu0 0
    %2369 = vmatpush2.bf16.msra.mxu0 %v2279
    %2370 = vmatprep.subr.bf16.mxu0 0
    %2371 = vmatpush2.bf16.msra.mxu0 %v2278
    %2372 = vmatprep.subr.bf16.mxu0 0
    %2373 = vmatpush2.bf16.msra.mxu0 %v2277
    %2374 = vmatprep.subr.bf16.mxu0 0
    %2375 = vmatpush2.bf16.msra.mxu0 %v2276
    %2376 = vmatprep.subr.bf16.mxu0 0
    %2377 = vmatpush2.bf16.msra.mxu0 %v2275
    %2378 = vmatprep.subr.bf16.mxu0 0
    %2379 = vmatpush2.bf16.msra.mxu0 %v2274
    %2380 = vmatprep.subr.bf16.mxu0 0
    %2381 = vmatpush2.bf16.msra.mxu0 %v2273
    %2382 = vmatprep.subr.bf16.mxu0 0
    %2383 = vmatpush2.bf16.msra.mxu0 %v2272
    %2384 = vmatprep.mubr.bf16.mxu0 %v2055
    %2385 = vmatmul.mubr.bf16.gmra.mxu0 %v2054
    %v2386 = vpop.f32.mrf.mxu0
    %v2387 = vadd.f32 %v2347, %v2386
    %v2388 = vpop.f32.mrf.mxu0
    %v2389 = vpop.f32.mrf.mxu0
    %v2390 = vpop.f32.mrf.mxu0
    %2391 = vdwg.mxu0
    %v2392 = vpack.c.bf16 %v2387, %v2387
    %2393 = vmatprep.subr.bf16.mxu0 %v1330
    %2394 = vmatpush1.bf16.msra.mxu0 %v1329
    %2395 = vmatprep.subr.bf16.mxu0 %v1328
    %2396 = vmatpush1.bf16.msra.mxu0 %v1327
    %2397 = vmatprep.subr.bf16.mxu0 %v1326
    %2398 = vmatpush1.bf16.msra.mxu0 %v1325
    %2399 = vmatprep.subr.bf16.mxu0 %v1324
    %2400 = vmatpush1.bf16.msra.mxu0 %v1323
    %2401 = vmatprep.subr.bf16.mxu0 %v1322
    %2402 = vmatpush1.bf16.msra.mxu0 %v1321
    %2403 = vmatprep.subr.bf16.mxu0 %v1320
    %2404 = vmatpush1.bf16.msra.mxu0 %v1319
    %2405 = vmatprep.subr.bf16.mxu0 %v1318
    %2406 = vmatpush1.bf16.msra.mxu0 %v1317
    %2407 = vmatprep.subr.bf16.mxu0 %v1316
    %2408 = vmatpush1.bf16.msra.mxu0 %v1315
    %2409 = vmatprep.subr.bf16.mxu0 %v1346
    %2410 = vmatpush2.bf16.msra.mxu0 %v1345
    %2411 = vmatprep.subr.bf16.mxu0 %v1344
    %2412 = vmatpush2.bf16.msra.mxu0 %v1343
    %2413 = vmatprep.subr.bf16.mxu0 %v1342
    %2414 = vmatpush2.bf16.msra.mxu0 %v1341
    %2415 = vmatprep.subr.bf16.mxu0 %v1340
    %2416 = vmatpush2.bf16.msra.mxu0 %v1339
    %2417 = vmatprep.subr.bf16.mxu0 %v1338
    %2418 = vmatpush2.bf16.msra.mxu0 %v1337
    %2419 = vmatprep.subr.bf16.mxu0 %v1336
    %2420 = vmatpush2.bf16.msra.mxu0 %v1335
    %2421 = vmatprep.subr.bf16.mxu0 %v1334
    %2422 = vmatpush2.bf16.msra.mxu0 %v1333
    %2423 = vmatprep.subr.bf16.mxu0 %v1332
    %2424 = vmatpush2.bf16.msra.mxu0 %v1331
    %2425 = vmatprep.mubr.bf16.mxu0 %v1506
    %2426 = vmatmul.mubr.bf16.gmra.mxu0 %v2392
    %v2427 = vpop.f32.mrf.mxu0
    %v2428 = vadd.f32 %v1415, %v2427
    %v2429 = vpop.f32.mrf.mxu0
    %v2430 = vadd.f32 %v1419, %v2429
    %v2431 = vpop.f32.mrf.mxu0
    %v2432 = vpop.f32.mrf.mxu0
    %2433 = vdwg.mxu0
    %2434 = vmatprep.subr.bf16.mxu0 %v1362
    %2435 = vmatpush1.bf16.msra.mxu0 %v1361
    %2436 = vmatprep.subr.bf16.mxu0 %v1360
    %2437 = vmatpush1.bf16.msra.mxu0 %v1359
    %2438 = vmatprep.subr.bf16.mxu0 %v1358
    %2439 = vmatpush1.bf16.msra.mxu0 %v1357
    %2440 = vmatprep.subr.bf16.mxu0 %v1356
    %2441 = vmatpush1.bf16.msra.mxu0 %v1355
    %2442 = vmatprep.subr.bf16.mxu0 %v1354
    %2443 = vmatpush1.bf16.msra.mxu0 %v1353
    %2444 = vmatprep.subr.bf16.mxu0 %v1352
    %2445 = vmatpush1.bf16.msra.mxu0 %v1351
    %2446 = vmatprep.subr.bf16.mxu0 %v1350
    %2447 = vmatpush1.bf16.msra.mxu0 %v1349
    %2448 = vmatprep.subr.bf16.mxu0 %v1348
    %2449 = vmatpush1.bf16.msra.mxu0 %v1347
    %2450 = vmatprep.subr.bf16.mxu0 0
    %2451 = vmatpush2.bf16.msra.mxu0 0
    %2452 = vmatprep.subr.bf16.mxu0 0
    %2453 = vmatpush2.bf16.msra.mxu0 0
    %2454 = vmatprep.subr.bf16.mxu0 0
    %2455 = vmatpush2.bf16.msra.mxu0 0
    %2456 = vmatprep.subr.bf16.mxu0 0
    %2457 = vmatpush2.bf16.msra.mxu0 0
    %2458 = vmatprep.subr.bf16.mxu0 0
    %2459 = vmatpush2.bf16.msra.mxu0 0
    %2460 = vmatprep.subr.bf16.mxu0 0
    %2461 = vmatpush2.bf16.msra.mxu0 0
    %2462 = vmatprep.subr.bf16.mxu0 0
    %2463 = vmatpush2.bf16.msra.mxu0 0
    %2464 = vmatprep.subr.bf16.mxu0 0
    %2465 = vmatpush2.bf16.msra.mxu0 0
    %2466 = vmatprep.mubr.bf16.mxu0 0
    %2467 = vmatmul.mubr.bf16.gmra.mxu0 %v1507
    %v2468 = vpop.f32.mrf.mxu0
    %v2469 = vadd.f32 %v2428, %v2468
    %v2470 = vpop.f32.mrf.mxu0
    %v2471 = vadd.f32 %v2430, %v2470
    %v2472 = vpop.f32.mrf.mxu0
    %v2473 = vpop.f32.mrf.mxu0
    %2474 = vdwg.mxu0
    %v2475 = vmax.f32 %v2469, 0.0
    %v2476 = vmax.f32 %v2471, 0.0
    %v2477 = vpack.c.bf16 %v2475, %v2475
    %v2478 = vpack.c.bf16 %v2476, %v2476
    %2479 = vmatprep.subr.bf16.mxu0 %v1794
    %2480 = vmatpush1.bf16.msra.mxu0 %v1793
    %2481 = vmatprep.subr.bf16.mxu0 %v1790
    %2482 = vmatpush1.bf16.msra.mxu0 %v1789
    %2483 = vmatprep.subr.bf16.mxu0 %v1786
    %2484 = vmatpush1.bf16.msra.mxu0 %v1785
    %2485 = vmatprep.subr.bf16.mxu0 %v1782
    %2486 = vmatpush1.bf16.msra.mxu0 %v1781
    %2487 = vmatprep.subr.bf16.mxu0 %v1778
    %2488 = vmatpush1.bf16.msra.mxu0 %v1777
    %2489 = vmatprep.subr.bf16.mxu0 %v1774
    %2490 = vmatpush1.bf16.msra.mxu0 %v1773
    %2491 = vmatprep.subr.bf16.mxu0 %v1770
    %2492 = vmatpush1.bf16.msra.mxu0 %v1769
    %2493 = vmatprep.subr.bf16.mxu0 %v1766
    %2494 = vmatpush1.bf16.msra.mxu0 %v1765
    %2495 = vmatprep.subr.bf16.mxu0 %v1826
    %2496 = vmatpush2.bf16.msra.mxu0 %v1825
    %2497 = vmatprep.subr.bf16.mxu0 %v1822
    %2498 = vmatpush2.bf16.msra.mxu0 %v1821
    %2499 = vmatprep.subr.bf16.mxu0 %v1818
    %2500 = vmatpush2.bf16.msra.mxu0 %v1817
    %2501 = vmatprep.subr.bf16.mxu0 %v1814
    %2502 = vmatpush2.bf16.msra.mxu0 %v1813
    %2503 = vmatprep.subr.bf16.mxu0 %v1810
    %2504 = vmatpush2.bf16.msra.mxu0 %v1809
    %2505 = vmatprep.subr.bf16.mxu0 %v1806
    %2506 = vmatpush2.bf16.msra.mxu0 %v1805
    %2507 = vmatprep.subr.bf16.mxu0 %v1802
    %2508 = vmatpush2.bf16.msra.mxu0 %v1801
    %2509 = vmatprep.subr.bf16.mxu0 %v1798
    %2510 = vmatpush2.bf16.msra.mxu0 %v1797
    %2511 = vmatprep.mubr.bf16.mxu0 %v2478
    %2512 = vmatmul.mubr.bf16.gmra.mxu0 %v2477
    %v2513 = vpop.f32.mrf.mxu0
    %v2514 = vadd.f32 %v1897, %v2513
    %v2515 = vpop.f32.mrf.mxu0
    %v2516 = vadd.f32 %v1901, %v2515
    %v2517 = vpop.f32.mrf.mxu0
    %v2518 = vpop.f32.mrf.mxu0
    %2519 = vdwg.mxu0
    %2520 = vmatprep.subr.bf16.mxu0 %v1796
    %2521 = vmatpush1.bf16.msra.mxu0 %v1795
    %2522 = vmatprep.subr.bf16.mxu0 %v1792
    %2523 = vmatpush1.bf16.msra.mxu0 %v1791
    %2524 = vmatprep.subr.bf16.mxu0 %v1788
    %2525 = vmatpush1.bf16.msra.mxu0 %v1787
    %2526 = vmatprep.subr.bf16.mxu0 %v1784
    %2527 = vmatpush1.bf16.msra.mxu0 %v1783
    %2528 = vmatprep.subr.bf16.mxu0 %v1780
    %2529 = vmatpush1.bf16.msra.mxu0 %v1779
    %2530 = vmatprep.subr.bf16.mxu0 %v1776
    %2531 = vmatpush1.bf16.msra.mxu0 %v1775
    %2532 = vmatprep.subr.bf16.mxu0 %v1772
    %2533 = vmatpush1.bf16.msra.mxu0 %v1771
    %2534 = vmatprep.subr.bf16.mxu0 %v1768
    %2535 = vmatpush1.bf16.msra.mxu0 %v1767
    %2536 = vmatprep.subr.bf16.mxu0 %v1828
    %2537 = vmatpush2.bf16.msra.mxu0 %v1827
    %2538 = vmatprep.subr.bf16.mxu0 %v1824
    %2539 = vmatpush2.bf16.msra.mxu0 %v1823
    %2540 = vmatprep.subr.bf16.mxu0 %v1820
    %2541 = vmatpush2.bf16.msra.mxu0 %v1819
    %2542 = vmatprep.subr.bf16.mxu0 %v1816
    %2543 = vmatpush2.bf16.msra.mxu0 %v1815
    %2544 = vmatprep.subr.bf16.mxu0 %v1812
    %2545 = vmatpush2.bf16.msra.mxu0 %v1811
    %2546 = vmatprep.subr.bf16.mxu0 %v1808
    %2547 = vmatpush2.bf16.msra.mxu0 %v1807
    %2548 = vmatprep.subr.bf16.mxu0 %v1804
    %2549 = vmatpush2.bf16.msra.mxu0 %v1803
    %2550 = vmatprep.subr.bf16.mxu0 %v1800
    %2551 = vmatpush2.bf16.msra.mxu0 %v1799
    %2552 = vmatprep.mubr.bf16.mxu0 %v2478
    %2553 = vmatmul.mubr.bf16.gmra.mxu0 %v2477
    %v2554 = vpop.f32.mrf.mxu0
    %v2555 = vadd.f32 %v1905, %v2554
    %v2556 = vpop.f32.mrf.mxu0
    %v2557 = vadd.f32 %v1909, %v2556
    %v2558 = vpop.f32.mrf.mxu0
    %v2559 = vpop.f32.mrf.mxu0
    %2560 = vdwg.mxu0
    %v2561 = vsel %vm1996, %v2514, -inf
    %v2562 = vsel %vm1996, %v2516, -inf
    %v2563 = vsel %vm1996, %v2555, -inf
    %v2564 = vsel %vm1996, %v2557, -inf
    %v2565 = vmax.f32 %v2561, %v2562
    %v2566 = vmax.f32 %v2563, %v2564
    %v2567 = vmax.f32 %v2565, %v2566
    %2568 = vmax.xlane.f32.xlu0 %v2567
    %v2569 = vpop.xlane.xlu0 %2568
    %vm2570 = vcmp.eq.f32.partialorder %v2514, %v2569
    %vm2571 = vcmp.eq.f32.partialorder %v2516, %v2569
    %vm2572 = vcmp.eq.f32.partialorder %v2555, %v2569
    %vm2573 = vcmp.eq.f32.partialorder %v2557, %v2569
    %v2574 = vsel %vm2570, %v1115, 512
    %v2575 = vsel %vm2571, %v1116, 512
    %v2576 = vsel %vm2572, %v1117, 512
    %v2577 = vsel %vm2573, %v1118, 512
    %v2578 = vsel %vm1996, %v2574, 2147483647
    %v2579 = vsel %vm1996, %v2575, 2147483647
    %v2580 = vsel %vm1996, %v2576, 2147483647
    %v2581 = vsel %vm1996, %v2577, 2147483647
    %vm2582 = vcmp.lt.s32.totalorder %v2578, %v2579
    %v2583 = vsel %vm2582, %v2578, %v2579
    %vm2584 = vcmp.lt.s32.totalorder %v2580, %v2581
    %v2585 = vsel %vm2584, %v2580, %v2581
    %vm2586 = vcmp.lt.s32.totalorder %v2583, %v2585
    %v2587 = vsel %vm2586, %v2583, %v2585
    %v2588 = vand.u32 %v2587, 65535
    %v2589 = vshra.s32 %v2587, 16
    %v2590 = vcvt.s32.f32 %v2588
    %v2591 = vcvt.s32.f32 %v2589
    %2592 = vmin.xlane.f32.xlu0 %v2591
    %v2593 = vpop.xlane.xlu0 %2592
    %vm2594 = vcmp.eq.f32.partialorder %v2591, %v2593
    %v2595 = vsel %vm2594, %v2590, inf
    %2596 = vmin.xlane.f32.xlu0 %v2595
    %v2597 = vpop.xlane.xlu0 %2596
    %v2598 = vcvt.f32.s32 %v2597
    %v2599 = vcvt.f32.s32 %v2593
    %v2600 = vshll.u32 %v2599, 16
    %v2601 = vadd.s32 %v2600, %v2598
    %vm2602 = vcmp.eq.s32.totalorder %v1115, 1
    %v2603 = vsel %vm2602, %v2601, %v2039
    %vm2604 = vcmp.eq.s32.totalorder %v1115, %v2601
    %vm2605 = vcmp.eq.s32.totalorder %v1116, %v2601
    %vm2606 = vcmp.eq.s32.totalorder %v1117, %v2601
    %vm2607 = vcmp.eq.s32.totalorder %v1118, %v2601
    %v2608 = vsel %vm2604, 1, 0
    %v2609 = vsel %vm2605, 1, 0
    %v2610 = vsel %vm2606, 1, 0
    %v2611 = vsel %vm2607, 1, 0
    %v2612 = vcvt.s32.f32 %v2608
    %v2613 = vcvt.s32.f32 %v2609
    %v2614 = vcvt.s32.f32 %v2610
    %v2615 = vcvt.s32.f32 %v2611
    %v2616 = vpack.c.bf16 %v2612, %v2612
    %v2617 = vpack.c.bf16 %v2613, %v2613
    %v2618 = vpack.c.bf16 %v2614, %v2614
    %v2619 = vpack.c.bf16 %v2615, %v2615
    %2620 = vmatprep.subr.bf16.mxu0 0
    %2621 = vmatpush1.bf16.msra.mxu0 %v2255
    %2622 = vmatprep.subr.bf16.mxu0 0
    %2623 = vmatpush1.bf16.msra.mxu0 %v2254
    %2624 = vmatprep.subr.bf16.mxu0 0
    %2625 = vmatpush1.bf16.msra.mxu0 %v2253
    %2626 = vmatprep.subr.bf16.mxu0 0
    %2627 = vmatpush1.bf16.msra.mxu0 %v2252
    %2628 = vmatprep.subr.bf16.mxu0 0
    %2629 = vmatpush1.bf16.msra.mxu0 %v2251
    %2630 = vmatprep.subr.bf16.mxu0 0
    %2631 = vmatpush1.bf16.msra.mxu0 %v2250
    %2632 = vmatprep.subr.bf16.mxu0 0
    %2633 = vmatpush1.bf16.msra.mxu0 %v2249
    %2634 = vmatprep.subr.bf16.mxu0 0
    %2635 = vmatpush1.bf16.msra.mxu0 %v2248
    %2636 = vmatprep.subr.bf16.mxu0 0
    %2637 = vmatpush2.bf16.msra.mxu0 %v2263
    %2638 = vmatprep.subr.bf16.mxu0 0
    %2639 = vmatpush2.bf16.msra.mxu0 %v2262
    %2640 = vmatprep.subr.bf16.mxu0 0
    %2641 = vmatpush2.bf16.msra.mxu0 %v2261
    %2642 = vmatprep.subr.bf16.mxu0 0
    %2643 = vmatpush2.bf16.msra.mxu0 %v2260
    %2644 = vmatprep.subr.bf16.mxu0 0
    %2645 = vmatpush2.bf16.msra.mxu0 %v2259
    %2646 = vmatprep.subr.bf16.mxu0 0
    %2647 = vmatpush2.bf16.msra.mxu0 %v2258
    %2648 = vmatprep.subr.bf16.mxu0 0
    %2649 = vmatpush2.bf16.msra.mxu0 %v2257
    %2650 = vmatprep.subr.bf16.mxu0 0
    %2651 = vmatpush2.bf16.msra.mxu0 %v2256
    %2652 = vmatprep.mubr.bf16.mxu0 %v2617
    %2653 = vmatmul.mubr.bf16.gmra.mxu0 %v2616
    %v2654 = vpop.f32.mrf.mxu0
    %v2655 = vadd.f32 0.0, %v2654
    %v2656 = vpop.f32.mrf.mxu0
    %v2657 = vpop.f32.mrf.mxu0
    %v2658 = vpop.f32.mrf.mxu0
    %2659 = vdwg.mxu0
    %2660 = vmatprep.subr.bf16.mxu0 0
    %2661 = vmatpush1.bf16.msra.mxu0 %v2271
    %2662 = vmatprep.subr.bf16.mxu0 0
    %2663 = vmatpush1.bf16.msra.mxu0 %v2270
    %2664 = vmatprep.subr.bf16.mxu0 0
    %2665 = vmatpush1.bf16.msra.mxu0 %v2269
    %2666 = vmatprep.subr.bf16.mxu0 0
    %2667 = vmatpush1.bf16.msra.mxu0 %v2268
    %2668 = vmatprep.subr.bf16.mxu0 0
    %2669 = vmatpush1.bf16.msra.mxu0 %v2267
    %2670 = vmatprep.subr.bf16.mxu0 0
    %2671 = vmatpush1.bf16.msra.mxu0 %v2266
    %2672 = vmatprep.subr.bf16.mxu0 0
    %2673 = vmatpush1.bf16.msra.mxu0 %v2265
    %2674 = vmatprep.subr.bf16.mxu0 0
    %2675 = vmatpush1.bf16.msra.mxu0 %v2264
    %2676 = vmatprep.subr.bf16.mxu0 0
    %2677 = vmatpush2.bf16.msra.mxu0 %v2279
    %2678 = vmatprep.subr.bf16.mxu0 0
    %2679 = vmatpush2.bf16.msra.mxu0 %v2278
    %2680 = vmatprep.subr.bf16.mxu0 0
    %2681 = vmatpush2.bf16.msra.mxu0 %v2277
    %2682 = vmatprep.subr.bf16.mxu0 0
    %2683 = vmatpush2.bf16.msra.mxu0 %v2276
    %2684 = vmatprep.subr.bf16.mxu0 0
    %2685 = vmatpush2.bf16.msra.mxu0 %v2275
    %2686 = vmatprep.subr.bf16.mxu0 0
    %2687 = vmatpush2.bf16.msra.mxu0 %v2274
    %2688 = vmatprep.subr.bf16.mxu0 0
    %2689 = vmatpush2.bf16.msra.mxu0 %v2273
    %2690 = vmatprep.subr.bf16.mxu0 0
    %2691 = vmatpush2.bf16.msra.mxu0 %v2272
    %2692 = vmatprep.mubr.bf16.mxu0 %v2619
    %2693 = vmatmul.mubr.bf16.gmra.mxu0 %v2618
    %v2694 = vpop.f32.mrf.mxu0
    %v2695 = vadd.f32 %v2655, %v2694
    %v2696 = vpop.f32.mrf.mxu0
    %v2697 = vpop.f32.mrf.mxu0
    %v2698 = vpop.f32.mrf.mxu0
    %2699 = vdwg.mxu0
    %v2700 = vpack.c.bf16 %v2695, %v2695
    %2701 = vmatprep.subr.bf16.mxu0 %v1330
    %2702 = vmatpush1.bf16.msra.mxu0 %v1329
    %2703 = vmatprep.subr.bf16.mxu0 %v1328
    %2704 = vmatpush1.bf16.msra.mxu0 %v1327
    %2705 = vmatprep.subr.bf16.mxu0 %v1326
    %2706 = vmatpush1.bf16.msra.mxu0 %v1325
    %2707 = vmatprep.subr.bf16.mxu0 %v1324
    %2708 = vmatpush1.bf16.msra.mxu0 %v1323
    %2709 = vmatprep.subr.bf16.mxu0 %v1322
    %2710 = vmatpush1.bf16.msra.mxu0 %v1321
    %2711 = vmatprep.subr.bf16.mxu0 %v1320
    %2712 = vmatpush1.bf16.msra.mxu0 %v1319
    %2713 = vmatprep.subr.bf16.mxu0 %v1318
    %2714 = vmatpush1.bf16.msra.mxu0 %v1317
    %2715 = vmatprep.subr.bf16.mxu0 %v1316
    %2716 = vmatpush1.bf16.msra.mxu0 %v1315
    %2717 = vmatprep.subr.bf16.mxu0 %v1346
    %2718 = vmatpush2.bf16.msra.mxu0 %v1345
    %2719 = vmatprep.subr.bf16.mxu0 %v1344
    %2720 = vmatpush2.bf16.msra.mxu0 %v1343
    %2721 = vmatprep.subr.bf16.mxu0 %v1342
    %2722 = vmatpush2.bf16.msra.mxu0 %v1341
    %2723 = vmatprep.subr.bf16.mxu0 %v1340
    %2724 = vmatpush2.bf16.msra.mxu0 %v1339
    %2725 = vmatprep.subr.bf16.mxu0 %v1338
    %2726 = vmatpush2.bf16.msra.mxu0 %v1337
    %2727 = vmatprep.subr.bf16.mxu0 %v1336
    %2728 = vmatpush2.bf16.msra.mxu0 %v1335
    %2729 = vmatprep.subr.bf16.mxu0 %v1334
    %2730 = vmatpush2.bf16.msra.mxu0 %v1333
    %2731 = vmatprep.subr.bf16.mxu0 %v1332
    %2732 = vmatpush2.bf16.msra.mxu0 %v1331
    %2733 = vmatprep.mubr.bf16.mxu0 %v2477
    %2734 = vmatmul.mubr.bf16.gmra.mxu0 %v2700
    %v2735 = vpop.f32.mrf.mxu0
    %v2736 = vadd.f32 %v1415, %v2735
    %v2737 = vpop.f32.mrf.mxu0
    %v2738 = vadd.f32 %v1419, %v2737
    %v2739 = vpop.f32.mrf.mxu0
    %v2740 = vpop.f32.mrf.mxu0
    %2741 = vdwg.mxu0
    %2742 = vmatprep.subr.bf16.mxu0 %v1362
    %2743 = vmatpush1.bf16.msra.mxu0 %v1361
    %2744 = vmatprep.subr.bf16.mxu0 %v1360
    %2745 = vmatpush1.bf16.msra.mxu0 %v1359
    %2746 = vmatprep.subr.bf16.mxu0 %v1358
    %2747 = vmatpush1.bf16.msra.mxu0 %v1357
    %2748 = vmatprep.subr.bf16.mxu0 %v1356
    %2749 = vmatpush1.bf16.msra.mxu0 %v1355
    %2750 = vmatprep.subr.bf16.mxu0 %v1354
    %2751 = vmatpush1.bf16.msra.mxu0 %v1353
    %2752 = vmatprep.subr.bf16.mxu0 %v1352
    %2753 = vmatpush1.bf16.msra.mxu0 %v1351
    %2754 = vmatprep.subr.bf16.mxu0 %v1350
    %2755 = vmatpush1.bf16.msra.mxu0 %v1349
    %2756 = vmatprep.subr.bf16.mxu0 %v1348
    %2757 = vmatpush1.bf16.msra.mxu0 %v1347
    %2758 = vmatprep.subr.bf16.mxu0 0
    %2759 = vmatpush2.bf16.msra.mxu0 0
    %2760 = vmatprep.subr.bf16.mxu0 0
    %2761 = vmatpush2.bf16.msra.mxu0 0
    %2762 = vmatprep.subr.bf16.mxu0 0
    %2763 = vmatpush2.bf16.msra.mxu0 0
    %2764 = vmatprep.subr.bf16.mxu0 0
    %2765 = vmatpush2.bf16.msra.mxu0 0
    %2766 = vmatprep.subr.bf16.mxu0 0
    %2767 = vmatpush2.bf16.msra.mxu0 0
    %2768 = vmatprep.subr.bf16.mxu0 0
    %2769 = vmatpush2.bf16.msra.mxu0 0
    %2770 = vmatprep.subr.bf16.mxu0 0
    %2771 = vmatpush2.bf16.msra.mxu0 0
    %2772 = vmatprep.subr.bf16.mxu0 0
    %2773 = vmatpush2.bf16.msra.mxu0 0
    %2774 = vmatprep.mubr.bf16.mxu0 0
    %2775 = vmatmul.mubr.bf16.gmra.mxu0 %v2478
    %v2776 = vpop.f32.mrf.mxu0
    %v2777 = vadd.f32 %v2736, %v2776
    %v2778 = vpop.f32.mrf.mxu0
    %v2779 = vadd.f32 %v2738, %v2778
    %v2780 = vpop.f32.mrf.mxu0
    %v2781 = vpop.f32.mrf.mxu0
    %2782 = vdwg.mxu0
    %v2783 = vmax.f32 %v2777, 0.0
    %v2784 = vmax.f32 %v2779, 0.0
    %v2785 = vpack.c.bf16 %v2783, %v2783
    %v2786 = vpack.c.bf16 %v2784, %v2784
    %2787 = vmatprep.subr.bf16.mxu0 %v1794
    %2788 = vmatpush1.bf16.msra.mxu0 %v1793
    %2789 = vmatprep.subr.bf16.mxu0 %v1790
    %2790 = vmatpush1.bf16.msra.mxu0 %v1789
    %2791 = vmatprep.subr.bf16.mxu0 %v1786
    %2792 = vmatpush1.bf16.msra.mxu0 %v1785
    %2793 = vmatprep.subr.bf16.mxu0 %v1782
    %2794 = vmatpush1.bf16.msra.mxu0 %v1781
    %2795 = vmatprep.subr.bf16.mxu0 %v1778
    %2796 = vmatpush1.bf16.msra.mxu0 %v1777
    %2797 = vmatprep.subr.bf16.mxu0 %v1774
    %2798 = vmatpush1.bf16.msra.mxu0 %v1773
    %2799 = vmatprep.subr.bf16.mxu0 %v1770
    %2800 = vmatpush1.bf16.msra.mxu0 %v1769
    %2801 = vmatprep.subr.bf16.mxu0 %v1766
    %2802 = vmatpush1.bf16.msra.mxu0 %v1765
    %2803 = vmatprep.subr.bf16.mxu0 %v1826
    %2804 = vmatpush2.bf16.msra.mxu0 %v1825
    %2805 = vmatprep.subr.bf16.mxu0 %v1822
    %2806 = vmatpush2.bf16.msra.mxu0 %v1821
    %2807 = vmatprep.subr.bf16.mxu0 %v1818
    %2808 = vmatpush2.bf16.msra.mxu0 %v1817
    %2809 = vmatprep.subr.bf16.mxu0 %v1814
    %2810 = vmatpush2.bf16.msra.mxu0 %v1813
    %2811 = vmatprep.subr.bf16.mxu0 %v1810
    %2812 = vmatpush2.bf16.msra.mxu0 %v1809
    %2813 = vmatprep.subr.bf16.mxu0 %v1806
    %2814 = vmatpush2.bf16.msra.mxu0 %v1805
    %2815 = vmatprep.subr.bf16.mxu0 %v1802
    %2816 = vmatpush2.bf16.msra.mxu0 %v1801
    %2817 = vmatprep.subr.bf16.mxu0 %v1798
    %2818 = vmatpush2.bf16.msra.mxu0 %v1797
    %2819 = vmatprep.mubr.bf16.mxu0 %v2786
    %2820 = vmatmul.mubr.bf16.gmra.mxu0 %v2785
    %v2821 = vpop.f32.mrf.mxu0
    %v2822 = vadd.f32 %v1897, %v2821
    %v2823 = vpop.f32.mrf.mxu0
    %v2824 = vadd.f32 %v1901, %v2823
    %v2825 = vpop.f32.mrf.mxu0
    %v2826 = vpop.f32.mrf.mxu0
    %2827 = vdwg.mxu0
    %2828 = vmatprep.subr.bf16.mxu0 %v1796
    %2829 = vmatpush1.bf16.msra.mxu0 %v1795
    %2830 = vmatprep.subr.bf16.mxu0 %v1792
    %2831 = vmatpush1.bf16.msra.mxu0 %v1791
    %2832 = vmatprep.subr.bf16.mxu0 %v1788
    %2833 = vmatpush1.bf16.msra.mxu0 %v1787
    %2834 = vmatprep.subr.bf16.mxu0 %v1784
    %2835 = vmatpush1.bf16.msra.mxu0 %v1783
    %2836 = vmatprep.subr.bf16.mxu0 %v1780
    %2837 = vmatpush1.bf16.msra.mxu0 %v1779
    %2838 = vmatprep.subr.bf16.mxu0 %v1776
    %2839 = vmatpush1.bf16.msra.mxu0 %v1775
    %2840 = vmatprep.subr.bf16.mxu0 %v1772
    %2841 = vmatpush1.bf16.msra.mxu0 %v1771
    %2842 = vmatprep.subr.bf16.mxu0 %v1768
    %2843 = vmatpush1.bf16.msra.mxu0 %v1767
    %2844 = vmatprep.subr.bf16.mxu0 %v1828
    %2845 = vmatpush2.bf16.msra.mxu0 %v1827
    %2846 = vmatprep.subr.bf16.mxu0 %v1824
    %2847 = vmatpush2.bf16.msra.mxu0 %v1823
    %2848 = vmatprep.subr.bf16.mxu0 %v1820
    %2849 = vmatpush2.bf16.msra.mxu0 %v1819
    %2850 = vmatprep.subr.bf16.mxu0 %v1816
    %2851 = vmatpush2.bf16.msra.mxu0 %v1815
    %2852 = vmatprep.subr.bf16.mxu0 %v1812
    %2853 = vmatpush2.bf16.msra.mxu0 %v1811
    %2854 = vmatprep.subr.bf16.mxu0 %v1808
    %2855 = vmatpush2.bf16.msra.mxu0 %v1807
    %2856 = vmatprep.subr.bf16.mxu0 %v1804
    %2857 = vmatpush2.bf16.msra.mxu0 %v1803
    %2858 = vmatprep.subr.bf16.mxu0 %v1800
    %2859 = vmatpush2.bf16.msra.mxu0 %v1799
    %2860 = vmatprep.mubr.bf16.mxu0 %v2786
    %2861 = vmatmul.mubr.bf16.gmra.mxu0 %v2785
    %v2862 = vpop.f32.mrf.mxu0
    %v2863 = vadd.f32 %v1905, %v2862
    %v2864 = vpop.f32.mrf.mxu0
    %v2865 = vadd.f32 %v1909, %v2864
    %v2866 = vpop.f32.mrf.mxu0
    %v2867 = vpop.f32.mrf.mxu0
    %2868 = vdwg.mxu0
    %v2869 = vsel %vm1996, %v2822, -inf
    %v2870 = vsel %vm1996, %v2824, -inf
    %v2871 = vsel %vm1996, %v2863, -inf
    %v2872 = vsel %vm1996, %v2865, -inf
    %v2873 = vmax.f32 %v2869, %v2870
    %v2874 = vmax.f32 %v2871, %v2872
    %v2875 = vmax.f32 %v2873, %v2874
    %2876 = vmax.xlane.f32.xlu0 %v2875
    %v2877 = vpop.xlane.xlu0 %2876
    %vm2878 = vcmp.eq.f32.partialorder %v2822, %v2877
    %vm2879 = vcmp.eq.f32.partialorder %v2824, %v2877
    %vm2880 = vcmp.eq.f32.partialorder %v2863, %v2877
    %vm2881 = vcmp.eq.f32.partialorder %v2865, %v2877
    %v2882 = vsel %vm2878, %v1115, 512
    %v2883 = vsel %vm2879, %v1116, 512
    %v2884 = vsel %vm2880, %v1117, 512
    %v2885 = vsel %vm2881, %v1118, 512
    %v2886 = vsel %vm1996, %v2882, 2147483647
    %v2887 = vsel %vm1996, %v2883, 2147483647
    %v2888 = vsel %vm1996, %v2884, 2147483647
    %v2889 = vsel %vm1996, %v2885, 2147483647
    %vm2890 = vcmp.lt.s32.totalorder %v2886, %v2887
    %v2891 = vsel %vm2890, %v2886, %v2887
    %vm2892 = vcmp.lt.s32.totalorder %v2888, %v2889
    %v2893 = vsel %vm2892, %v2888, %v2889
    %vm2894 = vcmp.lt.s32.totalorder %v2891, %v2893
    %v2895 = vsel %vm2894, %v2891, %v2893
    %v2896 = vand.u32 %v2895, 65535
    %v2897 = vshra.s32 %v2895, 16
    %v2898 = vcvt.s32.f32 %v2896
    %v2899 = vcvt.s32.f32 %v2897
    %2900 = vmin.xlane.f32.xlu0 %v2899
    %v2901 = vpop.xlane.xlu0 %2900
    %vm2902 = vcmp.eq.f32.partialorder %v2899, %v2901
    %v2903 = vsel %vm2902, %v2898, inf
    %2904 = vmin.xlane.f32.xlu0 %v2903
    %v2905 = vpop.xlane.xlu0 %2904
    %v2906 = vcvt.f32.s32 %v2905
    %v2907 = vcvt.f32.s32 %v2901
    %v2908 = vshll.u32 %v2907, 16
    %v2909 = vadd.s32 %v2908, %v2906
    %vm2910 = vcmp.eq.s32.totalorder %v1115, 2
    %v2911 = vsel %vm2910, %v2909, %v2603
    %vm2912 = vcmp.eq.s32.totalorder %v1115, %v2909
    %vm2913 = vcmp.eq.s32.totalorder %v1116, %v2909
    %vm2914 = vcmp.eq.s32.totalorder %v1117, %v2909
    %vm2915 = vcmp.eq.s32.totalorder %v1118, %v2909
    %v2916 = vsel %vm2912, 1, 0
    %v2917 = vsel %vm2913, 1, 0
    %v2918 = vsel %vm2914, 1, 0
    %v2919 = vsel %vm2915, 1, 0
    %v2920 = vcvt.s32.f32 %v2916
    %v2921 = vcvt.s32.f32 %v2917
    %v2922 = vcvt.s32.f32 %v2918
    %v2923 = vcvt.s32.f32 %v2919
    %v2924 = vpack.c.bf16 %v2920, %v2920
    %v2925 = vpack.c.bf16 %v2921, %v2921
    %v2926 = vpack.c.bf16 %v2922, %v2922
    %v2927 = vpack.c.bf16 %v2923, %v2923
    %2928 = vmatprep.subr.bf16.mxu0 0
    %2929 = vmatpush1.bf16.msra.mxu0 %v2255
    %2930 = vmatprep.subr.bf16.mxu0 0
    %2931 = vmatpush1.bf16.msra.mxu0 %v2254
    %2932 = vmatprep.subr.bf16.mxu0 0
    %2933 = vmatpush1.bf16.msra.mxu0 %v2253
    %2934 = vmatprep.subr.bf16.mxu0 0
    %2935 = vmatpush1.bf16.msra.mxu0 %v2252
    %2936 = vmatprep.subr.bf16.mxu0 0
    %2937 = vmatpush1.bf16.msra.mxu0 %v2251
    %2938 = vmatprep.subr.bf16.mxu0 0
    %2939 = vmatpush1.bf16.msra.mxu0 %v2250
    %2940 = vmatprep.subr.bf16.mxu0 0
    %2941 = vmatpush1.bf16.msra.mxu0 %v2249
    %2942 = vmatprep.subr.bf16.mxu0 0
    %2943 = vmatpush1.bf16.msra.mxu0 %v2248
    %2944 = vmatprep.subr.bf16.mxu0 0
    %2945 = vmatpush2.bf16.msra.mxu0 %v2263
    %2946 = vmatprep.subr.bf16.mxu0 0
    %2947 = vmatpush2.bf16.msra.mxu0 %v2262
    %2948 = vmatprep.subr.bf16.mxu0 0
    %2949 = vmatpush2.bf16.msra.mxu0 %v2261
    %2950 = vmatprep.subr.bf16.mxu0 0
    %2951 = vmatpush2.bf16.msra.mxu0 %v2260
    %2952 = vmatprep.subr.bf16.mxu0 0
    %2953 = vmatpush2.bf16.msra.mxu0 %v2259
    %2954 = vmatprep.subr.bf16.mxu0 0
    %2955 = vmatpush2.bf16.msra.mxu0 %v2258
    %2956 = vmatprep.subr.bf16.mxu0 0
    %2957 = vmatpush2.bf16.msra.mxu0 %v2257
    %2958 = vmatprep.subr.bf16.mxu0 0
    %2959 = vmatpush2.bf16.msra.mxu0 %v2256
    %2960 = vmatprep.mubr.bf16.mxu0 %v2925
    %2961 = vmatmul.mubr.bf16.gmra.mxu0 %v2924
    %v2962 = vpop.f32.mrf.mxu0
    %v2963 = vadd.f32 0.0, %v2962
    %v2964 = vpop.f32.mrf.mxu0
    %v2965 = vpop.f32.mrf.mxu0
    %v2966 = vpop.f32.mrf.mxu0
    %2967 = vdwg.mxu0
    %2968 = vmatprep.subr.bf16.mxu0 0
    %2969 = vmatpush1.bf16.msra.mxu0 %v2271
    %2970 = vmatprep.subr.bf16.mxu0 0
    %2971 = vmatpush1.bf16.msra.mxu0 %v2270
    %2972 = vmatprep.subr.bf16.mxu0 0
    %2973 = vmatpush1.bf16.msra.mxu0 %v2269
    %2974 = vmatprep.subr.bf16.mxu0 0
    %2975 = vmatpush1.bf16.msra.mxu0 %v2268
    %2976 = vmatprep.subr.bf16.mxu0 0
    %2977 = vmatpush1.bf16.msra.mxu0 %v2267
    %2978 = vmatprep.subr.bf16.mxu0 0
    %2979 = vmatpush1.bf16.msra.mxu0 %v2266
    %2980 = vmatprep.subr.bf16.mxu0 0
    %2981 = vmatpush1.bf16.msra.mxu0 %v2265
    %2982 = vmatprep.subr.bf16.mxu0 0
    %2983 = vmatpush1.bf16.msra.mxu0 %v2264
    %2984 = vmatprep.subr.bf16.mxu0 0
    %2985 = vmatpush2.bf16.msra.mxu0 %v2279
    %2986 = vmatprep.subr.bf16.mxu0 0
    %2987 = vmatpush2.bf16.msra.mxu0 %v2278
    %2988 = vmatprep.subr.bf16.mxu0 0
    %2989 = vmatpush2.bf16.msra.mxu0 %v2277
    %2990 = vmatprep.subr.bf16.mxu0 0
    %2991 = vmatpush2.bf16.msra.mxu0 %v2276
    %2992 = vmatprep.subr.bf16.mxu0 0
    %2993 = vmatpush2.bf16.msra.mxu0 %v2275
    %2994 = vmatprep.subr.bf16.mxu0 0
    %2995 = vmatpush2.bf16.msra.mxu0 %v2274
    %2996 = vmatprep.subr.bf16.mxu0 0
    %2997 = vmatpush2.bf16.msra.mxu0 %v2273
    %2998 = vmatprep.subr.bf16.mxu0 0
    %2999 = vmatpush2.bf16.msra.mxu0 %v2272
    %3000 = vmatprep.mubr.bf16.mxu0 %v2927
    %3001 = vmatmul.mubr.bf16.gmra.mxu0 %v2926
    %v3002 = vpop.f32.mrf.mxu0
    %v3003 = vadd.f32 %v2963, %v3002
    %v3004 = vpop.f32.mrf.mxu0
    %v3005 = vpop.f32.mrf.mxu0
    %v3006 = vpop.f32.mrf.mxu0
    %3007 = vdwg.mxu0
    %v3008 = vpack.c.bf16 %v3003, %v3003
    %3009 = vmatprep.subr.bf16.mxu0 %v1330
    %3010 = vmatpush1.bf16.msra.mxu0 %v1329
    %3011 = vmatprep.subr.bf16.mxu0 %v1328
    %3012 = vmatpush1.bf16.msra.mxu0 %v1327
    %3013 = vmatprep.subr.bf16.mxu0 %v1326
    %3014 = vmatpush1.bf16.msra.mxu0 %v1325
    %3015 = vmatprep.subr.bf16.mxu0 %v1324
    %3016 = vmatpush1.bf16.msra.mxu0 %v1323
    %3017 = vmatprep.subr.bf16.mxu0 %v1322
    %3018 = vmatpush1.bf16.msra.mxu0 %v1321
    %3019 = vmatprep.subr.bf16.mxu0 %v1320
    %3020 = vmatpush1.bf16.msra.mxu0 %v1319
    %3021 = vmatprep.subr.bf16.mxu0 %v1318
    %3022 = vmatpush1.bf16.msra.mxu0 %v1317
    %3023 = vmatprep.subr.bf16.mxu0 %v1316
    %3024 = vmatpush1.bf16.msra.mxu0 %v1315
    %3025 = vmatprep.subr.bf16.mxu0 %v1346
    %3026 = vmatpush2.bf16.msra.mxu0 %v1345
    %3027 = vmatprep.subr.bf16.mxu0 %v1344
    %3028 = vmatpush2.bf16.msra.mxu0 %v1343
    %3029 = vmatprep.subr.bf16.mxu0 %v1342
    %3030 = vmatpush2.bf16.msra.mxu0 %v1341
    %3031 = vmatprep.subr.bf16.mxu0 %v1340
    %3032 = vmatpush2.bf16.msra.mxu0 %v1339
    %3033 = vmatprep.subr.bf16.mxu0 %v1338
    %3034 = vmatpush2.bf16.msra.mxu0 %v1337
    %3035 = vmatprep.subr.bf16.mxu0 %v1336
    %3036 = vmatpush2.bf16.msra.mxu0 %v1335
    %3037 = vmatprep.subr.bf16.mxu0 %v1334
    %3038 = vmatpush2.bf16.msra.mxu0 %v1333
    %3039 = vmatprep.subr.bf16.mxu0 %v1332
    %3040 = vmatpush2.bf16.msra.mxu0 %v1331
    %3041 = vmatprep.mubr.bf16.mxu0 %v2785
    %3042 = vmatmul.mubr.bf16.gmra.mxu0 %v3008
    %v3043 = vpop.f32.mrf.mxu0
    %v3044 = vadd.f32 %v1415, %v3043
    %v3045 = vpop.f32.mrf.mxu0
    %v3046 = vadd.f32 %v1419, %v3045
    %v3047 = vpop.f32.mrf.mxu0
    %v3048 = vpop.f32.mrf.mxu0
    %3049 = vdwg.mxu0
    %3050 = vmatprep.subr.bf16.mxu0 %v1362
    %3051 = vmatpush1.bf16.msra.mxu0 %v1361
    %3052 = vmatprep.subr.bf16.mxu0 %v1360
    %3053 = vmatpush1.bf16.msra.mxu0 %v1359
    %3054 = vmatprep.subr.bf16.mxu0 %v1358
    %3055 = vmatpush1.bf16.msra.mxu0 %v1357
    %3056 = vmatprep.subr.bf16.mxu0 %v1356
    %3057 = vmatpush1.bf16.msra.mxu0 %v1355
    %3058 = vmatprep.subr.bf16.mxu0 %v1354
    %3059 = vmatpush1.bf16.msra.mxu0 %v1353
    %3060 = vmatprep.subr.bf16.mxu0 %v1352
    %3061 = vmatpush1.bf16.msra.mxu0 %v1351
    %3062 = vmatprep.subr.bf16.mxu0 %v1350
    %3063 = vmatpush1.bf16.msra.mxu0 %v1349
    %3064 = vmatprep.subr.bf16.mxu0 %v1348
    %3065 = vmatpush1.bf16.msra.mxu0 %v1347
    %3066 = vmatprep.subr.bf16.mxu0 0
    %3067 = vmatpush2.bf16.msra.mxu0 0
    %3068 = vmatprep.subr.bf16.mxu0 0
    %3069 = vmatpush2.bf16.msra.mxu0 0
    %3070 = vmatprep.subr.bf16.mxu0 0
    %3071 = vmatpush2.bf16.msra.mxu0 0
    %3072 = vmatprep.subr.bf16.mxu0 0
    %3073 = vmatpush2.bf16.msra.mxu0 0
    %3074 = vmatprep.subr.bf16.mxu0 0
    %3075 = vmatpush2.bf16.msra.mxu0 0
    %3076 = vmatprep.subr.bf16.mxu0 0
    %3077 = vmatpush2.bf16.msra.mxu0 0
    %3078 = vmatprep.subr.bf16.mxu0 0
    %3079 = vmatpush2.bf16.msra.mxu0 0
    %3080 = vmatprep.subr.bf16.mxu0 0
    %3081 = vmatpush2.bf16.msra.mxu0 0
    %3082 = vmatprep.mubr.bf16.mxu0 0
    %3083 = vmatmul.mubr.bf16.gmra.mxu0 %v2786
    %v3084 = vpop.f32.mrf.mxu0
    %v3085 = vadd.f32 %v3044, %v3084
    %v3086 = vpop.f32.mrf.mxu0
    %v3087 = vadd.f32 %v3046, %v3086
    %v3088 = vpop.f32.mrf.mxu0
    %v3089 = vpop.f32.mrf.mxu0
    %3090 = vdwg.mxu0
    %v3091 = vmax.f32 %v3085, 0.0
    %v3092 = vmax.f32 %v3087, 0.0
    %v3093 = vpack.c.bf16 %v3091, %v3091
    %v3094 = vpack.c.bf16 %v3092, %v3092
    %3095 = vmatprep.subr.bf16.mxu0 %v1794
    %3096 = vmatpush1.bf16.msra.mxu0 %v1793
    %3097 = vmatprep.subr.bf16.mxu0 %v1790
    %3098 = vmatpush1.bf16.msra.mxu0 %v1789
    %3099 = vmatprep.subr.bf16.mxu0 %v1786
    %3100 = vmatpush1.bf16.msra.mxu0 %v1785
    %3101 = vmatprep.subr.bf16.mxu0 %v1782
    %3102 = vmatpush1.bf16.msra.mxu0 %v1781
    %3103 = vmatprep.subr.bf16.mxu0 %v1778
    %3104 = vmatpush1.bf16.msra.mxu0 %v1777
    %3105 = vmatprep.subr.bf16.mxu0 %v1774
    %3106 = vmatpush1.bf16.msra.mxu0 %v1773
    %3107 = vmatprep.subr.bf16.mxu0 %v1770
    %3108 = vmatpush1.bf16.msra.mxu0 %v1769
    %3109 = vmatprep.subr.bf16.mxu0 %v1766
    %3110 = vmatpush1.bf16.msra.mxu0 %v1765
    %3111 = vmatprep.subr.bf16.mxu0 %v1826
    %3112 = vmatpush2.bf16.msra.mxu0 %v1825
    %3113 = vmatprep.subr.bf16.mxu0 %v1822
    %3114 = vmatpush2.bf16.msra.mxu0 %v1821
    %3115 = vmatprep.subr.bf16.mxu0 %v1818
    %3116 = vmatpush2.bf16.msra.mxu0 %v1817
    %3117 = vmatprep.subr.bf16.mxu0 %v1814
    %3118 = vmatpush2.bf16.msra.mxu0 %v1813
    %3119 = vmatprep.subr.bf16.mxu0 %v1810
    %3120 = vmatpush2.bf16.msra.mxu0 %v1809
    %3121 = vmatprep.subr.bf16.mxu0 %v1806
    %3122 = vmatpush2.bf16.msra.mxu0 %v1805
    %3123 = vmatprep.subr.bf16.mxu0 %v1802
    %3124 = vmatpush2.bf16.msra.mxu0 %v1801
    %3125 = vmatprep.subr.bf16.mxu0 %v1798
    %3126 = vmatpush2.bf16.msra.mxu0 %v1797
    %3127 = vmatprep.mubr.bf16.mxu0 %v3094
    %3128 = vmatmul.mubr.bf16.gmra.mxu0 %v3093
    %v3129 = vpop.f32.mrf.mxu0
    %v3130 = vadd.f32 %v1897, %v3129
    %v3131 = vpop.f32.mrf.mxu0
    %v3132 = vadd.f32 %v1901, %v3131
    %v3133 = vpop.f32.mrf.mxu0
    %v3134 = vpop.f32.mrf.mxu0
    %3135 = vdwg.mxu0
    %3136 = vmatprep.subr.bf16.mxu0 %v1796
    %3137 = vmatpush1.bf16.msra.mxu0 %v1795
    %3138 = vmatprep.subr.bf16.mxu0 %v1792
    %3139 = vmatpush1.bf16.msra.mxu0 %v1791
    %3140 = vmatprep.subr.bf16.mxu0 %v1788
    %3141 = vmatpush1.bf16.msra.mxu0 %v1787
    %3142 = vmatprep.subr.bf16.mxu0 %v1784
    %3143 = vmatpush1.bf16.msra.mxu0 %v1783
    %3144 = vmatprep.subr.bf16.mxu0 %v1780
    %3145 = vmatpush1.bf16.msra.mxu0 %v1779
    %3146 = vmatprep.subr.bf16.mxu0 %v1776
    %3147 = vmatpush1.bf16.msra.mxu0 %v1775
    %3148 = vmatprep.subr.bf16.mxu0 %v1772
    %3149 = vmatpush1.bf16.msra.mxu0 %v1771
    %3150 = vmatprep.subr.bf16.mxu0 %v1768
    %3151 = vmatpush1.bf16.msra.mxu0 %v1767
    %3152 = vmatprep.subr.bf16.mxu0 %v1828
    %3153 = vmatpush2.bf16.msra.mxu0 %v1827
    %3154 = vmatprep.subr.bf16.mxu0 %v1824
    %3155 = vmatpush2.bf16.msra.mxu0 %v1823
    %3156 = vmatprep.subr.bf16.mxu0 %v1820
    %3157 = vmatpush2.bf16.msra.mxu0 %v1819
    %3158 = vmatprep.subr.bf16.mxu0 %v1816
    %3159 = vmatpush2.bf16.msra.mxu0 %v1815
    %3160 = vmatprep.subr.bf16.mxu0 %v1812
    %3161 = vmatpush2.bf16.msra.mxu0 %v1811
    %3162 = vmatprep.subr.bf16.mxu0 %v1808
    %3163 = vmatpush2.bf16.msra.mxu0 %v1807
    %3164 = vmatprep.subr.bf16.mxu0 %v1804
    %3165 = vmatpush2.bf16.msra.mxu0 %v1803
    %3166 = vmatprep.subr.bf16.mxu0 %v1800
    %3167 = vmatpush2.bf16.msra.mxu0 %v1799
    %3168 = vmatprep.mubr.bf16.mxu0 %v3094
    %3169 = vmatmul.mubr.bf16.gmra.mxu0 %v3093
    %v3170 = vpop.f32.mrf.mxu0
    %v3171 = vadd.f32 %v1905, %v3170
    %v3172 = vpop.f32.mrf.mxu0
    %v3173 = vadd.f32 %v1909, %v3172
    %v3174 = vpop.f32.mrf.mxu0
    %v3175 = vpop.f32.mrf.mxu0
    %3176 = vdwg.mxu0
    %v3177 = vsel %vm1996, %v3130, -inf
    %v3178 = vsel %vm1996, %v3132, -inf
    %v3179 = vsel %vm1996, %v3171, -inf
    %v3180 = vsel %vm1996, %v3173, -inf
    %v3181 = vmax.f32 %v3177, %v3178
    %v3182 = vmax.f32 %v3179, %v3180
    %v3183 = vmax.f32 %v3181, %v3182
    %3184 = vmax.xlane.f32.xlu0 %v3183
    %v3185 = vpop.xlane.xlu0 %3184
    %vm3186 = vcmp.eq.f32.partialorder %v3130, %v3185
    %vm3187 = vcmp.eq.f32.partialorder %v3132, %v3185
    %vm3188 = vcmp.eq.f32.partialorder %v3171, %v3185
    %vm3189 = vcmp.eq.f32.partialorder %v3173, %v3185
    %v3190 = vsel %vm3186, %v1115, 512
    %v3191 = vsel %vm3187, %v1116, 512
    %v3192 = vsel %vm3188, %v1117, 512
    %v3193 = vsel %vm3189, %v1118, 512
    %v3194 = vsel %vm1996, %v3190, 2147483647
    %v3195 = vsel %vm1996, %v3191, 2147483647
    %v3196 = vsel %vm1996, %v3192, 2147483647
    %v3197 = vsel %vm1996, %v3193, 2147483647
    %vm3198 = vcmp.lt.s32.totalorder %v3194, %v3195
    %v3199 = vsel %vm3198, %v3194, %v3195
    %vm3200 = vcmp.lt.s32.totalorder %v3196, %v3197
    %v3201 = vsel %vm3200, %v3196, %v3197
    %vm3202 = vcmp.lt.s32.totalorder %v3199, %v3201
    %v3203 = vsel %vm3202, %v3199, %v3201
    %v3204 = vand.u32 %v3203, 65535
    %v3205 = vshra.s32 %v3203, 16
    %v3206 = vcvt.s32.f32 %v3204
    %v3207 = vcvt.s32.f32 %v3205
    %3208 = vmin.xlane.f32.xlu0 %v3207
    %v3209 = vpop.xlane.xlu0 %3208
    %vm3210 = vcmp.eq.f32.partialorder %v3207, %v3209
    %v3211 = vsel %vm3210, %v3206, inf
    %3212 = vmin.xlane.f32.xlu0 %v3211
    %v3213 = vpop.xlane.xlu0 %3212
    %v3214 = vcvt.f32.s32 %v3213
    %v3215 = vcvt.f32.s32 %v3209
    %v3216 = vshll.u32 %v3215, 16
    %v3217 = vadd.s32 %v3216, %v3214
    %vm3218 = vcmp.eq.s32.totalorder %v1115, 3
    %v3219 = vsel %vm3218, %v3217, %v2911
    %vm3220 = vcmp.eq.s32.totalorder %v1115, %v3217
    %vm3221 = vcmp.eq.s32.totalorder %v1116, %v3217
    %vm3222 = vcmp.eq.s32.totalorder %v1117, %v3217
    %vm3223 = vcmp.eq.s32.totalorder %v1118, %v3217
    %v3224 = vsel %vm3220, 1, 0
    %v3225 = vsel %vm3221, 1, 0
    %v3226 = vsel %vm3222, 1, 0
    %v3227 = vsel %vm3223, 1, 0
    %v3228 = vcvt.s32.f32 %v3224
    %v3229 = vcvt.s32.f32 %v3225
    %v3230 = vcvt.s32.f32 %v3226
    %v3231 = vcvt.s32.f32 %v3227
    %v3232 = vpack.c.bf16 %v3228, %v3228
    %v3233 = vpack.c.bf16 %v3229, %v3229
    %v3234 = vpack.c.bf16 %v3230, %v3230
    %v3235 = vpack.c.bf16 %v3231, %v3231
    %3236 = vmatprep.subr.bf16.mxu0 0
    %3237 = vmatpush1.bf16.msra.mxu0 %v2255
    %3238 = vmatprep.subr.bf16.mxu0 0
    %3239 = vmatpush1.bf16.msra.mxu0 %v2254
    %3240 = vmatprep.subr.bf16.mxu0 0
    %3241 = vmatpush1.bf16.msra.mxu0 %v2253
    %3242 = vmatprep.subr.bf16.mxu0 0
    %3243 = vmatpush1.bf16.msra.mxu0 %v2252
    %3244 = vmatprep.subr.bf16.mxu0 0
    %3245 = vmatpush1.bf16.msra.mxu0 %v2251
    %3246 = vmatprep.subr.bf16.mxu0 0
    %3247 = vmatpush1.bf16.msra.mxu0 %v2250
    %3248 = vmatprep.subr.bf16.mxu0 0
    %3249 = vmatpush1.bf16.msra.mxu0 %v2249
    %3250 = vmatprep.subr.bf16.mxu0 0
    %3251 = vmatpush1.bf16.msra.mxu0 %v2248
    %3252 = vmatprep.subr.bf16.mxu0 0
    %3253 = vmatpush2.bf16.msra.mxu0 %v2263
    %3254 = vmatprep.subr.bf16.mxu0 0
    %3255 = vmatpush2.bf16.msra.mxu0 %v2262
    %3256 = vmatprep.subr.bf16.mxu0 0
    %3257 = vmatpush2.bf16.msra.mxu0 %v2261
    %3258 = vmatprep.subr.bf16.mxu0 0
    %3259 = vmatpush2.bf16.msra.mxu0 %v2260
    %3260 = vmatprep.subr.bf16.mxu0 0
    %3261 = vmatpush2.bf16.msra.mxu0 %v2259
    %3262 = vmatprep.subr.bf16.mxu0 0
    %3263 = vmatpush2.bf16.msra.mxu0 %v2258
    %3264 = vmatprep.subr.bf16.mxu0 0
    %3265 = vmatpush2.bf16.msra.mxu0 %v2257
    %3266 = vmatprep.subr.bf16.mxu0 0
    %3267 = vmatpush2.bf16.msra.mxu0 %v2256
    %3268 = vmatprep.mubr.bf16.mxu0 %v3233
    %3269 = vmatmul.mubr.bf16.gmra.mxu0 %v3232
    %v3270 = vpop.f32.mrf.mxu0
    %v3271 = vadd.f32 0.0, %v3270
    %v3272 = vpop.f32.mrf.mxu0
    %v3273 = vpop.f32.mrf.mxu0
    %v3274 = vpop.f32.mrf.mxu0
    %3275 = vdwg.mxu0
    %3276 = vmatprep.subr.bf16.mxu0 0
    %3277 = vmatpush1.bf16.msra.mxu0 %v2271
    %3278 = vmatprep.subr.bf16.mxu0 0
    %3279 = vmatpush1.bf16.msra.mxu0 %v2270
    %3280 = vmatprep.subr.bf16.mxu0 0
    %3281 = vmatpush1.bf16.msra.mxu0 %v2269
    %3282 = vmatprep.subr.bf16.mxu0 0
    %3283 = vmatpush1.bf16.msra.mxu0 %v2268
    %3284 = vmatprep.subr.bf16.mxu0 0
    %3285 = vmatpush1.bf16.msra.mxu0 %v2267
    %3286 = vmatprep.subr.bf16.mxu0 0
    %3287 = vmatpush1.bf16.msra.mxu0 %v2266
    %3288 = vmatprep.subr.bf16.mxu0 0
    %3289 = vmatpush1.bf16.msra.mxu0 %v2265
    %3290 = vmatprep.subr.bf16.mxu0 0
    %3291 = vmatpush1.bf16.msra.mxu0 %v2264
    %3292 = vmatprep.subr.bf16.mxu0 0
    %3293 = vmatpush2.bf16.msra.mxu0 %v2279
    %3294 = vmatprep.subr.bf16.mxu0 0
    %3295 = vmatpush2.bf16.msra.mxu0 %v2278
    %3296 = vmatprep.subr.bf16.mxu0 0
    %3297 = vmatpush2.bf16.msra.mxu0 %v2277
    %3298 = vmatprep.subr.bf16.mxu0 0
    %3299 = vmatpush2.bf16.msra.mxu0 %v2276
    %3300 = vmatprep.subr.bf16.mxu0 0
    %3301 = vmatpush2.bf16.msra.mxu0 %v2275
    %3302 = vmatprep.subr.bf16.mxu0 0
    %3303 = vmatpush2.bf16.msra.mxu0 %v2274
    %3304 = vmatprep.subr.bf16.mxu0 0
    %3305 = vmatpush2.bf16.msra.mxu0 %v2273
    %3306 = vmatprep.subr.bf16.mxu0 0
    %3307 = vmatpush2.bf16.msra.mxu0 %v2272
    %3308 = vmatprep.mubr.bf16.mxu0 %v3235
    %3309 = vmatmul.mubr.bf16.gmra.mxu0 %v3234
    %v3310 = vpop.f32.mrf.mxu0
    %v3311 = vadd.f32 %v3271, %v3310
    %v3312 = vpop.f32.mrf.mxu0
    %v3313 = vpop.f32.mrf.mxu0
    %v3314 = vpop.f32.mrf.mxu0
    %3315 = vdwg.mxu0
    %v3316 = vpack.c.bf16 %v3311, %v3311
    %3317 = vmatprep.subr.bf16.mxu0 %v1330
    %3318 = vmatpush1.bf16.msra.mxu0 %v1329
    %3319 = vmatprep.subr.bf16.mxu0 %v1328
    %3320 = vmatpush1.bf16.msra.mxu0 %v1327
    %3321 = vmatprep.subr.bf16.mxu0 %v1326
    %3322 = vmatpush1.bf16.msra.mxu0 %v1325
    %3323 = vmatprep.subr.bf16.mxu0 %v1324
    %3324 = vmatpush1.bf16.msra.mxu0 %v1323
    %3325 = vmatprep.subr.bf16.mxu0 %v1322
    %3326 = vmatpush1.bf16.msra.mxu0 %v1321
    %3327 = vmatprep.subr.bf16.mxu0 %v1320
    %3328 = vmatpush1.bf16.msra.mxu0 %v1319
    %3329 = vmatprep.subr.bf16.mxu0 %v1318
    %3330 = vmatpush1.bf16.msra.mxu0 %v1317
    %3331 = vmatprep.subr.bf16.mxu0 %v1316
    %3332 = vmatpush1.bf16.msra.mxu0 %v1315
    %3333 = vmatprep.subr.bf16.mxu0 %v1346
    %3334 = vmatpush2.bf16.msra.mxu0 %v1345
    %3335 = vmatprep.subr.bf16.mxu0 %v1344
    %3336 = vmatpush2.bf16.msra.mxu0 %v1343
    %3337 = vmatprep.subr.bf16.mxu0 %v1342
    %3338 = vmatpush2.bf16.msra.mxu0 %v1341
    %3339 = vmatprep.subr.bf16.mxu0 %v1340
    %3340 = vmatpush2.bf16.msra.mxu0 %v1339
    %3341 = vmatprep.subr.bf16.mxu0 %v1338
    %3342 = vmatpush2.bf16.msra.mxu0 %v1337
    %3343 = vmatprep.subr.bf16.mxu0 %v1336
    %3344 = vmatpush2.bf16.msra.mxu0 %v1335
    %3345 = vmatprep.subr.bf16.mxu0 %v1334
    %3346 = vmatpush2.bf16.msra.mxu0 %v1333
    %3347 = vmatprep.subr.bf16.mxu0 %v1332
    %3348 = vmatpush2.bf16.msra.mxu0 %v1331
    %3349 = vmatprep.mubr.bf16.mxu0 %v3093
    %3350 = vmatmul.mubr.bf16.gmra.mxu0 %v3316
    %v3351 = vpop.f32.mrf.mxu0
    %v3352 = vadd.f32 %v1415, %v3351
    %v3353 = vpop.f32.mrf.mxu0
    %v3354 = vadd.f32 %v1419, %v3353
    %v3355 = vpop.f32.mrf.mxu0
    %v3356 = vpop.f32.mrf.mxu0
    %3357 = vdwg.mxu0
    %3358 = vmatprep.subr.bf16.mxu0 %v1362
    %3359 = vmatpush1.bf16.msra.mxu0 %v1361
    %3360 = vmatprep.subr.bf16.mxu0 %v1360
    %3361 = vmatpush1.bf16.msra.mxu0 %v1359
    %3362 = vmatprep.subr.bf16.mxu0 %v1358
    %3363 = vmatpush1.bf16.msra.mxu0 %v1357
    %3364 = vmatprep.subr.bf16.mxu0 %v1356
    %3365 = vmatpush1.bf16.msra.mxu0 %v1355
    %3366 = vmatprep.subr.bf16.mxu0 %v1354
    %3367 = vmatpush1.bf16.msra.mxu0 %v1353
    %3368 = vmatprep.subr.bf16.mxu0 %v1352
    %3369 = vmatpush1.bf16.msra.mxu0 %v1351
    %3370 = vmatprep.subr.bf16.mxu0 %v1350
    %3371 = vmatpush1.bf16.msra.mxu0 %v1349
    %3372 = vmatprep.subr.bf16.mxu0 %v1348
    %3373 = vmatpush1.bf16.msra.mxu0 %v1347
    %3374 = vmatprep.subr.bf16.mxu0 0
    %3375 = vmatpush2.bf16.msra.mxu0 0
    %3376 = vmatprep.subr.bf16.mxu0 0
    %3377 = vmatpush2.bf16.msra.mxu0 0
    %3378 = vmatprep.subr.bf16.mxu0 0
    %3379 = vmatpush2.bf16.msra.mxu0 0
    %3380 = vmatprep.subr.bf16.mxu0 0
    %3381 = vmatpush2.bf16.msra.mxu0 0
    %3382 = vmatprep.subr.bf16.mxu0 0
    %3383 = vmatpush2.bf16.msra.mxu0 0
    %3384 = vmatprep.subr.bf16.mxu0 0
    %3385 = vmatpush2.bf16.msra.mxu0 0
    %3386 = vmatprep.subr.bf16.mxu0 0
    %3387 = vmatpush2.bf16.msra.mxu0 0
    %3388 = vmatprep.subr.bf16.mxu0 0
    %3389 = vmatpush2.bf16.msra.mxu0 0
    %3390 = vmatprep.mubr.bf16.mxu0 0
    %3391 = vmatmul.mubr.bf16.gmra.mxu0 %v3094
    %v3392 = vpop.f32.mrf.mxu0
    %v3393 = vadd.f32 %v3352, %v3392
    %v3394 = vpop.f32.mrf.mxu0
    %v3395 = vadd.f32 %v3354, %v3394
    %v3396 = vpop.f32.mrf.mxu0
    %v3397 = vpop.f32.mrf.mxu0
    %3398 = vdwg.mxu0
    %v3399 = vmax.f32 %v3393, 0.0
    %v3400 = vmax.f32 %v3395, 0.0
    %v3401 = vpack.c.bf16 %v3399, %v3399
    %v3402 = vpack.c.bf16 %v3400, %v3400
    %3403 = vmatprep.subr.bf16.mxu0 %v1794
    %3404 = vmatpush1.bf16.msra.mxu0 %v1793
    %3405 = vmatprep.subr.bf16.mxu0 %v1790
    %3406 = vmatpush1.bf16.msra.mxu0 %v1789
    %3407 = vmatprep.subr.bf16.mxu0 %v1786
    %3408 = vmatpush1.bf16.msra.mxu0 %v1785
    %3409 = vmatprep.subr.bf16.mxu0 %v1782
    %3410 = vmatpush1.bf16.msra.mxu0 %v1781
    %3411 = vmatprep.subr.bf16.mxu0 %v1778
    %3412 = vmatpush1.bf16.msra.mxu0 %v1777
    %3413 = vmatprep.subr.bf16.mxu0 %v1774
    %3414 = vmatpush1.bf16.msra.mxu0 %v1773
    %3415 = vmatprep.subr.bf16.mxu0 %v1770
    %3416 = vmatpush1.bf16.msra.mxu0 %v1769
    %3417 = vmatprep.subr.bf16.mxu0 %v1766
    %3418 = vmatpush1.bf16.msra.mxu0 %v1765
    %3419 = vmatprep.subr.bf16.mxu0 %v1826
    %3420 = vmatpush2.bf16.msra.mxu0 %v1825
    %3421 = vmatprep.subr.bf16.mxu0 %v1822
    %3422 = vmatpush2.bf16.msra.mxu0 %v1821
    %3423 = vmatprep.subr.bf16.mxu0 %v1818
    %3424 = vmatpush2.bf16.msra.mxu0 %v1817
    %3425 = vmatprep.subr.bf16.mxu0 %v1814
    %3426 = vmatpush2.bf16.msra.mxu0 %v1813
    %3427 = vmatprep.subr.bf16.mxu0 %v1810
    %3428 = vmatpush2.bf16.msra.mxu0 %v1809
    %3429 = vmatprep.subr.bf16.mxu0 %v1806
    %3430 = vmatpush2.bf16.msra.mxu0 %v1805
    %3431 = vmatprep.subr.bf16.mxu0 %v1802
    %3432 = vmatpush2.bf16.msra.mxu0 %v1801
    %3433 = vmatprep.subr.bf16.mxu0 %v1798
    %3434 = vmatpush2.bf16.msra.mxu0 %v1797
    %3435 = vmatprep.mubr.bf16.mxu0 %v3402
    %3436 = vmatmul.mubr.bf16.gmra.mxu0 %v3401
    %v3437 = vpop.f32.mrf.mxu0
    %v3438 = vadd.f32 %v1897, %v3437
    %v3439 = vpop.f32.mrf.mxu0
    %v3440 = vadd.f32 %v1901, %v3439
    %v3441 = vpop.f32.mrf.mxu0
    %v3442 = vpop.f32.mrf.mxu0
    %3443 = vdwg.mxu0
    %3444 = vmatprep.subr.bf16.mxu0 %v1796
    %3445 = vmatpush1.bf16.msra.mxu0 %v1795
    %3446 = vmatprep.subr.bf16.mxu0 %v1792
    %3447 = vmatpush1.bf16.msra.mxu0 %v1791
    %3448 = vmatprep.subr.bf16.mxu0 %v1788
    %3449 = vmatpush1.bf16.msra.mxu0 %v1787
    %3450 = vmatprep.subr.bf16.mxu0 %v1784
    %3451 = vmatpush1.bf16.msra.mxu0 %v1783
    %3452 = vmatprep.subr.bf16.mxu0 %v1780
    %3453 = vmatpush1.bf16.msra.mxu0 %v1779
    %3454 = vmatprep.subr.bf16.mxu0 %v1776
    %3455 = vmatpush1.bf16.msra.mxu0 %v1775
    %3456 = vmatprep.subr.bf16.mxu0 %v1772
    %3457 = vmatpush1.bf16.msra.mxu0 %v1771
    %3458 = vmatprep.subr.bf16.mxu0 %v1768
    %3459 = vmatpush1.bf16.msra.mxu0 %v1767
    %3460 = vmatprep.subr.bf16.mxu0 %v1828
    %3461 = vmatpush2.bf16.msra.mxu0 %v1827
    %3462 = vmatprep.subr.bf16.mxu0 %v1824
    %3463 = vmatpush2.bf16.msra.mxu0 %v1823
    %3464 = vmatprep.subr.bf16.mxu0 %v1820
    %3465 = vmatpush2.bf16.msra.mxu0 %v1819
    %3466 = vmatprep.subr.bf16.mxu0 %v1816
    %3467 = vmatpush2.bf16.msra.mxu0 %v1815
    %3468 = vmatprep.subr.bf16.mxu0 %v1812
    %3469 = vmatpush2.bf16.msra.mxu0 %v1811
    %3470 = vmatprep.subr.bf16.mxu0 %v1808
    %3471 = vmatpush2.bf16.msra.mxu0 %v1807
    %3472 = vmatprep.subr.bf16.mxu0 %v1804
    %3473 = vmatpush2.bf16.msra.mxu0 %v1803
    %3474 = vmatprep.subr.bf16.mxu0 %v1800
    %3475 = vmatpush2.bf16.msra.mxu0 %v1799
    %3476 = vmatprep.mubr.bf16.mxu0 %v3402
    %3477 = vmatmul.mubr.bf16.gmra.mxu0 %v3401
    %v3478 = vpop.f32.mrf.mxu0
    %v3479 = vadd.f32 %v1905, %v3478
    %v3480 = vpop.f32.mrf.mxu0
    %v3481 = vadd.f32 %v1909, %v3480
    %v3482 = vpop.f32.mrf.mxu0
    %v3483 = vpop.f32.mrf.mxu0
    %3484 = vdwg.mxu0
    %v3485 = vsel %vm1996, %v3438, -inf
    %v3486 = vsel %vm1996, %v3440, -inf
    %v3487 = vsel %vm1996, %v3479, -inf
    %v3488 = vsel %vm1996, %v3481, -inf
    %v3489 = vmax.f32 %v3485, %v3486
    %v3490 = vmax.f32 %v3487, %v3488
    %v3491 = vmax.f32 %v3489, %v3490
    %3492 = vmax.xlane.f32.xlu0 %v3491
    %v3493 = vpop.xlane.xlu0 %3492
    %vm3494 = vcmp.eq.f32.partialorder %v3438, %v3493
    %vm3495 = vcmp.eq.f32.partialorder %v3440, %v3493
    %vm3496 = vcmp.eq.f32.partialorder %v3479, %v3493
    %vm3497 = vcmp.eq.f32.partialorder %v3481, %v3493
    %v3498 = vsel %vm3494, %v1115, 512
    %v3499 = vsel %vm3495, %v1116, 512
    %v3500 = vsel %vm3496, %v1117, 512
    %v3501 = vsel %vm3497, %v1118, 512
    %v3502 = vsel %vm1996, %v3498, 2147483647
    %v3503 = vsel %vm1996, %v3499, 2147483647
    %v3504 = vsel %vm1996, %v3500, 2147483647
    %v3505 = vsel %vm1996, %v3501, 2147483647
    %vm3506 = vcmp.lt.s32.totalorder %v3502, %v3503
    %v3507 = vsel %vm3506, %v3502, %v3503
    %vm3508 = vcmp.lt.s32.totalorder %v3504, %v3505
    %v3509 = vsel %vm3508, %v3504, %v3505
    %vm3510 = vcmp.lt.s32.totalorder %v3507, %v3509
    %v3511 = vsel %vm3510, %v3507, %v3509
    %v3512 = vand.u32 %v3511, 65535
    %v3513 = vshra.s32 %v3511, 16
    %v3514 = vcvt.s32.f32 %v3512
    %v3515 = vcvt.s32.f32 %v3513
    %3516 = vmin.xlane.f32.xlu0 %v3515
    %v3517 = vpop.xlane.xlu0 %3516
    %vm3518 = vcmp.eq.f32.partialorder %v3515, %v3517
    %v3519 = vsel %vm3518, %v3514, inf
    %3520 = vmin.xlane.f32.xlu0 %v3519
    %v3521 = vpop.xlane.xlu0 %3520
    %v3522 = vcvt.f32.s32 %v3521
    %v3523 = vcvt.f32.s32 %v3517
    %v3524 = vshll.u32 %v3523, 16
    %v3525 = vadd.s32 %v3524, %v3522
    %vm3526 = vcmp.eq.s32.totalorder %v1115, 4
    %v3527 = vsel %vm3526, %v3525, %v3219
    %vm3528 = vcmp.eq.s32.totalorder %v1115, %v3525
    %vm3529 = vcmp.eq.s32.totalorder %v1116, %v3525
    %vm3530 = vcmp.eq.s32.totalorder %v1117, %v3525
    %vm3531 = vcmp.eq.s32.totalorder %v1118, %v3525
    %v3532 = vsel %vm3528, 1, 0
    %v3533 = vsel %vm3529, 1, 0
    %v3534 = vsel %vm3530, 1, 0
    %v3535 = vsel %vm3531, 1, 0
    %v3536 = vcvt.s32.f32 %v3532
    %v3537 = vcvt.s32.f32 %v3533
    %v3538 = vcvt.s32.f32 %v3534
    %v3539 = vcvt.s32.f32 %v3535
    %v3540 = vpack.c.bf16 %v3536, %v3536
    %v3541 = vpack.c.bf16 %v3537, %v3537
    %v3542 = vpack.c.bf16 %v3538, %v3538
    %v3543 = vpack.c.bf16 %v3539, %v3539
    %3544 = vmatprep.subr.bf16.mxu0 0
    %3545 = vmatpush1.bf16.msra.mxu0 %v2255
    %3546 = vmatprep.subr.bf16.mxu0 0
    %3547 = vmatpush1.bf16.msra.mxu0 %v2254
    %3548 = vmatprep.subr.bf16.mxu0 0
    %3549 = vmatpush1.bf16.msra.mxu0 %v2253
    %3550 = vmatprep.subr.bf16.mxu0 0
    %3551 = vmatpush1.bf16.msra.mxu0 %v2252
    %3552 = vmatprep.subr.bf16.mxu0 0
    %3553 = vmatpush1.bf16.msra.mxu0 %v2251
    %3554 = vmatprep.subr.bf16.mxu0 0
    %3555 = vmatpush1.bf16.msra.mxu0 %v2250
    %3556 = vmatprep.subr.bf16.mxu0 0
    %3557 = vmatpush1.bf16.msra.mxu0 %v2249
    %3558 = vmatprep.subr.bf16.mxu0 0
    %3559 = vmatpush1.bf16.msra.mxu0 %v2248
    %3560 = vmatprep.subr.bf16.mxu0 0
    %3561 = vmatpush2.bf16.msra.mxu0 %v2263
    %3562 = vmatprep.subr.bf16.mxu0 0
    %3563 = vmatpush2.bf16.msra.mxu0 %v2262
    %3564 = vmatprep.subr.bf16.mxu0 0
    %3565 = vmatpush2.bf16.msra.mxu0 %v2261
    %3566 = vmatprep.subr.bf16.mxu0 0
    %3567 = vmatpush2.bf16.msra.mxu0 %v2260
    %3568 = vmatprep.subr.bf16.mxu0 0
    %3569 = vmatpush2.bf16.msra.mxu0 %v2259
    %3570 = vmatprep.subr.bf16.mxu0 0
    %3571 = vmatpush2.bf16.msra.mxu0 %v2258
    %3572 = vmatprep.subr.bf16.mxu0 0
    %3573 = vmatpush2.bf16.msra.mxu0 %v2257
    %3574 = vmatprep.subr.bf16.mxu0 0
    %3575 = vmatpush2.bf16.msra.mxu0 %v2256
    %3576 = vmatprep.mubr.bf16.mxu0 %v3541
    %3577 = vmatmul.mubr.bf16.gmra.mxu0 %v3540
    %v3578 = vpop.f32.mrf.mxu0
    %v3579 = vadd.f32 0.0, %v3578
    %v3580 = vpop.f32.mrf.mxu0
    %v3581 = vpop.f32.mrf.mxu0
    %v3582 = vpop.f32.mrf.mxu0
    %3583 = vdwg.mxu0
    %3584 = vmatprep.subr.bf16.mxu0 0
    %3585 = vmatpush1.bf16.msra.mxu0 %v2271
    %3586 = vmatprep.subr.bf16.mxu0 0
    %3587 = vmatpush1.bf16.msra.mxu0 %v2270
    %3588 = vmatprep.subr.bf16.mxu0 0
    %3589 = vmatpush1.bf16.msra.mxu0 %v2269
    %3590 = vmatprep.subr.bf16.mxu0 0
    %3591 = vmatpush1.bf16.msra.mxu0 %v2268
    %3592 = vmatprep.subr.bf16.mxu0 0
    %3593 = vmatpush1.bf16.msra.mxu0 %v2267
    %3594 = vmatprep.subr.bf16.mxu0 0
    %3595 = vmatpush1.bf16.msra.mxu0 %v2266
    %3596 = vmatprep.subr.bf16.mxu0 0
    %3597 = vmatpush1.bf16.msra.mxu0 %v2265
    %3598 = vmatprep.subr.bf16.mxu0 0
    %3599 = vmatpush1.bf16.msra.mxu0 %v2264
    %3600 = vmatprep.subr.bf16.mxu0 0
    %3601 = vmatpush2.bf16.msra.mxu0 %v2279
    %3602 = vmatprep.subr.bf16.mxu0 0
    %3603 = vmatpush2.bf16.msra.mxu0 %v2278
    %3604 = vmatprep.subr.bf16.mxu0 0
    %3605 = vmatpush2.bf16.msra.mxu0 %v2277
    %3606 = vmatprep.subr.bf16.mxu0 0
    %3607 = vmatpush2.bf16.msra.mxu0 %v2276
    %3608 = vmatprep.subr.bf16.mxu0 0
    %3609 = vmatpush2.bf16.msra.mxu0 %v2275
    %3610 = vmatprep.subr.bf16.mxu0 0
    %3611 = vmatpush2.bf16.msra.mxu0 %v2274
    %3612 = vmatprep.subr.bf16.mxu0 0
    %3613 = vmatpush2.bf16.msra.mxu0 %v2273
    %3614 = vmatprep.subr.bf16.mxu0 0
    %3615 = vmatpush2.bf16.msra.mxu0 %v2272
    %3616 = vmatprep.mubr.bf16.mxu0 %v3543
    %3617 = vmatmul.mubr.bf16.gmra.mxu0 %v3542
    %v3618 = vpop.f32.mrf.mxu0
    %v3619 = vadd.f32 %v3579, %v3618
    %v3620 = vpop.f32.mrf.mxu0
    %v3621 = vpop.f32.mrf.mxu0
    %v3622 = vpop.f32.mrf.mxu0
    %3623 = vdwg.mxu0
    %v3624 = vpack.c.bf16 %v3619, %v3619
    %3625 = vmatprep.subr.bf16.mxu0 %v1330
    %3626 = vmatpush1.bf16.msra.mxu0 %v1329
    %3627 = vmatprep.subr.bf16.mxu0 %v1328
    %3628 = vmatpush1.bf16.msra.mxu0 %v1327
    %3629 = vmatprep.subr.bf16.mxu0 %v1326
    %3630 = vmatpush1.bf16.msra.mxu0 %v1325
    %3631 = vmatprep.subr.bf16.mxu0 %v1324
    %3632 = vmatpush1.bf16.msra.mxu0 %v1323
    %3633 = vmatprep.subr.bf16.mxu0 %v1322
    %3634 = vmatpush1.bf16.msra.mxu0 %v1321
    %3635 = vmatprep.subr.bf16.mxu0 %v1320
    %3636 = vmatpush1.bf16.msra.mxu0 %v1319
    %3637 = vmatprep.subr.bf16.mxu0 %v1318
    %3638 = vmatpush1.bf16.msra.mxu0 %v1317
    %3639 = vmatprep.subr.bf16.mxu0 %v1316
    %3640 = vmatpush1.bf16.msra.mxu0 %v1315
    %3641 = vmatprep.subr.bf16.mxu0 %v1346
    %3642 = vmatpush2.bf16.msra.mxu0 %v1345
    %3643 = vmatprep.subr.bf16.mxu0 %v1344
    %3644 = vmatpush2.bf16.msra.mxu0 %v1343
    %3645 = vmatprep.subr.bf16.mxu0 %v1342
    %3646 = vmatpush2.bf16.msra.mxu0 %v1341
    %3647 = vmatprep.subr.bf16.mxu0 %v1340
    %3648 = vmatpush2.bf16.msra.mxu0 %v1339
    %3649 = vmatprep.subr.bf16.mxu0 %v1338
    %3650 = vmatpush2.bf16.msra.mxu0 %v1337
    %3651 = vmatprep.subr.bf16.mxu0 %v1336
    %3652 = vmatpush2.bf16.msra.mxu0 %v1335
    %3653 = vmatprep.subr.bf16.mxu0 %v1334
    %3654 = vmatpush2.bf16.msra.mxu0 %v1333
    %3655 = vmatprep.subr.bf16.mxu0 %v1332
    %3656 = vmatpush2.bf16.msra.mxu0 %v1331
    %3657 = vmatprep.mubr.bf16.mxu0 %v3401
    %3658 = vmatmul.mubr.bf16.gmra.mxu0 %v3624
    %v3659 = vpop.f32.mrf.mxu0
    %v3660 = vadd.f32 %v1415, %v3659
    %v3661 = vpop.f32.mrf.mxu0
    %v3662 = vadd.f32 %v1419, %v3661
    %v3663 = vpop.f32.mrf.mxu0
    %v3664 = vpop.f32.mrf.mxu0
    %3665 = vdwg.mxu0
    %3666 = vmatprep.subr.bf16.mxu0 %v1362
    %3667 = vmatpush1.bf16.msra.mxu0 %v1361
    %3668 = vmatprep.subr.bf16.mxu0 %v1360
    %3669 = vmatpush1.bf16.msra.mxu0 %v1359
    %3670 = vmatprep.subr.bf16.mxu0 %v1358
    %3671 = vmatpush1.bf16.msra.mxu0 %v1357
    %3672 = vmatprep.subr.bf16.mxu0 %v1356
    %3673 = vmatpush1.bf16.msra.mxu0 %v1355
    %3674 = vmatprep.subr.bf16.mxu0 %v1354
    %3675 = vmatpush1.bf16.msra.mxu0 %v1353
    %3676 = vmatprep.subr.bf16.mxu0 %v1352
    %3677 = vmatpush1.bf16.msra.mxu0 %v1351
    %3678 = vmatprep.subr.bf16.mxu0 %v1350
    %3679 = vmatpush1.bf16.msra.mxu0 %v1349
    %3680 = vmatprep.subr.bf16.mxu0 %v1348
    %3681 = vmatpush1.bf16.msra.mxu0 %v1347
    %3682 = vmatprep.subr.bf16.mxu0 0
    %3683 = vmatpush2.bf16.msra.mxu0 0
    %3684 = vmatprep.subr.bf16.mxu0 0
    %3685 = vmatpush2.bf16.msra.mxu0 0
    %3686 = vmatprep.subr.bf16.mxu0 0
    %3687 = vmatpush2.bf16.msra.mxu0 0
    %3688 = vmatprep.subr.bf16.mxu0 0
    %3689 = vmatpush2.bf16.msra.mxu0 0
    %3690 = vmatprep.subr.bf16.mxu0 0
    %3691 = vmatpush2.bf16.msra.mxu0 0
    %3692 = vmatprep.subr.bf16.mxu0 0
    %3693 = vmatpush2.bf16.msra.mxu0 0
    %3694 = vmatprep.subr.bf16.mxu0 0
    %3695 = vmatpush2.bf16.msra.mxu0 0
    %3696 = vmatprep.subr.bf16.mxu0 0
    %3697 = vmatpush2.bf16.msra.mxu0 0
    %3698 = vmatprep.mubr.bf16.mxu0 0
    %3699 = vmatmul.mubr.bf16.gmra.mxu0 %v3402
    %v3700 = vpop.f32.mrf.mxu0
    %v3701 = vadd.f32 %v3660, %v3700
    %v3702 = vpop.f32.mrf.mxu0
    %v3703 = vadd.f32 %v3662, %v3702
    %v3704 = vpop.f32.mrf.mxu0
    %v3705 = vpop.f32.mrf.mxu0
    %3706 = vdwg.mxu0
    %v3707 = vmax.f32 %v3701, 0.0
    %v3708 = vmax.f32 %v3703, 0.0
    %v3709 = vpack.c.bf16 %v3707, %v3707
    %v3710 = vpack.c.bf16 %v3708, %v3708
    %3711 = vmatprep.subr.bf16.mxu0 %v1794
    %3712 = vmatpush1.bf16.msra.mxu0 %v1793
    %3713 = vmatprep.subr.bf16.mxu0 %v1790
    %3714 = vmatpush1.bf16.msra.mxu0 %v1789
    %3715 = vmatprep.subr.bf16.mxu0 %v1786
    %3716 = vmatpush1.bf16.msra.mxu0 %v1785
    %3717 = vmatprep.subr.bf16.mxu0 %v1782
    %3718 = vmatpush1.bf16.msra.mxu0 %v1781
    %3719 = vmatprep.subr.bf16.mxu0 %v1778
    %3720 = vmatpush1.bf16.msra.mxu0 %v1777
    %3721 = vmatprep.subr.bf16.mxu0 %v1774
    %3722 = vmatpush1.bf16.msra.mxu0 %v1773
    %3723 = vmatprep.subr.bf16.mxu0 %v1770
    %3724 = vmatpush1.bf16.msra.mxu0 %v1769
    %3725 = vmatprep.subr.bf16.mxu0 %v1766
    %3726 = vmatpush1.bf16.msra.mxu0 %v1765
    %3727 = vmatprep.subr.bf16.mxu0 %v1826
    %3728 = vmatpush2.bf16.msra.mxu0 %v1825
    %3729 = vmatprep.subr.bf16.mxu0 %v1822
    %3730 = vmatpush2.bf16.msra.mxu0 %v1821
    %3731 = vmatprep.subr.bf16.mxu0 %v1818
    %3732 = vmatpush2.bf16.msra.mxu0 %v1817
    %3733 = vmatprep.subr.bf16.mxu0 %v1814
    %3734 = vmatpush2.bf16.msra.mxu0 %v1813
    %3735 = vmatprep.subr.bf16.mxu0 %v1810
    %3736 = vmatpush2.bf16.msra.mxu0 %v1809
    %3737 = vmatprep.subr.bf16.mxu0 %v1806
    %3738 = vmatpush2.bf16.msra.mxu0 %v1805
    %3739 = vmatprep.subr.bf16.mxu0 %v1802
    %3740 = vmatpush2.bf16.msra.mxu0 %v1801
    %3741 = vmatprep.subr.bf16.mxu0 %v1798
    %3742 = vmatpush2.bf16.msra.mxu0 %v1797
    %3743 = vmatprep.mubr.bf16.mxu0 %v3710
    %3744 = vmatmul.mubr.bf16.gmra.mxu0 %v3709
    %v3745 = vpop.f32.mrf.mxu0
    %v3746 = vadd.f32 %v1897, %v3745
    %v3747 = vpop.f32.mrf.mxu0
    %v3748 = vadd.f32 %v1901, %v3747
    %v3749 = vpop.f32.mrf.mxu0
    %v3750 = vpop.f32.mrf.mxu0
    %3751 = vdwg.mxu0
    %3752 = vmatprep.subr.bf16.mxu0 %v1796
    %3753 = vmatpush1.bf16.msra.mxu0 %v1795
    %3754 = vmatprep.subr.bf16.mxu0 %v1792
    %3755 = vmatpush1.bf16.msra.mxu0 %v1791
    %3756 = vmatprep.subr.bf16.mxu0 %v1788
    %3757 = vmatpush1.bf16.msra.mxu0 %v1787
    %3758 = vmatprep.subr.bf16.mxu0 %v1784
    %3759 = vmatpush1.bf16.msra.mxu0 %v1783
    %3760 = vmatprep.subr.bf16.mxu0 %v1780
    %3761 = vmatpush1.bf16.msra.mxu0 %v1779
    %3762 = vmatprep.subr.bf16.mxu0 %v1776
    %3763 = vmatpush1.bf16.msra.mxu0 %v1775
    %3764 = vmatprep.subr.bf16.mxu0 %v1772
    %3765 = vmatpush1.bf16.msra.mxu0 %v1771
    %3766 = vmatprep.subr.bf16.mxu0 %v1768
    %3767 = vmatpush1.bf16.msra.mxu0 %v1767
    %3768 = vmatprep.subr.bf16.mxu0 %v1828
    %3769 = vmatpush2.bf16.msra.mxu0 %v1827
    %3770 = vmatprep.subr.bf16.mxu0 %v1824
    %3771 = vmatpush2.bf16.msra.mxu0 %v1823
    %3772 = vmatprep.subr.bf16.mxu0 %v1820
    %3773 = vmatpush2.bf16.msra.mxu0 %v1819
    %3774 = vmatprep.subr.bf16.mxu0 %v1816
    %3775 = vmatpush2.bf16.msra.mxu0 %v1815
    %3776 = vmatprep.subr.bf16.mxu0 %v1812
    %3777 = vmatpush2.bf16.msra.mxu0 %v1811
    %3778 = vmatprep.subr.bf16.mxu0 %v1808
    %3779 = vmatpush2.bf16.msra.mxu0 %v1807
    %3780 = vmatprep.subr.bf16.mxu0 %v1804
    %3781 = vmatpush2.bf16.msra.mxu0 %v1803
    %3782 = vmatprep.subr.bf16.mxu0 %v1800
    %3783 = vmatpush2.bf16.msra.mxu0 %v1799
    %3784 = vmatprep.mubr.bf16.mxu0 %v3710
    %3785 = vmatmul.mubr.bf16.gmra.mxu0 %v3709
    %v3786 = vpop.f32.mrf.mxu0
    %v3787 = vadd.f32 %v1905, %v3786
    %v3788 = vpop.f32.mrf.mxu0
    %v3789 = vadd.f32 %v1909, %v3788
    %v3790 = vpop.f32.mrf.mxu0
    %v3791 = vpop.f32.mrf.mxu0
    %3792 = vdwg.mxu0
    %v3793 = vsel %vm1996, %v3746, -inf
    %v3794 = vsel %vm1996, %v3748, -inf
    %v3795 = vsel %vm1996, %v3787, -inf
    %v3796 = vsel %vm1996, %v3789, -inf
    %v3797 = vmax.f32 %v3793, %v3794
    %v3798 = vmax.f32 %v3795, %v3796
    %v3799 = vmax.f32 %v3797, %v3798
    %3800 = vmax.xlane.f32.xlu0 %v3799
    %v3801 = vpop.xlane.xlu0 %3800
    %vm3802 = vcmp.eq.f32.partialorder %v3746, %v3801
    %vm3803 = vcmp.eq.f32.partialorder %v3748, %v3801
    %vm3804 = vcmp.eq.f32.partialorder %v3787, %v3801
    %vm3805 = vcmp.eq.f32.partialorder %v3789, %v3801
    %v3806 = vsel %vm3802, %v1115, 512
    %v3807 = vsel %vm3803, %v1116, 512
    %v3808 = vsel %vm3804, %v1117, 512
    %v3809 = vsel %vm3805, %v1118, 512
    %v3810 = vsel %vm1996, %v3806, 2147483647
    %v3811 = vsel %vm1996, %v3807, 2147483647
    %v3812 = vsel %vm1996, %v3808, 2147483647
    %v3813 = vsel %vm1996, %v3809, 2147483647
    %vm3814 = vcmp.lt.s32.totalorder %v3810, %v3811
    %v3815 = vsel %vm3814, %v3810, %v3811
    %vm3816 = vcmp.lt.s32.totalorder %v3812, %v3813
    %v3817 = vsel %vm3816, %v3812, %v3813
    %vm3818 = vcmp.lt.s32.totalorder %v3815, %v3817
    %v3819 = vsel %vm3818, %v3815, %v3817
    %v3820 = vand.u32 %v3819, 65535
    %v3821 = vshra.s32 %v3819, 16
    %v3822 = vcvt.s32.f32 %v3820
    %v3823 = vcvt.s32.f32 %v3821
    %3824 = vmin.xlane.f32.xlu0 %v3823
    %v3825 = vpop.xlane.xlu0 %3824
    %vm3826 = vcmp.eq.f32.partialorder %v3823, %v3825
    %v3827 = vsel %vm3826, %v3822, inf
    %3828 = vmin.xlane.f32.xlu0 %v3827
    %v3829 = vpop.xlane.xlu0 %3828
    %v3830 = vcvt.f32.s32 %v3829
    %v3831 = vcvt.f32.s32 %v3825
    %v3832 = vshll.u32 %v3831, 16
    %v3833 = vadd.s32 %v3832, %v3830
    %vm3834 = vcmp.eq.s32.totalorder %v1115, 5
    %v3835 = vsel %vm3834, %v3833, %v3527
    %vm3836 = vcmp.eq.s32.totalorder %v1115, %v3833
    %vm3837 = vcmp.eq.s32.totalorder %v1116, %v3833
    %vm3838 = vcmp.eq.s32.totalorder %v1117, %v3833
    %vm3839 = vcmp.eq.s32.totalorder %v1118, %v3833
    %v3840 = vsel %vm3836, 1, 0
    %v3841 = vsel %vm3837, 1, 0
    %v3842 = vsel %vm3838, 1, 0
    %v3843 = vsel %vm3839, 1, 0
    %v3844 = vcvt.s32.f32 %v3840
    %v3845 = vcvt.s32.f32 %v3841
    %v3846 = vcvt.s32.f32 %v3842
    %v3847 = vcvt.s32.f32 %v3843
    %v3848 = vpack.c.bf16 %v3844, %v3844
    %v3849 = vpack.c.bf16 %v3845, %v3845
    %v3850 = vpack.c.bf16 %v3846, %v3846
    %v3851 = vpack.c.bf16 %v3847, %v3847
    %3852 = vmatprep.subr.bf16.mxu0 0
    %3853 = vmatpush1.bf16.msra.mxu0 %v2255
    %3854 = vmatprep.subr.bf16.mxu0 0
    %3855 = vmatpush1.bf16.msra.mxu0 %v2254
    %3856 = vmatprep.subr.bf16.mxu0 0
    %3857 = vmatpush1.bf16.msra.mxu0 %v2253
    %3858 = vmatprep.subr.bf16.mxu0 0
    %3859 = vmatpush1.bf16.msra.mxu0 %v2252
    %3860 = vmatprep.subr.bf16.mxu0 0
    %3861 = vmatpush1.bf16.msra.mxu0 %v2251
    %3862 = vmatprep.subr.bf16.mxu0 0
    %3863 = vmatpush1.bf16.msra.mxu0 %v2250
    %3864 = vmatprep.subr.bf16.mxu0 0
    %3865 = vmatpush1.bf16.msra.mxu0 %v2249
    %3866 = vmatprep.subr.bf16.mxu0 0
    %3867 = vmatpush1.bf16.msra.mxu0 %v2248
    %3868 = vmatprep.subr.bf16.mxu0 0
    %3869 = vmatpush2.bf16.msra.mxu0 %v2263
    %3870 = vmatprep.subr.bf16.mxu0 0
    %3871 = vmatpush2.bf16.msra.mxu0 %v2262
    %3872 = vmatprep.subr.bf16.mxu0 0
    %3873 = vmatpush2.bf16.msra.mxu0 %v2261
    %3874 = vmatprep.subr.bf16.mxu0 0
    %3875 = vmatpush2.bf16.msra.mxu0 %v2260
    %3876 = vmatprep.subr.bf16.mxu0 0
    %3877 = vmatpush2.bf16.msra.mxu0 %v2259
    %3878 = vmatprep.subr.bf16.mxu0 0
    %3879 = vmatpush2.bf16.msra.mxu0 %v2258
    %3880 = vmatprep.subr.bf16.mxu0 0
    %3881 = vmatpush2.bf16.msra.mxu0 %v2257
    %3882 = vmatprep.subr.bf16.mxu0 0
    %3883 = vmatpush2.bf16.msra.mxu0 %v2256
    %3884 = vmatprep.mubr.bf16.mxu0 %v3849
    %3885 = vmatmul.mubr.bf16.gmra.mxu0 %v3848
    %v3886 = vpop.f32.mrf.mxu0
    %v3887 = vadd.f32 0.0, %v3886
    %v3888 = vpop.f32.mrf.mxu0
    %v3889 = vpop.f32.mrf.mxu0
    %v3890 = vpop.f32.mrf.mxu0
    %3891 = vdwg.mxu0
    %3892 = vmatprep.subr.bf16.mxu0 0
    %3893 = vmatpush1.bf16.msra.mxu0 %v2271
    %3894 = vmatprep.subr.bf16.mxu0 0
    %3895 = vmatpush1.bf16.msra.mxu0 %v2270
    %3896 = vmatprep.subr.bf16.mxu0 0
    %3897 = vmatpush1.bf16.msra.mxu0 %v2269
    %3898 = vmatprep.subr.bf16.mxu0 0
    %3899 = vmatpush1.bf16.msra.mxu0 %v2268
    %3900 = vmatprep.subr.bf16.mxu0 0
    %3901 = vmatpush1.bf16.msra.mxu0 %v2267
    %3902 = vmatprep.subr.bf16.mxu0 0
    %3903 = vmatpush1.bf16.msra.mxu0 %v2266
    %3904 = vmatprep.subr.bf16.mxu0 0
    %3905 = vmatpush1.bf16.msra.mxu0 %v2265
    %3906 = vmatprep.subr.bf16.mxu0 0
    %3907 = vmatpush1.bf16.msra.mxu0 %v2264
    %3908 = vmatprep.subr.bf16.mxu0 0
    %3909 = vmatpush2.bf16.msra.mxu0 %v2279
    %3910 = vmatprep.subr.bf16.mxu0 0
    %3911 = vmatpush2.bf16.msra.mxu0 %v2278
    %3912 = vmatprep.subr.bf16.mxu0 0
    %3913 = vmatpush2.bf16.msra.mxu0 %v2277
    %3914 = vmatprep.subr.bf16.mxu0 0
    %3915 = vmatpush2.bf16.msra.mxu0 %v2276
    %3916 = vmatprep.subr.bf16.mxu0 0
    %3917 = vmatpush2.bf16.msra.mxu0 %v2275
    %3918 = vmatprep.subr.bf16.mxu0 0
    %3919 = vmatpush2.bf16.msra.mxu0 %v2274
    %3920 = vmatprep.subr.bf16.mxu0 0
    %3921 = vmatpush2.bf16.msra.mxu0 %v2273
    %3922 = vmatprep.subr.bf16.mxu0 0
    %3923 = vmatpush2.bf16.msra.mxu0 %v2272
    %3924 = vmatprep.mubr.bf16.mxu0 %v3851
    %3925 = vmatmul.mubr.bf16.gmra.mxu0 %v3850
    %v3926 = vpop.f32.mrf.mxu0
    %v3927 = vadd.f32 %v3887, %v3926
    %v3928 = vpop.f32.mrf.mxu0
    %v3929 = vpop.f32.mrf.mxu0
    %v3930 = vpop.f32.mrf.mxu0
    %3931 = vdwg.mxu0
    %v3932 = vpack.c.bf16 %v3927, %v3927
    %3933 = vmatprep.subr.bf16.mxu0 %v1330
    %3934 = vmatpush1.bf16.msra.mxu0 %v1329
    %3935 = vmatprep.subr.bf16.mxu0 %v1328
    %3936 = vmatpush1.bf16.msra.mxu0 %v1327
    %3937 = vmatprep.subr.bf16.mxu0 %v1326
    %3938 = vmatpush1.bf16.msra.mxu0 %v1325
    %3939 = vmatprep.subr.bf16.mxu0 %v1324
    %3940 = vmatpush1.bf16.msra.mxu0 %v1323
    %3941 = vmatprep.subr.bf16.mxu0 %v1322
    %3942 = vmatpush1.bf16.msra.mxu0 %v1321
    %3943 = vmatprep.subr.bf16.mxu0 %v1320
    %3944 = vmatpush1.bf16.msra.mxu0 %v1319
    %3945 = vmatprep.subr.bf16.mxu0 %v1318
    %3946 = vmatpush1.bf16.msra.mxu0 %v1317
    %3947 = vmatprep.subr.bf16.mxu0 %v1316
    %3948 = vmatpush1.bf16.msra.mxu0 %v1315
    %3949 = vmatprep.subr.bf16.mxu0 %v1346
    %3950 = vmatpush2.bf16.msra.mxu0 %v1345
    %3951 = vmatprep.subr.bf16.mxu0 %v1344
    %3952 = vmatpush2.bf16.msra.mxu0 %v1343
    %3953 = vmatprep.subr.bf16.mxu0 %v1342
    %3954 = vmatpush2.bf16.msra.mxu0 %v1341
    %3955 = vmatprep.subr.bf16.mxu0 %v1340
    %3956 = vmatpush2.bf16.msra.mxu0 %v1339
    %3957 = vmatprep.subr.bf16.mxu0 %v1338
    %3958 = vmatpush2.bf16.msra.mxu0 %v1337
    %3959 = vmatprep.subr.bf16.mxu0 %v1336
    %3960 = vmatpush2.bf16.msra.mxu0 %v1335
    %3961 = vmatprep.subr.bf16.mxu0 %v1334
    %3962 = vmatpush2.bf16.msra.mxu0 %v1333
    %3963 = vmatprep.subr.bf16.mxu0 %v1332
    %3964 = vmatpush2.bf16.msra.mxu0 %v1331
    %3965 = vmatprep.mubr.bf16.mxu0 %v3709
    %3966 = vmatmul.mubr.bf16.gmra.mxu0 %v3932
    %v3967 = vpop.f32.mrf.mxu0
    %v3968 = vadd.f32 %v1415, %v3967
    %v3969 = vpop.f32.mrf.mxu0
    %v3970 = vadd.f32 %v1419, %v3969
    %v3971 = vpop.f32.mrf.mxu0
    %v3972 = vpop.f32.mrf.mxu0
    %3973 = vdwg.mxu0
    %3974 = vmatprep.subr.bf16.mxu0 %v1362
    %3975 = vmatpush1.bf16.msra.mxu0 %v1361
    %3976 = vmatprep.subr.bf16.mxu0 %v1360
    %3977 = vmatpush1.bf16.msra.mxu0 %v1359
    %3978 = vmatprep.subr.bf16.mxu0 %v1358
    %3979 = vmatpush1.bf16.msra.mxu0 %v1357
    %3980 = vmatprep.subr.bf16.mxu0 %v1356
    %3981 = vmatpush1.bf16.msra.mxu0 %v1355
    %3982 = vmatprep.subr.bf16.mxu0 %v1354
    %3983 = vmatpush1.bf16.msra.mxu0 %v1353
    %3984 = vmatprep.subr.bf16.mxu0 %v1352
    %3985 = vmatpush1.bf16.msra.mxu0 %v1351
    %3986 = vmatprep.subr.bf16.mxu0 %v1350
    %3987 = vmatpush1.bf16.msra.mxu0 %v1349
    %3988 = vmatprep.subr.bf16.mxu0 %v1348
    %3989 = vmatpush1.bf16.msra.mxu0 %v1347
    %3990 = vmatprep.subr.bf16.mxu0 0
    %3991 = vmatpush2.bf16.msra.mxu0 0
    %3992 = vmatprep.subr.bf16.mxu0 0
    %3993 = vmatpush2.bf16.msra.mxu0 0
    %3994 = vmatprep.subr.bf16.mxu0 0
    %3995 = vmatpush2.bf16.msra.mxu0 0
    %3996 = vmatprep.subr.bf16.mxu0 0
    %3997 = vmatpush2.bf16.msra.mxu0 0
    %3998 = vmatprep.subr.bf16.mxu0 0
    %3999 = vmatpush2.bf16.msra.mxu0 0
    %4000 = vmatprep.subr.bf16.mxu0 0
    %4001 = vmatpush2.bf16.msra.mxu0 0
    %4002 = vmatprep.subr.bf16.mxu0 0
    %4003 = vmatpush2.bf16.msra.mxu0 0
    %4004 = vmatprep.subr.bf16.mxu0 0
    %4005 = vmatpush2.bf16.msra.mxu0 0
    %4006 = vmatprep.mubr.bf16.mxu0 0
    %4007 = vmatmul.mubr.bf16.gmra.mxu0 %v3710
    %v4008 = vpop.f32.mrf.mxu0
    %v4009 = vadd.f32 %v3968, %v4008
    %v4010 = vpop.f32.mrf.mxu0
    %v4011 = vadd.f32 %v3970, %v4010
    %v4012 = vpop.f32.mrf.mxu0
    %v4013 = vpop.f32.mrf.mxu0
    %4014 = vdwg.mxu0
    %v4015 = vmax.f32 %v4009, 0.0
    %v4016 = vmax.f32 %v4011, 0.0
    %v4017 = vpack.c.bf16 %v4015, %v4015
    %v4018 = vpack.c.bf16 %v4016, %v4016
    %4019 = vmatprep.subr.bf16.mxu0 %v1794
    %4020 = vmatpush1.bf16.msra.mxu0 %v1793
    %4021 = vmatprep.subr.bf16.mxu0 %v1790
    %4022 = vmatpush1.bf16.msra.mxu0 %v1789
    %4023 = vmatprep.subr.bf16.mxu0 %v1786
    %4024 = vmatpush1.bf16.msra.mxu0 %v1785
    %4025 = vmatprep.subr.bf16.mxu0 %v1782
    %4026 = vmatpush1.bf16.msra.mxu0 %v1781
    %4027 = vmatprep.subr.bf16.mxu0 %v1778
    %4028 = vmatpush1.bf16.msra.mxu0 %v1777
    %4029 = vmatprep.subr.bf16.mxu0 %v1774
    %4030 = vmatpush1.bf16.msra.mxu0 %v1773
    %4031 = vmatprep.subr.bf16.mxu0 %v1770
    %4032 = vmatpush1.bf16.msra.mxu0 %v1769
    %4033 = vmatprep.subr.bf16.mxu0 %v1766
    %4034 = vmatpush1.bf16.msra.mxu0 %v1765
    %4035 = vmatprep.subr.bf16.mxu0 %v1826
    %4036 = vmatpush2.bf16.msra.mxu0 %v1825
    %4037 = vmatprep.subr.bf16.mxu0 %v1822
    %4038 = vmatpush2.bf16.msra.mxu0 %v1821
    %4039 = vmatprep.subr.bf16.mxu0 %v1818
    %4040 = vmatpush2.bf16.msra.mxu0 %v1817
    %4041 = vmatprep.subr.bf16.mxu0 %v1814
    %4042 = vmatpush2.bf16.msra.mxu0 %v1813
    %4043 = vmatprep.subr.bf16.mxu0 %v1810
    %4044 = vmatpush2.bf16.msra.mxu0 %v1809
    %4045 = vmatprep.subr.bf16.mxu0 %v1806
    %4046 = vmatpush2.bf16.msra.mxu0 %v1805
    %4047 = vmatprep.subr.bf16.mxu0 %v1802
    %4048 = vmatpush2.bf16.msra.mxu0 %v1801
    %4049 = vmatprep.subr.bf16.mxu0 %v1798
    %4050 = vmatpush2.bf16.msra.mxu0 %v1797
    %4051 = vmatprep.mubr.bf16.mxu0 %v4018
    %4052 = vmatmul.mubr.bf16.gmra.mxu0 %v4017
    %v4053 = vpop.f32.mrf.mxu0
    %v4054 = vadd.f32 %v1897, %v4053
    %v4055 = vpop.f32.mrf.mxu0
    %v4056 = vadd.f32 %v1901, %v4055
    %v4057 = vpop.f32.mrf.mxu0
    %v4058 = vpop.f32.mrf.mxu0
    %4059 = vdwg.mxu0
    %4060 = vmatprep.subr.bf16.mxu0 %v1796
    %4061 = vmatpush1.bf16.msra.mxu0 %v1795
    %4062 = vmatprep.subr.bf16.mxu0 %v1792
    %4063 = vmatpush1.bf16.msra.mxu0 %v1791
    %4064 = vmatprep.subr.bf16.mxu0 %v1788
    %4065 = vmatpush1.bf16.msra.mxu0 %v1787
    %4066 = vmatprep.subr.bf16.mxu0 %v1784
    %4067 = vmatpush1.bf16.msra.mxu0 %v1783
    %4068 = vmatprep.subr.bf16.mxu0 %v1780
    %4069 = vmatpush1.bf16.msra.mxu0 %v1779
    %4070 = vmatprep.subr.bf16.mxu0 %v1776
    %4071 = vmatpush1.bf16.msra.mxu0 %v1775
    %4072 = vmatprep.subr.bf16.mxu0 %v1772
    %4073 = vmatpush1.bf16.msra.mxu0 %v1771
    %4074 = vmatprep.subr.bf16.mxu0 %v1768
    %4075 = vmatpush1.bf16.msra.mxu0 %v1767
    %4076 = vmatprep.subr.bf16.mxu0 %v1828
    %4077 = vmatpush2.bf16.msra.mxu0 %v1827
    %4078 = vmatprep.subr.bf16.mxu0 %v1824
    %4079 = vmatpush2.bf16.msra.mxu0 %v1823
    %4080 = vmatprep.subr.bf16.mxu0 %v1820
    %4081 = vmatpush2.bf16.msra.mxu0 %v1819
    %4082 = vmatprep.subr.bf16.mxu0 %v1816
    %4083 = vmatpush2.bf16.msra.mxu0 %v1815
    %4084 = vmatprep.subr.bf16.mxu0 %v1812
    %4085 = vmatpush2.bf16.msra.mxu0 %v1811
    %4086 = vmatprep.subr.bf16.mxu0 %v1808
    %4087 = vmatpush2.bf16.msra.mxu0 %v1807
    %4088 = vmatprep.subr.bf16.mxu0 %v1804
    %4089 = vmatpush2.bf16.msra.mxu0 %v1803
    %4090 = vmatprep.subr.bf16.mxu0 %v1800
    %4091 = vmatpush2.bf16.msra.mxu0 %v1799
    %4092 = vmatprep.mubr.bf16.mxu0 %v4018
    %4093 = vmatmul.mubr.bf16.gmra.mxu0 %v4017
    %v4094 = vpop.f32.mrf.mxu0
    %v4095 = vadd.f32 %v1905, %v4094
    %v4096 = vpop.f32.mrf.mxu0
    %v4097 = vadd.f32 %v1909, %v4096
    %v4098 = vpop.f32.mrf.mxu0
    %v4099 = vpop.f32.mrf.mxu0
    %4100 = vdwg.mxu0
    %v4101 = vsel %vm1996, %v4054, -inf
    %v4102 = vsel %vm1996, %v4056, -inf
    %v4103 = vsel %vm1996, %v4095, -inf
    %v4104 = vsel %vm1996, %v4097, -inf
    %v4105 = vmax.f32 %v4101, %v4102
    %v4106 = vmax.f32 %v4103, %v4104
    %v4107 = vmax.f32 %v4105, %v4106
    %4108 = vmax.xlane.f32.xlu0 %v4107
    %v4109 = vpop.xlane.xlu0 %4108
    %vm4110 = vcmp.eq.f32.partialorder %v4054, %v4109
    %vm4111 = vcmp.eq.f32.partialorder %v4056, %v4109
    %vm4112 = vcmp.eq.f32.partialorder %v4095, %v4109
    %vm4113 = vcmp.eq.f32.partialorder %v4097, %v4109
    %v4114 = vsel %vm4110, %v1115, 512
    %v4115 = vsel %vm4111, %v1116, 512
    %v4116 = vsel %vm4112, %v1117, 512
    %v4117 = vsel %vm4113, %v1118, 512
    %v4118 = vsel %vm1996, %v4114, 2147483647
    %v4119 = vsel %vm1996, %v4115, 2147483647
    %v4120 = vsel %vm1996, %v4116, 2147483647
    %v4121 = vsel %vm1996, %v4117, 2147483647
    %vm4122 = vcmp.lt.s32.totalorder %v4118, %v4119
    %v4123 = vsel %vm4122, %v4118, %v4119
    %vm4124 = vcmp.lt.s32.totalorder %v4120, %v4121
    %v4125 = vsel %vm4124, %v4120, %v4121
    %vm4126 = vcmp.lt.s32.totalorder %v4123, %v4125
    %v4127 = vsel %vm4126, %v4123, %v4125
    %v4128 = vand.u32 %v4127, 65535
    %v4129 = vshra.s32 %v4127, 16
    %v4130 = vcvt.s32.f32 %v4128
    %v4131 = vcvt.s32.f32 %v4129
    %4132 = vmin.xlane.f32.xlu0 %v4131
    %v4133 = vpop.xlane.xlu0 %4132
    %vm4134 = vcmp.eq.f32.partialorder %v4131, %v4133
    %v4135 = vsel %vm4134, %v4130, inf
    %4136 = vmin.xlane.f32.xlu0 %v4135
    %v4137 = vpop.xlane.xlu0 %4136
    %v4138 = vcvt.f32.s32 %v4137
    %v4139 = vcvt.f32.s32 %v4133
    %v4140 = vshll.u32 %v4139, 16
    %v4141 = vadd.s32 %v4140, %v4138
    %vm4142 = vcmp.eq.s32.totalorder %v1115, 6
    %v4143 = vsel %vm4142, %v4141, %v3835
    %vm4144 = vcmp.eq.s32.totalorder %v1115, %v4141
    %vm4145 = vcmp.eq.s32.totalorder %v1116, %v4141
    %vm4146 = vcmp.eq.s32.totalorder %v1117, %v4141
    %vm4147 = vcmp.eq.s32.totalorder %v1118, %v4141
    %v4148 = vsel %vm4144, 1, 0
    %v4149 = vsel %vm4145, 1, 0
    %v4150 = vsel %vm4146, 1, 0
    %v4151 = vsel %vm4147, 1, 0
    %v4152 = vcvt.s32.f32 %v4148
    %v4153 = vcvt.s32.f32 %v4149
    %v4154 = vcvt.s32.f32 %v4150
    %v4155 = vcvt.s32.f32 %v4151
    %v4156 = vpack.c.bf16 %v4152, %v4152
    %v4157 = vpack.c.bf16 %v4153, %v4153
    %v4158 = vpack.c.bf16 %v4154, %v4154
    %v4159 = vpack.c.bf16 %v4155, %v4155
    %4160 = vmatprep.subr.bf16.mxu0 0
    %4161 = vmatpush1.bf16.msra.mxu0 %v2255
    %4162 = vmatprep.subr.bf16.mxu0 0
    %4163 = vmatpush1.bf16.msra.mxu0 %v2254
    %4164 = vmatprep.subr.bf16.mxu0 0
    %4165 = vmatpush1.bf16.msra.mxu0 %v2253
    %4166 = vmatprep.subr.bf16.mxu0 0
    %4167 = vmatpush1.bf16.msra.mxu0 %v2252
    %4168 = vmatprep.subr.bf16.mxu0 0
    %4169 = vmatpush1.bf16.msra.mxu0 %v2251
    %4170 = vmatprep.subr.bf16.mxu0 0
    %4171 = vmatpush1.bf16.msra.mxu0 %v2250
    %4172 = vmatprep.subr.bf16.mxu0 0
    %4173 = vmatpush1.bf16.msra.mxu0 %v2249
    %4174 = vmatprep.subr.bf16.mxu0 0
    %4175 = vmatpush1.bf16.msra.mxu0 %v2248
    %4176 = vmatprep.subr.bf16.mxu0 0
    %4177 = vmatpush2.bf16.msra.mxu0 %v2263
    %4178 = vmatprep.subr.bf16.mxu0 0
    %4179 = vmatpush2.bf16.msra.mxu0 %v2262
    %4180 = vmatprep.subr.bf16.mxu0 0
    %4181 = vmatpush2.bf16.msra.mxu0 %v2261
    %4182 = vmatprep.subr.bf16.mxu0 0
    %4183 = vmatpush2.bf16.msra.mxu0 %v2260
    %4184 = vmatprep.subr.bf16.mxu0 0
    %4185 = vmatpush2.bf16.msra.mxu0 %v2259
    %4186 = vmatprep.subr.bf16.mxu0 0
    %4187 = vmatpush2.bf16.msra.mxu0 %v2258
    %4188 = vmatprep.subr.bf16.mxu0 0
    %4189 = vmatpush2.bf16.msra.mxu0 %v2257
    %4190 = vmatprep.subr.bf16.mxu0 0
    %4191 = vmatpush2.bf16.msra.mxu0 %v2256
    %4192 = vmatprep.mubr.bf16.mxu0 %v4157
    %4193 = vmatmul.mubr.bf16.gmra.mxu0 %v4156
    %v4194 = vpop.f32.mrf.mxu0
    %v4195 = vadd.f32 0.0, %v4194
    %v4196 = vpop.f32.mrf.mxu0
    %v4197 = vpop.f32.mrf.mxu0
    %v4198 = vpop.f32.mrf.mxu0
    %4199 = vdwg.mxu0
    %4200 = vmatprep.subr.bf16.mxu0 0
    %4201 = vmatpush1.bf16.msra.mxu0 %v2271
    %4202 = vmatprep.subr.bf16.mxu0 0
    %4203 = vmatpush1.bf16.msra.mxu0 %v2270
    %4204 = vmatprep.subr.bf16.mxu0 0
    %4205 = vmatpush1.bf16.msra.mxu0 %v2269
    %4206 = vmatprep.subr.bf16.mxu0 0
    %4207 = vmatpush1.bf16.msra.mxu0 %v2268
    %4208 = vmatprep.subr.bf16.mxu0 0
    %4209 = vmatpush1.bf16.msra.mxu0 %v2267
    %4210 = vmatprep.subr.bf16.mxu0 0
    %4211 = vmatpush1.bf16.msra.mxu0 %v2266
    %4212 = vmatprep.subr.bf16.mxu0 0
    %4213 = vmatpush1.bf16.msra.mxu0 %v2265
    %4214 = vmatprep.subr.bf16.mxu0 0
    %4215 = vmatpush1.bf16.msra.mxu0 %v2264
    %4216 = vmatprep.subr.bf16.mxu0 0
    %4217 = vmatpush2.bf16.msra.mxu0 %v2279
    %4218 = vmatprep.subr.bf16.mxu0 0
    %4219 = vmatpush2.bf16.msra.mxu0 %v2278
    %4220 = vmatprep.subr.bf16.mxu0 0
    %4221 = vmatpush2.bf16.msra.mxu0 %v2277
    %4222 = vmatprep.subr.bf16.mxu0 0
    %4223 = vmatpush2.bf16.msra.mxu0 %v2276
    %4224 = vmatprep.subr.bf16.mxu0 0
    %4225 = vmatpush2.bf16.msra.mxu0 %v2275
    %4226 = vmatprep.subr.bf16.mxu0 0
    %4227 = vmatpush2.bf16.msra.mxu0 %v2274
    %4228 = vmatprep.subr.bf16.mxu0 0
    %4229 = vmatpush2.bf16.msra.mxu0 %v2273
    %4230 = vmatprep.subr.bf16.mxu0 0
    %4231 = vmatpush2.bf16.msra.mxu0 %v2272
    %4232 = vmatprep.mubr.bf16.mxu0 %v4159
    %4233 = vmatmul.mubr.bf16.gmra.mxu0 %v4158
    %v4234 = vpop.f32.mrf.mxu0
    %v4235 = vadd.f32 %v4195, %v4234
    %v4236 = vpop.f32.mrf.mxu0
    %v4237 = vpop.f32.mrf.mxu0
    %v4238 = vpop.f32.mrf.mxu0
    %4239 = vdwg.mxu0
    %v4240 = vpack.c.bf16 %v4235, %v4235
    %4241 = vmatprep.subr.bf16.mxu0 %v1330
    %4242 = vmatpush1.bf16.msra.mxu0 %v1329
    %4243 = vmatprep.subr.bf16.mxu0 %v1328
    %4244 = vmatpush1.bf16.msra.mxu0 %v1327
    %4245 = vmatprep.subr.bf16.mxu0 %v1326
    %4246 = vmatpush1.bf16.msra.mxu0 %v1325
    %4247 = vmatprep.subr.bf16.mxu0 %v1324
    %4248 = vmatpush1.bf16.msra.mxu0 %v1323
    %4249 = vmatprep.subr.bf16.mxu0 %v1322
    %4250 = vmatpush1.bf16.msra.mxu0 %v1321
    %4251 = vmatprep.subr.bf16.mxu0 %v1320
    %4252 = vmatpush1.bf16.msra.mxu0 %v1319
    %4253 = vmatprep.subr.bf16.mxu0 %v1318
    %4254 = vmatpush1.bf16.msra.mxu0 %v1317
    %4255 = vmatprep.subr.bf16.mxu0 %v1316
    %4256 = vmatpush1.bf16.msra.mxu0 %v1315
    %4257 = vmatprep.subr.bf16.mxu0 %v1346
    %4258 = vmatpush2.bf16.msra.mxu0 %v1345
    %4259 = vmatprep.subr.bf16.mxu0 %v1344
    %4260 = vmatpush2.bf16.msra.mxu0 %v1343
    %4261 = vmatprep.subr.bf16.mxu0 %v1342
    %4262 = vmatpush2.bf16.msra.mxu0 %v1341
    %4263 = vmatprep.subr.bf16.mxu0 %v1340
    %4264 = vmatpush2.bf16.msra.mxu0 %v1339
    %4265 = vmatprep.subr.bf16.mxu0 %v1338
    %4266 = vmatpush2.bf16.msra.mxu0 %v1337
    %4267 = vmatprep.subr.bf16.mxu0 %v1336
    %4268 = vmatpush2.bf16.msra.mxu0 %v1335
    %4269 = vmatprep.subr.bf16.mxu0 %v1334
    %4270 = vmatpush2.bf16.msra.mxu0 %v1333
    %4271 = vmatprep.subr.bf16.mxu0 %v1332
    %4272 = vmatpush2.bf16.msra.mxu0 %v1331
    %4273 = vmatprep.mubr.bf16.mxu0 %v4017
    %4274 = vmatmul.mubr.bf16.gmra.mxu0 %v4240
    %v4275 = vpop.f32.mrf.mxu0
    %v4276 = vadd.f32 %v1415, %v4275
    %v4277 = vpop.f32.mrf.mxu0
    %v4278 = vadd.f32 %v1419, %v4277
    %v4279 = vpop.f32.mrf.mxu0
    %v4280 = vpop.f32.mrf.mxu0
    %4281 = vdwg.mxu0
    %4282 = vmatprep.subr.bf16.mxu0 %v1362
    %4283 = vmatpush1.bf16.msra.mxu0 %v1361
    %4284 = vmatprep.subr.bf16.mxu0 %v1360
    %4285 = vmatpush1.bf16.msra.mxu0 %v1359
    %4286 = vmatprep.subr.bf16.mxu0 %v1358
    %4287 = vmatpush1.bf16.msra.mxu0 %v1357
    %4288 = vmatprep.subr.bf16.mxu0 %v1356
    %4289 = vmatpush1.bf16.msra.mxu0 %v1355
    %4290 = vmatprep.subr.bf16.mxu0 %v1354
    %4291 = vmatpush1.bf16.msra.mxu0 %v1353
    %4292 = vmatprep.subr.bf16.mxu0 %v1352
    %4293 = vmatpush1.bf16.msra.mxu0 %v1351
    %4294 = vmatprep.subr.bf16.mxu0 %v1350
    %4295 = vmatpush1.bf16.msra.mxu0 %v1349
    %4296 = vmatprep.subr.bf16.mxu0 %v1348
    %4297 = vmatpush1.bf16.msra.mxu0 %v1347
    %4298 = vmatprep.subr.bf16.mxu0 0
    %4299 = vmatpush2.bf16.msra.mxu0 0
    %4300 = vmatprep.subr.bf16.mxu0 0
    %4301 = vmatpush2.bf16.msra.mxu0 0
    %4302 = vmatprep.subr.bf16.mxu0 0
    %4303 = vmatpush2.bf16.msra.mxu0 0
    %4304 = vmatprep.subr.bf16.mxu0 0
    %4305 = vmatpush2.bf16.msra.mxu0 0
    %4306 = vmatprep.subr.bf16.mxu0 0
    %4307 = vmatpush2.bf16.msra.mxu0 0
    %4308 = vmatprep.subr.bf16.mxu0 0
    %4309 = vmatpush2.bf16.msra.mxu0 0
    %4310 = vmatprep.subr.bf16.mxu0 0
    %4311 = vmatpush2.bf16.msra.mxu0 0
    %4312 = vmatprep.subr.bf16.mxu0 0
    %4313 = vmatpush2.bf16.msra.mxu0 0
    %4314 = vmatprep.mubr.bf16.mxu0 0
    %4315 = vmatmul.mubr.bf16.gmra.mxu0 %v4018
    %v4316 = vpop.f32.mrf.mxu0
    %v4317 = vadd.f32 %v4276, %v4316
    %v4318 = vpop.f32.mrf.mxu0
    %v4319 = vadd.f32 %v4278, %v4318
    %v4320 = vpop.f32.mrf.mxu0
    %v4321 = vpop.f32.mrf.mxu0
    %4322 = vdwg.mxu0
    %v4323 = vmax.f32 %v4317, 0.0
    %v4324 = vmax.f32 %v4319, 0.0
    %v4325 = vpack.c.bf16 %v4323, %v4323
    %v4326 = vpack.c.bf16 %v4324, %v4324
    %4327 = vmatprep.subr.bf16.mxu0 %v1794
    %4328 = vmatpush1.bf16.msra.mxu0 %v1793
    %4329 = vmatprep.subr.bf16.mxu0 %v1790
    %4330 = vmatpush1.bf16.msra.mxu0 %v1789
    %4331 = vmatprep.subr.bf16.mxu0 %v1786
    %4332 = vmatpush1.bf16.msra.mxu0 %v1785
    %4333 = vmatprep.subr.bf16.mxu0 %v1782
    %4334 = vmatpush1.bf16.msra.mxu0 %v1781
    %4335 = vmatprep.subr.bf16.mxu0 %v1778
    %4336 = vmatpush1.bf16.msra.mxu0 %v1777
    %4337 = vmatprep.subr.bf16.mxu0 %v1774
    %4338 = vmatpush1.bf16.msra.mxu0 %v1773
    %4339 = vmatprep.subr.bf16.mxu0 %v1770
    %4340 = vmatpush1.bf16.msra.mxu0 %v1769
    %4341 = vmatprep.subr.bf16.mxu0 %v1766
    %4342 = vmatpush1.bf16.msra.mxu0 %v1765
    %4343 = vmatprep.subr.bf16.mxu0 %v1826
    %4344 = vmatpush2.bf16.msra.mxu0 %v1825
    %4345 = vmatprep.subr.bf16.mxu0 %v1822
    %4346 = vmatpush2.bf16.msra.mxu0 %v1821
    %4347 = vmatprep.subr.bf16.mxu0 %v1818
    %4348 = vmatpush2.bf16.msra.mxu0 %v1817
    %4349 = vmatprep.subr.bf16.mxu0 %v1814
    %4350 = vmatpush2.bf16.msra.mxu0 %v1813
    %4351 = vmatprep.subr.bf16.mxu0 %v1810
    %4352 = vmatpush2.bf16.msra.mxu0 %v1809
    %4353 = vmatprep.subr.bf16.mxu0 %v1806
    %4354 = vmatpush2.bf16.msra.mxu0 %v1805
    %4355 = vmatprep.subr.bf16.mxu0 %v1802
    %4356 = vmatpush2.bf16.msra.mxu0 %v1801
    %4357 = vmatprep.subr.bf16.mxu0 %v1798
    %4358 = vmatpush2.bf16.msra.mxu0 %v1797
    %4359 = vmatprep.mubr.bf16.mxu0 %v4326
    %4360 = vmatmul.mubr.bf16.gmra.mxu0 %v4325
    %v4361 = vpop.f32.mrf.mxu0
    %v4362 = vadd.f32 %v1897, %v4361
    %v4363 = vpop.f32.mrf.mxu0
    %v4364 = vadd.f32 %v1901, %v4363
    %v4365 = vpop.f32.mrf.mxu0
    %v4366 = vpop.f32.mrf.mxu0
    %4367 = vdwg.mxu0
    %4368 = vmatprep.subr.bf16.mxu0 %v1796
    %4369 = vmatpush1.bf16.msra.mxu0 %v1795
    %4370 = vmatprep.subr.bf16.mxu0 %v1792
    %4371 = vmatpush1.bf16.msra.mxu0 %v1791
    %4372 = vmatprep.subr.bf16.mxu0 %v1788
    %4373 = vmatpush1.bf16.msra.mxu0 %v1787
    %4374 = vmatprep.subr.bf16.mxu0 %v1784
    %4375 = vmatpush1.bf16.msra.mxu0 %v1783
    %4376 = vmatprep.subr.bf16.mxu0 %v1780
    %4377 = vmatpush1.bf16.msra.mxu0 %v1779
    %4378 = vmatprep.subr.bf16.mxu0 %v1776
    %4379 = vmatpush1.bf16.msra.mxu0 %v1775
    %4380 = vmatprep.subr.bf16.mxu0 %v1772
    %4381 = vmatpush1.bf16.msra.mxu0 %v1771
    %4382 = vmatprep.subr.bf16.mxu0 %v1768
    %4383 = vmatpush1.bf16.msra.mxu0 %v1767
    %4384 = vmatprep.subr.bf16.mxu0 %v1828
    %4385 = vmatpush2.bf16.msra.mxu0 %v1827
    %4386 = vmatprep.subr.bf16.mxu0 %v1824
    %4387 = vmatpush2.bf16.msra.mxu0 %v1823
    %4388 = vmatprep.subr.bf16.mxu0 %v1820
    %4389 = vmatpush2.bf16.msra.mxu0 %v1819
    %4390 = vmatprep.subr.bf16.mxu0 %v1816
    %4391 = vmatpush2.bf16.msra.mxu0 %v1815
    %4392 = vmatprep.subr.bf16.mxu0 %v1812
    %4393 = vmatpush2.bf16.msra.mxu0 %v1811
    %4394 = vmatprep.subr.bf16.mxu0 %v1808
    %4395 = vmatpush2.bf16.msra.mxu0 %v1807
    %4396 = vmatprep.subr.bf16.mxu0 %v1804
    %4397 = vmatpush2.bf16.msra.mxu0 %v1803
    %4398 = vmatprep.subr.bf16.mxu0 %v1800
    %4399 = vmatpush2.bf16.msra.mxu0 %v1799
    %4400 = vmatprep.mubr.bf16.mxu0 %v4326
    %4401 = vmatmul.mubr.bf16.gmra.mxu0 %v4325
    %v4402 = vpop.f32.mrf.mxu0
    %v4403 = vadd.f32 %v1905, %v4402
    %v4404 = vpop.f32.mrf.mxu0
    %v4405 = vadd.f32 %v1909, %v4404
    %v4406 = vpop.f32.mrf.mxu0
    %v4407 = vpop.f32.mrf.mxu0
    %4408 = vdwg.mxu0
    %v4409 = vsel %vm1996, %v4362, -inf
    %v4410 = vsel %vm1996, %v4364, -inf
    %v4411 = vsel %vm1996, %v4403, -inf
    %v4412 = vsel %vm1996, %v4405, -inf
    %v4413 = vmax.f32 %v4409, %v4410
    %v4414 = vmax.f32 %v4411, %v4412
    %v4415 = vmax.f32 %v4413, %v4414
    %4416 = vmax.xlane.f32.xlu0 %v4415
    %v4417 = vpop.xlane.xlu0 %4416
    %vm4418 = vcmp.eq.f32.partialorder %v4362, %v4417
    %vm4419 = vcmp.eq.f32.partialorder %v4364, %v4417
    %vm4420 = vcmp.eq.f32.partialorder %v4403, %v4417
    %vm4421 = vcmp.eq.f32.partialorder %v4405, %v4417
    %v4422 = vsel %vm4418, %v1115, 512
    %v4423 = vsel %vm4419, %v1116, 512
    %v4424 = vsel %vm4420, %v1117, 512
    %v4425 = vsel %vm4421, %v1118, 512
    %v4426 = vsel %vm1996, %v4422, 2147483647
    %v4427 = vsel %vm1996, %v4423, 2147483647
    %v4428 = vsel %vm1996, %v4424, 2147483647
    %v4429 = vsel %vm1996, %v4425, 2147483647
    %vm4430 = vcmp.lt.s32.totalorder %v4426, %v4427
    %v4431 = vsel %vm4430, %v4426, %v4427
    %vm4432 = vcmp.lt.s32.totalorder %v4428, %v4429
    %v4433 = vsel %vm4432, %v4428, %v4429
    %vm4434 = vcmp.lt.s32.totalorder %v4431, %v4433
    %v4435 = vsel %vm4434, %v4431, %v4433
    %v4436 = vand.u32 %v4435, 65535
    %v4437 = vshra.s32 %v4435, 16
    %v4438 = vcvt.s32.f32 %v4436
    %v4439 = vcvt.s32.f32 %v4437
    %4440 = vmin.xlane.f32.xlu0 %v4439
    %v4441 = vpop.xlane.xlu0 %4440
    %vm4442 = vcmp.eq.f32.partialorder %v4439, %v4441
    %v4443 = vsel %vm4442, %v4438, inf
    %4444 = vmin.xlane.f32.xlu0 %v4443
    %v4445 = vpop.xlane.xlu0 %4444
    %v4446 = vcvt.f32.s32 %v4445
    %v4447 = vcvt.f32.s32 %v4441
    %v4448 = vshll.u32 %v4447, 16
    %v4449 = vadd.s32 %v4448, %v4446
    %vm4450 = vcmp.eq.s32.totalorder %v1115, 7
    %v4451 = vsel %vm4450, %v4449, %v4143
    %vm4452 = vcmp.eq.s32.totalorder %v1115, %v4449
    %vm4453 = vcmp.eq.s32.totalorder %v1116, %v4449
    %vm4454 = vcmp.eq.s32.totalorder %v1117, %v4449
    %vm4455 = vcmp.eq.s32.totalorder %v1118, %v4449
    %v4456 = vsel %vm4452, 1, 0
    %v4457 = vsel %vm4453, 1, 0
    %v4458 = vsel %vm4454, 1, 0
    %v4459 = vsel %vm4455, 1, 0
    %v4460 = vcvt.s32.f32 %v4456
    %v4461 = vcvt.s32.f32 %v4457
    %v4462 = vcvt.s32.f32 %v4458
    %v4463 = vcvt.s32.f32 %v4459
    %v4464 = vpack.c.bf16 %v4460, %v4460
    %v4465 = vpack.c.bf16 %v4461, %v4461
    %v4466 = vpack.c.bf16 %v4462, %v4462
    %v4467 = vpack.c.bf16 %v4463, %v4463
    %4468 = vmatprep.subr.bf16.mxu0 0
    %4469 = vmatpush1.bf16.msra.mxu0 %v2255
    %4470 = vmatprep.subr.bf16.mxu0 0
    %4471 = vmatpush1.bf16.msra.mxu0 %v2254
    %4472 = vmatprep.subr.bf16.mxu0 0
    %4473 = vmatpush1.bf16.msra.mxu0 %v2253
    %4474 = vmatprep.subr.bf16.mxu0 0
    %4475 = vmatpush1.bf16.msra.mxu0 %v2252
    %4476 = vmatprep.subr.bf16.mxu0 0
    %4477 = vmatpush1.bf16.msra.mxu0 %v2251
    %4478 = vmatprep.subr.bf16.mxu0 0
    %4479 = vmatpush1.bf16.msra.mxu0 %v2250
    %4480 = vmatprep.subr.bf16.mxu0 0
    %4481 = vmatpush1.bf16.msra.mxu0 %v2249
    %4482 = vmatprep.subr.bf16.mxu0 0
    %4483 = vmatpush1.bf16.msra.mxu0 %v2248
    %4484 = vmatprep.subr.bf16.mxu0 0
    %4485 = vmatpush2.bf16.msra.mxu0 %v2263
    %4486 = vmatprep.subr.bf16.mxu0 0
    %4487 = vmatpush2.bf16.msra.mxu0 %v2262
    %4488 = vmatprep.subr.bf16.mxu0 0
    %4489 = vmatpush2.bf16.msra.mxu0 %v2261
    %4490 = vmatprep.subr.bf16.mxu0 0
    %4491 = vmatpush2.bf16.msra.mxu0 %v2260
    %4492 = vmatprep.subr.bf16.mxu0 0
    %4493 = vmatpush2.bf16.msra.mxu0 %v2259
    %4494 = vmatprep.subr.bf16.mxu0 0
    %4495 = vmatpush2.bf16.msra.mxu0 %v2258
    %4496 = vmatprep.subr.bf16.mxu0 0
    %4497 = vmatpush2.bf16.msra.mxu0 %v2257
    %4498 = vmatprep.subr.bf16.mxu0 0
    %4499 = vmatpush2.bf16.msra.mxu0 %v2256
    %4500 = vmatprep.mubr.bf16.mxu0 %v4465
    %4501 = vmatmul.mubr.bf16.gmra.mxu0 %v4464
    %v4502 = vpop.f32.mrf.mxu0
    %v4503 = vadd.f32 0.0, %v4502
    %v4504 = vpop.f32.mrf.mxu0
    %v4505 = vpop.f32.mrf.mxu0
    %v4506 = vpop.f32.mrf.mxu0
    %4507 = vdwg.mxu0
    %4508 = vmatprep.subr.bf16.mxu0 0
    %4509 = vmatpush1.bf16.msra.mxu0 %v2271
    %4510 = vmatprep.subr.bf16.mxu0 0
    %4511 = vmatpush1.bf16.msra.mxu0 %v2270
    %4512 = vmatprep.subr.bf16.mxu0 0
    %4513 = vmatpush1.bf16.msra.mxu0 %v2269
    %4514 = vmatprep.subr.bf16.mxu0 0
    %4515 = vmatpush1.bf16.msra.mxu0 %v2268
    %4516 = vmatprep.subr.bf16.mxu0 0
    %4517 = vmatpush1.bf16.msra.mxu0 %v2267
    %4518 = vmatprep.subr.bf16.mxu0 0
    %4519 = vmatpush1.bf16.msra.mxu0 %v2266
    %4520 = vmatprep.subr.bf16.mxu0 0
    %4521 = vmatpush1.bf16.msra.mxu0 %v2265
    %4522 = vmatprep.subr.bf16.mxu0 0
    %4523 = vmatpush1.bf16.msra.mxu0 %v2264
    %4524 = vmatprep.subr.bf16.mxu0 0
    %4525 = vmatpush2.bf16.msra.mxu0 %v2279
    %4526 = vmatprep.subr.bf16.mxu0 0
    %4527 = vmatpush2.bf16.msra.mxu0 %v2278
    %4528 = vmatprep.subr.bf16.mxu0 0
    %4529 = vmatpush2.bf16.msra.mxu0 %v2277
    %4530 = vmatprep.subr.bf16.mxu0 0
    %4531 = vmatpush2.bf16.msra.mxu0 %v2276
    %4532 = vmatprep.subr.bf16.mxu0 0
    %4533 = vmatpush2.bf16.msra.mxu0 %v2275
    %4534 = vmatprep.subr.bf16.mxu0 0
    %4535 = vmatpush2.bf16.msra.mxu0 %v2274
    %4536 = vmatprep.subr.bf16.mxu0 0
    %4537 = vmatpush2.bf16.msra.mxu0 %v2273
    %4538 = vmatprep.subr.bf16.mxu0 0
    %4539 = vmatpush2.bf16.msra.mxu0 %v2272
    %4540 = vmatprep.mubr.bf16.mxu0 %v4467
    %4541 = vmatmul.mubr.bf16.gmra.mxu0 %v4466
    %v4542 = vpop.f32.mrf.mxu0
    %v4543 = vadd.f32 %v4503, %v4542
    %v4544 = vpop.f32.mrf.mxu0
    %v4545 = vpop.f32.mrf.mxu0
    %v4546 = vpop.f32.mrf.mxu0
    %4547 = vdwg.mxu0
    %v4548 = vpack.c.bf16 %v4543, %v4543
    %4549 = vmatprep.subr.bf16.mxu0 %v1330
    %4550 = vmatpush1.bf16.msra.mxu0 %v1329
    %4551 = vmatprep.subr.bf16.mxu0 %v1328
    %4552 = vmatpush1.bf16.msra.mxu0 %v1327
    %4553 = vmatprep.subr.bf16.mxu0 %v1326
    %4554 = vmatpush1.bf16.msra.mxu0 %v1325
    %4555 = vmatprep.subr.bf16.mxu0 %v1324
    %4556 = vmatpush1.bf16.msra.mxu0 %v1323
    %4557 = vmatprep.subr.bf16.mxu0 %v1322
    %4558 = vmatpush1.bf16.msra.mxu0 %v1321
    %4559 = vmatprep.subr.bf16.mxu0 %v1320
    %4560 = vmatpush1.bf16.msra.mxu0 %v1319
    %4561 = vmatprep.subr.bf16.mxu0 %v1318
    %4562 = vmatpush1.bf16.msra.mxu0 %v1317
    %4563 = vmatprep.subr.bf16.mxu0 %v1316
    %4564 = vmatpush1.bf16.msra.mxu0 %v1315
    %4565 = vmatprep.subr.bf16.mxu0 %v1346
    %4566 = vmatpush2.bf16.msra.mxu0 %v1345
    %4567 = vmatprep.subr.bf16.mxu0 %v1344
    %4568 = vmatpush2.bf16.msra.mxu0 %v1343
    %4569 = vmatprep.subr.bf16.mxu0 %v1342
    %4570 = vmatpush2.bf16.msra.mxu0 %v1341
    %4571 = vmatprep.subr.bf16.mxu0 %v1340
    %4572 = vmatpush2.bf16.msra.mxu0 %v1339
    %4573 = vmatprep.subr.bf16.mxu0 %v1338
    %4574 = vmatpush2.bf16.msra.mxu0 %v1337
    %4575 = vmatprep.subr.bf16.mxu0 %v1336
    %4576 = vmatpush2.bf16.msra.mxu0 %v1335
    %4577 = vmatprep.subr.bf16.mxu0 %v1334
    %4578 = vmatpush2.bf16.msra.mxu0 %v1333
    %4579 = vmatprep.subr.bf16.mxu0 %v1332
    %4580 = vmatpush2.bf16.msra.mxu0 %v1331
    %4581 = vmatprep.mubr.bf16.mxu0 %v4325
    %4582 = vmatmul.mubr.bf16.gmra.mxu0 %v4548
    %v4583 = vpop.f32.mrf.mxu0
    %v4584 = vadd.f32 %v1415, %v4583
    %v4585 = vpop.f32.mrf.mxu0
    %v4586 = vadd.f32 %v1419, %v4585
    %v4587 = vpop.f32.mrf.mxu0
    %v4588 = vpop.f32.mrf.mxu0
    %4589 = vdwg.mxu0
    %4590 = vmatprep.subr.bf16.mxu0 %v1362
    %4591 = vmatpush1.bf16.msra.mxu0 %v1361
    %4592 = vmatprep.subr.bf16.mxu0 %v1360
    %4593 = vmatpush1.bf16.msra.mxu0 %v1359
    %4594 = vmatprep.subr.bf16.mxu0 %v1358
    %4595 = vmatpush1.bf16.msra.mxu0 %v1357
    %4596 = vmatprep.subr.bf16.mxu0 %v1356
    %4597 = vmatpush1.bf16.msra.mxu0 %v1355
    %4598 = vmatprep.subr.bf16.mxu0 %v1354
    %4599 = vmatpush1.bf16.msra.mxu0 %v1353
    %4600 = vmatprep.subr.bf16.mxu0 %v1352
    %4601 = vmatpush1.bf16.msra.mxu0 %v1351
    %4602 = vmatprep.subr.bf16.mxu0 %v1350
    %4603 = vmatpush1.bf16.msra.mxu0 %v1349
    %4604 = vmatprep.subr.bf16.mxu0 %v1348
    %4605 = vmatpush1.bf16.msra.mxu0 %v1347
    %4606 = vmatprep.subr.bf16.mxu0 0
    %4607 = vmatpush2.bf16.msra.mxu0 0
    %4608 = vmatprep.subr.bf16.mxu0 0
    %4609 = vmatpush2.bf16.msra.mxu0 0
    %4610 = vmatprep.subr.bf16.mxu0 0
    %4611 = vmatpush2.bf16.msra.mxu0 0
    %4612 = vmatprep.subr.bf16.mxu0 0
    %4613 = vmatpush2.bf16.msra.mxu0 0
    %4614 = vmatprep.subr.bf16.mxu0 0
    %4615 = vmatpush2.bf16.msra.mxu0 0
    %4616 = vmatprep.subr.bf16.mxu0 0
    %4617 = vmatpush2.bf16.msra.mxu0 0
    %4618 = vmatprep.subr.bf16.mxu0 0
    %4619 = vmatpush2.bf16.msra.mxu0 0
    %4620 = vmatprep.subr.bf16.mxu0 0
    %4621 = vmatpush2.bf16.msra.mxu0 0
    %4622 = vmatprep.mubr.bf16.mxu0 0
    %4623 = vmatmul.mubr.bf16.gmra.mxu0 %v4326
    %v4624 = vpop.f32.mrf.mxu0
    %v4625 = vadd.f32 %v4584, %v4624
    %v4626 = vpop.f32.mrf.mxu0
    %v4627 = vadd.f32 %v4586, %v4626
    %v4628 = vpop.f32.mrf.mxu0
    %v4629 = vpop.f32.mrf.mxu0
    %4630 = vdwg.mxu0
    %v4631 = vmax.f32 %v4625, 0.0
    %v4632 = vmax.f32 %v4627, 0.0
    %v4633 = vpack.c.bf16 %v4631, %v4631
    %v4634 = vpack.c.bf16 %v4632, %v4632
    %4635 = vmatprep.subr.bf16.mxu0 %v1794
    %4636 = vmatpush1.bf16.msra.mxu0 %v1793
    %4637 = vmatprep.subr.bf16.mxu0 %v1790
    %4638 = vmatpush1.bf16.msra.mxu0 %v1789
    %4639 = vmatprep.subr.bf16.mxu0 %v1786
    %4640 = vmatpush1.bf16.msra.mxu0 %v1785
    %4641 = vmatprep.subr.bf16.mxu0 %v1782
    %4642 = vmatpush1.bf16.msra.mxu0 %v1781
    %4643 = vmatprep.subr.bf16.mxu0 %v1778
    %4644 = vmatpush1.bf16.msra.mxu0 %v1777
    %4645 = vmatprep.subr.bf16.mxu0 %v1774
    %4646 = vmatpush1.bf16.msra.mxu0 %v1773
    %4647 = vmatprep.subr.bf16.mxu0 %v1770
    %4648 = vmatpush1.bf16.msra.mxu0 %v1769
    %4649 = vmatprep.subr.bf16.mxu0 %v1766
    %4650 = vmatpush1.bf16.msra.mxu0 %v1765
    %4651 = vmatprep.subr.bf16.mxu0 %v1826
    %4652 = vmatpush2.bf16.msra.mxu0 %v1825
    %4653 = vmatprep.subr.bf16.mxu0 %v1822
    %4654 = vmatpush2.bf16.msra.mxu0 %v1821
    %4655 = vmatprep.subr.bf16.mxu0 %v1818
    %4656 = vmatpush2.bf16.msra.mxu0 %v1817
    %4657 = vmatprep.subr.bf16.mxu0 %v1814
    %4658 = vmatpush2.bf16.msra.mxu0 %v1813
    %4659 = vmatprep.subr.bf16.mxu0 %v1810
    %4660 = vmatpush2.bf16.msra.mxu0 %v1809
    %4661 = vmatprep.subr.bf16.mxu0 %v1806
    %4662 = vmatpush2.bf16.msra.mxu0 %v1805
    %4663 = vmatprep.subr.bf16.mxu0 %v1802
    %4664 = vmatpush2.bf16.msra.mxu0 %v1801
    %4665 = vmatprep.subr.bf16.mxu0 %v1798
    %4666 = vmatpush2.bf16.msra.mxu0 %v1797
    %4667 = vmatprep.mubr.bf16.mxu0 %v4634
    %4668 = vmatmul.mubr.bf16.gmra.mxu0 %v4633
    %v4669 = vpop.f32.mrf.mxu0
    %v4670 = vadd.f32 %v1897, %v4669
    %v4671 = vpop.f32.mrf.mxu0
    %v4672 = vadd.f32 %v1901, %v4671
    %v4673 = vpop.f32.mrf.mxu0
    %v4674 = vpop.f32.mrf.mxu0
    %4675 = vdwg.mxu0
    %4676 = vmatprep.subr.bf16.mxu0 %v1796
    %4677 = vmatpush1.bf16.msra.mxu0 %v1795
    %4678 = vmatprep.subr.bf16.mxu0 %v1792
    %4679 = vmatpush1.bf16.msra.mxu0 %v1791
    %4680 = vmatprep.subr.bf16.mxu0 %v1788
    %4681 = vmatpush1.bf16.msra.mxu0 %v1787
    %4682 = vmatprep.subr.bf16.mxu0 %v1784
    %4683 = vmatpush1.bf16.msra.mxu0 %v1783
    %4684 = vmatprep.subr.bf16.mxu0 %v1780
    %4685 = vmatpush1.bf16.msra.mxu0 %v1779
    %4686 = vmatprep.subr.bf16.mxu0 %v1776
    %4687 = vmatpush1.bf16.msra.mxu0 %v1775
    %4688 = vmatprep.subr.bf16.mxu0 %v1772
    %4689 = vmatpush1.bf16.msra.mxu0 %v1771
    %4690 = vmatprep.subr.bf16.mxu0 %v1768
    %4691 = vmatpush1.bf16.msra.mxu0 %v1767
    %4692 = vmatprep.subr.bf16.mxu0 %v1828
    %4693 = vmatpush2.bf16.msra.mxu0 %v1827
    %4694 = vmatprep.subr.bf16.mxu0 %v1824
    %4695 = vmatpush2.bf16.msra.mxu0 %v1823
    %4696 = vmatprep.subr.bf16.mxu0 %v1820
    %4697 = vmatpush2.bf16.msra.mxu0 %v1819
    %4698 = vmatprep.subr.bf16.mxu0 %v1816
    %4699 = vmatpush2.bf16.msra.mxu0 %v1815
    %4700 = vmatprep.subr.bf16.mxu0 %v1812
    %4701 = vmatpush2.bf16.msra.mxu0 %v1811
    %4702 = vmatprep.subr.bf16.mxu0 %v1808
    %4703 = vmatpush2.bf16.msra.mxu0 %v1807
    %4704 = vmatprep.subr.bf16.mxu0 %v1804
    %4705 = vmatpush2.bf16.msra.mxu0 %v1803
    %4706 = vmatprep.subr.bf16.mxu0 %v1800
    %4707 = vmatpush2.bf16.msra.mxu0 %v1799
    %4708 = vmatprep.mubr.bf16.mxu0 %v4634
    %4709 = vmatmul.mubr.bf16.gmra.mxu0 %v4633
    %v4710 = vpop.f32.mrf.mxu0
    %v4711 = vadd.f32 %v1905, %v4710
    %v4712 = vpop.f32.mrf.mxu0
    %v4713 = vadd.f32 %v1909, %v4712
    %v4714 = vpop.f32.mrf.mxu0
    %v4715 = vpop.f32.mrf.mxu0
    %4716 = vdwg.mxu0
    %v4717 = vsel %vm1996, %v4670, -inf
    %v4718 = vsel %vm1996, %v4672, -inf
    %v4719 = vsel %vm1996, %v4711, -inf
    %v4720 = vsel %vm1996, %v4713, -inf
    %v4721 = vmax.f32 %v4717, %v4718
    %v4722 = vmax.f32 %v4719, %v4720
    %v4723 = vmax.f32 %v4721, %v4722
    %4724 = vmax.xlane.f32.xlu0 %v4723
    %v4725 = vpop.xlane.xlu0 %4724
    %vm4726 = vcmp.eq.f32.partialorder %v4670, %v4725
    %vm4727 = vcmp.eq.f32.partialorder %v4672, %v4725
    %vm4728 = vcmp.eq.f32.partialorder %v4711, %v4725
    %vm4729 = vcmp.eq.f32.partialorder %v4713, %v4725
    %v4730 = vsel %vm4726, %v1115, 512
    %v4731 = vsel %vm4727, %v1116, 512
    %v4732 = vsel %vm4728, %v1117, 512
    %v4733 = vsel %vm4729, %v1118, 512
    %v4734 = vsel %vm1996, %v4730, 2147483647
    %v4735 = vsel %vm1996, %v4731, 2147483647
    %v4736 = vsel %vm1996, %v4732, 2147483647
    %v4737 = vsel %vm1996, %v4733, 2147483647
    %vm4738 = vcmp.lt.s32.totalorder %v4734, %v4735
    %v4739 = vsel %vm4738, %v4734, %v4735
    %vm4740 = vcmp.lt.s32.totalorder %v4736, %v4737
    %v4741 = vsel %vm4740, %v4736, %v4737
    %vm4742 = vcmp.lt.s32.totalorder %v4739, %v4741
    %v4743 = vsel %vm4742, %v4739, %v4741
    %v4744 = vand.u32 %v4743, 65535
    %v4745 = vshra.s32 %v4743, 16
    %v4746 = vcvt.s32.f32 %v4744
    %v4747 = vcvt.s32.f32 %v4745
    %4748 = vmin.xlane.f32.xlu0 %v4747
    %v4749 = vpop.xlane.xlu0 %4748
    %vm4750 = vcmp.eq.f32.partialorder %v4747, %v4749
    %v4751 = vsel %vm4750, %v4746, inf
    %4752 = vmin.xlane.f32.xlu0 %v4751
    %v4753 = vpop.xlane.xlu0 %4752
    %v4754 = vcvt.f32.s32 %v4753
    %v4755 = vcvt.f32.s32 %v4749
    %v4756 = vshll.u32 %v4755, 16
    %v4757 = vadd.s32 %v4756, %v4754
    %vm4758 = vcmp.eq.s32.totalorder %v1115, 8
    %v4759 = vsel %vm4758, %v4757, %v4451
    %vm4760 = vcmp.eq.s32.totalorder %v1115, %v4757
    %vm4761 = vcmp.eq.s32.totalorder %v1116, %v4757
    %vm4762 = vcmp.eq.s32.totalorder %v1117, %v4757
    %vm4763 = vcmp.eq.s32.totalorder %v1118, %v4757
    %v4764 = vsel %vm4760, 1, 0
    %v4765 = vsel %vm4761, 1, 0
    %v4766 = vsel %vm4762, 1, 0
    %v4767 = vsel %vm4763, 1, 0
    %v4768 = vcvt.s32.f32 %v4764
    %v4769 = vcvt.s32.f32 %v4765
    %v4770 = vcvt.s32.f32 %v4766
    %v4771 = vcvt.s32.f32 %v4767
    %v4772 = vpack.c.bf16 %v4768, %v4768
    %v4773 = vpack.c.bf16 %v4769, %v4769
    %v4774 = vpack.c.bf16 %v4770, %v4770
    %v4775 = vpack.c.bf16 %v4771, %v4771
    %4776 = vmatprep.subr.bf16.mxu0 0
    %4777 = vmatpush1.bf16.msra.mxu0 %v2255
    %4778 = vmatprep.subr.bf16.mxu0 0
    %4779 = vmatpush1.bf16.msra.mxu0 %v2254
    %4780 = vmatprep.subr.bf16.mxu0 0
    %4781 = vmatpush1.bf16.msra.mxu0 %v2253
    %4782 = vmatprep.subr.bf16.mxu0 0
    %4783 = vmatpush1.bf16.msra.mxu0 %v2252
    %4784 = vmatprep.subr.bf16.mxu0 0
    %4785 = vmatpush1.bf16.msra.mxu0 %v2251
    %4786 = vmatprep.subr.bf16.mxu0 0
    %4787 = vmatpush1.bf16.msra.mxu0 %v2250
    %4788 = vmatprep.subr.bf16.mxu0 0
    %4789 = vmatpush1.bf16.msra.mxu0 %v2249
    %4790 = vmatprep.subr.bf16.mxu0 0
    %4791 = vmatpush1.bf16.msra.mxu0 %v2248
    %4792 = vmatprep.subr.bf16.mxu0 0
    %4793 = vmatpush2.bf16.msra.mxu0 %v2263
    %4794 = vmatprep.subr.bf16.mxu0 0
    %4795 = vmatpush2.bf16.msra.mxu0 %v2262
    %4796 = vmatprep.subr.bf16.mxu0 0
    %4797 = vmatpush2.bf16.msra.mxu0 %v2261
    %4798 = vmatprep.subr.bf16.mxu0 0
    %4799 = vmatpush2.bf16.msra.mxu0 %v2260
    %4800 = vmatprep.subr.bf16.mxu0 0
    %4801 = vmatpush2.bf16.msra.mxu0 %v2259
    %4802 = vmatprep.subr.bf16.mxu0 0
    %4803 = vmatpush2.bf16.msra.mxu0 %v2258
    %4804 = vmatprep.subr.bf16.mxu0 0
    %4805 = vmatpush2.bf16.msra.mxu0 %v2257
    %4806 = vmatprep.subr.bf16.mxu0 0
    %4807 = vmatpush2.bf16.msra.mxu0 %v2256
    %4808 = vmatprep.mubr.bf16.mxu0 %v4773
    %4809 = vmatmul.mubr.bf16.gmra.mxu0 %v4772
    %v4810 = vpop.f32.mrf.mxu0
    %v4811 = vadd.f32 0.0, %v4810
    %v4812 = vpop.f32.mrf.mxu0
    %v4813 = vpop.f32.mrf.mxu0
    %v4814 = vpop.f32.mrf.mxu0
    %4815 = vdwg.mxu0
    %4816 = vmatprep.subr.bf16.mxu0 0
    %4817 = vmatpush1.bf16.msra.mxu0 %v2271
    %4818 = vmatprep.subr.bf16.mxu0 0
    %4819 = vmatpush1.bf16.msra.mxu0 %v2270
    %4820 = vmatprep.subr.bf16.mxu0 0
    %4821 = vmatpush1.bf16.msra.mxu0 %v2269
    %4822 = vmatprep.subr.bf16.mxu0 0
    %4823 = vmatpush1.bf16.msra.mxu0 %v2268
    %4824 = vmatprep.subr.bf16.mxu0 0
    %4825 = vmatpush1.bf16.msra.mxu0 %v2267
    %4826 = vmatprep.subr.bf16.mxu0 0
    %4827 = vmatpush1.bf16.msra.mxu0 %v2266
    %4828 = vmatprep.subr.bf16.mxu0 0
    %4829 = vmatpush1.bf16.msra.mxu0 %v2265
    %4830 = vmatprep.subr.bf16.mxu0 0
    %4831 = vmatpush1.bf16.msra.mxu0 %v2264
    %4832 = vmatprep.subr.bf16.mxu0 0
    %4833 = vmatpush2.bf16.msra.mxu0 %v2279
    %4834 = vmatprep.subr.bf16.mxu0 0
    %4835 = vmatpush2.bf16.msra.mxu0 %v2278
    %4836 = vmatprep.subr.bf16.mxu0 0
    %4837 = vmatpush2.bf16.msra.mxu0 %v2277
    %4838 = vmatprep.subr.bf16.mxu0 0
    %4839 = vmatpush2.bf16.msra.mxu0 %v2276
    %4840 = vmatprep.subr.bf16.mxu0 0
    %4841 = vmatpush2.bf16.msra.mxu0 %v2275
    %4842 = vmatprep.subr.bf16.mxu0 0
    %4843 = vmatpush2.bf16.msra.mxu0 %v2274
    %4844 = vmatprep.subr.bf16.mxu0 0
    %4845 = vmatpush2.bf16.msra.mxu0 %v2273
    %4846 = vmatprep.subr.bf16.mxu0 0
    %4847 = vmatpush2.bf16.msra.mxu0 %v2272
    %4848 = vmatprep.mubr.bf16.mxu0 %v4775
    %4849 = vmatmul.mubr.bf16.gmra.mxu0 %v4774
    %v4850 = vpop.f32.mrf.mxu0
    %v4851 = vadd.f32 %v4811, %v4850
    %v4852 = vpop.f32.mrf.mxu0
    %v4853 = vpop.f32.mrf.mxu0
    %v4854 = vpop.f32.mrf.mxu0
    %4855 = vdwg.mxu0
    %v4856 = vpack.c.bf16 %v4851, %v4851
    %4857 = vmatprep.subr.bf16.mxu0 %v1330
    %4858 = vmatpush1.bf16.msra.mxu0 %v1329
    %4859 = vmatprep.subr.bf16.mxu0 %v1328
    %4860 = vmatpush1.bf16.msra.mxu0 %v1327
    %4861 = vmatprep.subr.bf16.mxu0 %v1326
    %4862 = vmatpush1.bf16.msra.mxu0 %v1325
    %4863 = vmatprep.subr.bf16.mxu0 %v1324
    %4864 = vmatpush1.bf16.msra.mxu0 %v1323
    %4865 = vmatprep.subr.bf16.mxu0 %v1322
    %4866 = vmatpush1.bf16.msra.mxu0 %v1321
    %4867 = vmatprep.subr.bf16.mxu0 %v1320
    %4868 = vmatpush1.bf16.msra.mxu0 %v1319
    %4869 = vmatprep.subr.bf16.mxu0 %v1318
    %4870 = vmatpush1.bf16.msra.mxu0 %v1317
    %4871 = vmatprep.subr.bf16.mxu0 %v1316
    %4872 = vmatpush1.bf16.msra.mxu0 %v1315
    %4873 = vmatprep.subr.bf16.mxu0 %v1346
    %4874 = vmatpush2.bf16.msra.mxu0 %v1345
    %4875 = vmatprep.subr.bf16.mxu0 %v1344
    %4876 = vmatpush2.bf16.msra.mxu0 %v1343
    %4877 = vmatprep.subr.bf16.mxu0 %v1342
    %4878 = vmatpush2.bf16.msra.mxu0 %v1341
    %4879 = vmatprep.subr.bf16.mxu0 %v1340
    %4880 = vmatpush2.bf16.msra.mxu0 %v1339
    %4881 = vmatprep.subr.bf16.mxu0 %v1338
    %4882 = vmatpush2.bf16.msra.mxu0 %v1337
    %4883 = vmatprep.subr.bf16.mxu0 %v1336
    %4884 = vmatpush2.bf16.msra.mxu0 %v1335
    %4885 = vmatprep.subr.bf16.mxu0 %v1334
    %4886 = vmatpush2.bf16.msra.mxu0 %v1333
    %4887 = vmatprep.subr.bf16.mxu0 %v1332
    %4888 = vmatpush2.bf16.msra.mxu0 %v1331
    %4889 = vmatprep.mubr.bf16.mxu0 %v4633
    %4890 = vmatmul.mubr.bf16.gmra.mxu0 %v4856
    %v4891 = vpop.f32.mrf.mxu0
    %v4892 = vadd.f32 %v1415, %v4891
    %v4893 = vpop.f32.mrf.mxu0
    %v4894 = vadd.f32 %v1419, %v4893
    %v4895 = vpop.f32.mrf.mxu0
    %v4896 = vpop.f32.mrf.mxu0
    %4897 = vdwg.mxu0
    %4898 = vmatprep.subr.bf16.mxu0 %v1362
    %4899 = vmatpush1.bf16.msra.mxu0 %v1361
    %4900 = vmatprep.subr.bf16.mxu0 %v1360
    %4901 = vmatpush1.bf16.msra.mxu0 %v1359
    %4902 = vmatprep.subr.bf16.mxu0 %v1358
    %4903 = vmatpush1.bf16.msra.mxu0 %v1357
    %4904 = vmatprep.subr.bf16.mxu0 %v1356
    %4905 = vmatpush1.bf16.msra.mxu0 %v1355
    %4906 = vmatprep.subr.bf16.mxu0 %v1354
    %4907 = vmatpush1.bf16.msra.mxu0 %v1353
    %4908 = vmatprep.subr.bf16.mxu0 %v1352
    %4909 = vmatpush1.bf16.msra.mxu0 %v1351
    %4910 = vmatprep.subr.bf16.mxu0 %v1350
    %4911 = vmatpush1.bf16.msra.mxu0 %v1349
    %4912 = vmatprep.subr.bf16.mxu0 %v1348
    %4913 = vmatpush1.bf16.msra.mxu0 %v1347
    %4914 = vmatprep.subr.bf16.mxu0 0
    %4915 = vmatpush2.bf16.msra.mxu0 0
    %4916 = vmatprep.subr.bf16.mxu0 0
    %4917 = vmatpush2.bf16.msra.mxu0 0
    %4918 = vmatprep.subr.bf16.mxu0 0
    %4919 = vmatpush2.bf16.msra.mxu0 0
    %4920 = vmatprep.subr.bf16.mxu0 0
    %4921 = vmatpush2.bf16.msra.mxu0 0
    %4922 = vmatprep.subr.bf16.mxu0 0
    %4923 = vmatpush2.bf16.msra.mxu0 0
    %4924 = vmatprep.subr.bf16.mxu0 0
    %4925 = vmatpush2.bf16.msra.mxu0 0
    %4926 = vmatprep.subr.bf16.mxu0 0
    %4927 = vmatpush2.bf16.msra.mxu0 0
    %4928 = vmatprep.subr.bf16.mxu0 0
    %4929 = vmatpush2.bf16.msra.mxu0 0
    %4930 = vmatprep.mubr.bf16.mxu0 0
    %4931 = vmatmul.mubr.bf16.gmra.mxu0 %v4634
    %v4932 = vpop.f32.mrf.mxu0
    %v4933 = vadd.f32 %v4892, %v4932
    %v4934 = vpop.f32.mrf.mxu0
    %v4935 = vadd.f32 %v4894, %v4934
    %v4936 = vpop.f32.mrf.mxu0
    %v4937 = vpop.f32.mrf.mxu0
    %4938 = vdwg.mxu0
    %v4939 = vmax.f32 %v4933, 0.0
    %v4940 = vmax.f32 %v4935, 0.0
    %v4941 = vpack.c.bf16 %v4939, %v4939
    %v4942 = vpack.c.bf16 %v4940, %v4940
    %4943 = vmatprep.subr.bf16.mxu0 %v1794
    %4944 = vmatpush1.bf16.msra.mxu0 %v1793
    %4945 = vmatprep.subr.bf16.mxu0 %v1790
    %4946 = vmatpush1.bf16.msra.mxu0 %v1789
    %4947 = vmatprep.subr.bf16.mxu0 %v1786
    %4948 = vmatpush1.bf16.msra.mxu0 %v1785
    %4949 = vmatprep.subr.bf16.mxu0 %v1782
    %4950 = vmatpush1.bf16.msra.mxu0 %v1781
    %4951 = vmatprep.subr.bf16.mxu0 %v1778
    %4952 = vmatpush1.bf16.msra.mxu0 %v1777
    %4953 = vmatprep.subr.bf16.mxu0 %v1774
    %4954 = vmatpush1.bf16.msra.mxu0 %v1773
    %4955 = vmatprep.subr.bf16.mxu0 %v1770
    %4956 = vmatpush1.bf16.msra.mxu0 %v1769
    %4957 = vmatprep.subr.bf16.mxu0 %v1766
    %4958 = vmatpush1.bf16.msra.mxu0 %v1765
    %4959 = vmatprep.subr.bf16.mxu0 %v1826
    %4960 = vmatpush2.bf16.msra.mxu0 %v1825
    %4961 = vmatprep.subr.bf16.mxu0 %v1822
    %4962 = vmatpush2.bf16.msra.mxu0 %v1821
    %4963 = vmatprep.subr.bf16.mxu0 %v1818
    %4964 = vmatpush2.bf16.msra.mxu0 %v1817
    %4965 = vmatprep.subr.bf16.mxu0 %v1814
    %4966 = vmatpush2.bf16.msra.mxu0 %v1813
    %4967 = vmatprep.subr.bf16.mxu0 %v1810
    %4968 = vmatpush2.bf16.msra.mxu0 %v1809
    %4969 = vmatprep.subr.bf16.mxu0 %v1806
    %4970 = vmatpush2.bf16.msra.mxu0 %v1805
    %4971 = vmatprep.subr.bf16.mxu0 %v1802
    %4972 = vmatpush2.bf16.msra.mxu0 %v1801
    %4973 = vmatprep.subr.bf16.mxu0 %v1798
    %4974 = vmatpush2.bf16.msra.mxu0 %v1797
    %4975 = vmatprep.mubr.bf16.mxu0 %v4942
    %4976 = vmatmul.mubr.bf16.gmra.mxu0 %v4941
    %v4977 = vpop.f32.mrf.mxu0
    %v4978 = vadd.f32 %v1897, %v4977
    %v4979 = vpop.f32.mrf.mxu0
    %v4980 = vadd.f32 %v1901, %v4979
    %v4981 = vpop.f32.mrf.mxu0
    %v4982 = vpop.f32.mrf.mxu0
    %4983 = vdwg.mxu0
    %4984 = vmatprep.subr.bf16.mxu0 %v1796
    %4985 = vmatpush1.bf16.msra.mxu0 %v1795
    %4986 = vmatprep.subr.bf16.mxu0 %v1792
    %4987 = vmatpush1.bf16.msra.mxu0 %v1791
    %4988 = vmatprep.subr.bf16.mxu0 %v1788
    %4989 = vmatpush1.bf16.msra.mxu0 %v1787
    %4990 = vmatprep.subr.bf16.mxu0 %v1784
    %4991 = vmatpush1.bf16.msra.mxu0 %v1783
    %4992 = vmatprep.subr.bf16.mxu0 %v1780
    %4993 = vmatpush1.bf16.msra.mxu0 %v1779
    %4994 = vmatprep.subr.bf16.mxu0 %v1776
    %4995 = vmatpush1.bf16.msra.mxu0 %v1775
    %4996 = vmatprep.subr.bf16.mxu0 %v1772
    %4997 = vmatpush1.bf16.msra.mxu0 %v1771
    %4998 = vmatprep.subr.bf16.mxu0 %v1768
    %4999 = vmatpush1.bf16.msra.mxu0 %v1767
    %5000 = vmatprep.subr.bf16.mxu0 %v1828
    %5001 = vmatpush2.bf16.msra.mxu0 %v1827
    %5002 = vmatprep.subr.bf16.mxu0 %v1824
    %5003 = vmatpush2.bf16.msra.mxu0 %v1823
    %5004 = vmatprep.subr.bf16.mxu0 %v1820
    %5005 = vmatpush2.bf16.msra.mxu0 %v1819
    %5006 = vmatprep.subr.bf16.mxu0 %v1816
    %5007 = vmatpush2.bf16.msra.mxu0 %v1815
    %5008 = vmatprep.subr.bf16.mxu0 %v1812
    %5009 = vmatpush2.bf16.msra.mxu0 %v1811
    %5010 = vmatprep.subr.bf16.mxu0 %v1808
    %5011 = vmatpush2.bf16.msra.mxu0 %v1807
    %5012 = vmatprep.subr.bf16.mxu0 %v1804
    %5013 = vmatpush2.bf16.msra.mxu0 %v1803
    %5014 = vmatprep.subr.bf16.mxu0 %v1800
    %5015 = vmatpush2.bf16.msra.mxu0 %v1799
    %5016 = vmatprep.mubr.bf16.mxu0 %v4942
    %5017 = vmatmul.mubr.bf16.gmra.mxu0 %v4941
    %v5018 = vpop.f32.mrf.mxu0
    %v5019 = vadd.f32 %v1905, %v5018
    %v5020 = vpop.f32.mrf.mxu0
    %v5021 = vadd.f32 %v1909, %v5020
    %v5022 = vpop.f32.mrf.mxu0
    %v5023 = vpop.f32.mrf.mxu0
    %5024 = vdwg.mxu0
    %v5025 = vsel %vm1996, %v4978, -inf
    %v5026 = vsel %vm1996, %v4980, -inf
    %v5027 = vsel %vm1996, %v5019, -inf
    %v5028 = vsel %vm1996, %v5021, -inf
    %v5029 = vmax.f32 %v5025, %v5026
    %v5030 = vmax.f32 %v5027, %v5028
    %v5031 = vmax.f32 %v5029, %v5030
    %5032 = vmax.xlane.f32.xlu0 %v5031
    %v5033 = vpop.xlane.xlu0 %5032
    %vm5034 = vcmp.eq.f32.partialorder %v4978, %v5033
    %vm5035 = vcmp.eq.f32.partialorder %v4980, %v5033
    %vm5036 = vcmp.eq.f32.partialorder %v5019, %v5033
    %vm5037 = vcmp.eq.f32.partialorder %v5021, %v5033
    %v5038 = vsel %vm5034, %v1115, 512
    %v5039 = vsel %vm5035, %v1116, 512
    %v5040 = vsel %vm5036, %v1117, 512
    %v5041 = vsel %vm5037, %v1118, 512
    %v5042 = vsel %vm1996, %v5038, 2147483647
    %v5043 = vsel %vm1996, %v5039, 2147483647
    %v5044 = vsel %vm1996, %v5040, 2147483647
    %v5045 = vsel %vm1996, %v5041, 2147483647
    %vm5046 = vcmp.lt.s32.totalorder %v5042, %v5043
    %v5047 = vsel %vm5046, %v5042, %v5043
    %vm5048 = vcmp.lt.s32.totalorder %v5044, %v5045
    %v5049 = vsel %vm5048, %v5044, %v5045
    %vm5050 = vcmp.lt.s32.totalorder %v5047, %v5049
    %v5051 = vsel %vm5050, %v5047, %v5049
    %v5052 = vand.u32 %v5051, 65535
    %v5053 = vshra.s32 %v5051, 16
    %v5054 = vcvt.s32.f32 %v5052
    %v5055 = vcvt.s32.f32 %v5053
    %5056 = vmin.xlane.f32.xlu0 %v5055
    %v5057 = vpop.xlane.xlu0 %5056
    %vm5058 = vcmp.eq.f32.partialorder %v5055, %v5057
    %v5059 = vsel %vm5058, %v5054, inf
    %5060 = vmin.xlane.f32.xlu0 %v5059
    %v5061 = vpop.xlane.xlu0 %5060
    %v5062 = vcvt.f32.s32 %v5061
    %v5063 = vcvt.f32.s32 %v5057
    %v5064 = vshll.u32 %v5063, 16
    %v5065 = vadd.s32 %v5064, %v5062
    %vm5066 = vcmp.eq.s32.totalorder %v1115, 9
    %v5067 = vsel %vm5066, %v5065, %v4759
    %5068 = vst [vmem:[#allocation13] sm:$0x1] %v5067
    // Predicated region
    $region58: #{tpu_custom_call.1} parent=1 // pred_check
      _
    $region59: #{tpu_custom_call.1} parent=1 // pred_check_branch
      %5070 = sbr.rel (0) target = $region61
    $region60: #{tpu_custom_call.1} parent=1 // pred_region
      %s5072 = ssub.s32 16, 16
      %5073 = vsyncadd [#allocation4], %s5072
      %s5075 = sshll.u32 [#allocation13], 4
      %s5076 = int_to_ptr.vmem [resolvable:$true] %s5075
      %5078 = dma.vmem_to_hbm [thread:$0]  %s5076, 16, %s8, [#allocation4]
    $region61: #{tpu_custom_call.1} parent=1 // pred_fallthru
      _
    // Predicated region
    $region62: #{tpu_custom_call.1} parent=1 // pred_check
      _
    $region63: #{tpu_custom_call.1} parent=1 // pred_check_branch
      %5080 = sbr.rel (0) target = $region65
    $region64: #{tpu_custom_call.1} parent=1 // pred_region
      %5081 = dma.done [#allocation4], 16
    $region65: #{tpu_custom_call.1} parent=1 // pred_fallthru
      _
    %5082 = vsyncpa [#allocation3], 1
    %5083 = vsyncpa [#allocation6], 1
    %5084 = vsyncpa [#allocation9], 1
    %5085 = vsyncpa [#allocation12], 1
    %5086 = vsyncpa [#allocation4], 1

</llo_original>
